<compile_context>
chip_gen: v7x
topology: tpu7x:2x2x1
jax: 0.10.0
libtpu: 0.0.40
codegen_flags: <defaults>
</compile_context>

<pallas_src>
import math

import jax
import jax.numpy as jnp
from jax.experimental import pallas as pl
from jax.experimental.pallas import tpu as pltpu

# ---- model hyper-params (small, consistent with the forward) ----
BATCH = 2
TGT_L = 8
SRC_L = 8
D_MODEL = 32
N_HEADS = 4
D_K = D_MODEL // N_HEADS
D_FF = 64
EPS = 1e-6
NEG_INF = -1e9


# --------------------------------------------------------------------------
# In-kernel helpers (traced inside the single fused kernel)
# --------------------------------------------------------------------------
def _add_layernorm(x, y, a, b):
    """SublayerConnection: LayerNorm(x + y) with torch-style unbiased std."""
    s = x + y
    mean = jnp.mean(s, axis=-1, keepdims=True)
    c = s - mean
    var = jnp.sum(c * c, axis=-1, keepdims=True) * (1.0 / (D_MODEL - 1))
    std = jnp.sqrt(var)
    return a * c / (std + EPS) + b


def _attention(xq, xkv, bias, wqkv, bqkv, wo, bo, head_scratch, *, fused_qkv):
    """Multi-head attention on a flattened [B*L, D] slab.

    `bias` is a precomputed additive mask ([B*Lq, B*Lk], 0 = keep,
    NEG_INF = masked / cross-batch) so the batch can live in the row dim.
    Per-head outputs are staged into `head_scratch` so the output projection
    is one (BL,D)@(D,D) matmul after the head loop.
    """
    if fused_qkv:
        qkv = jnp.dot(xq, wqkv, preferred_element_type=jnp.float32) + bqkv
        q = qkv[:, :D_MODEL]
        k = qkv[:, D_MODEL:2 * D_MODEL]
        v = qkv[:, 2 * D_MODEL:]
    else:
        q = (jnp.dot(xq, wqkv[:, :D_MODEL], preferred_element_type=jnp.float32)
             + bqkv[:, :D_MODEL])
        kv = (jnp.dot(xkv, wqkv[:, D_MODEL:], preferred_element_type=jnp.float32)
              + bqkv[:, D_MODEL:])
        k = kv[:, :D_MODEL]
        v = kv[:, D_MODEL:]

    scale = 1.0 / math.sqrt(D_K)
    for h in range(N_HEADS):                      # static unroll (4 heads)
        lo, hi = h * D_K, (h + 1) * D_K
        s = jnp.einsum('qd,kd->qk', q[:, lo:hi], k[:, lo:hi],
                       preferred_element_type=jnp.float32) * scale + bias
        s = s - jnp.max(s, axis=-1, keepdims=True)
        p = jnp.exp(s)
        # exact reciprocal keeps tight numerical parity with the reference;
        # approx=True (EUP) would be free but loosens the error bound.
        p = p * pl.reciprocal(jnp.sum(p, axis=-1, keepdims=True), approx=False)
        head_scratch[:, lo:hi] = jnp.dot(p, v[:, lo:hi],
                                         preferred_element_type=jnp.float32)

    return jnp.dot(head_scratch[...], wo,
                   preferred_element_type=jnp.float32) + bo


# --------------------------------------------------------------------------
# The single fused decoder-layer kernel
# --------------------------------------------------------------------------
def _decoder_layer_kernel(
        x_ref, mem_ref, sbias_ref, cbias_ref,
        sa_wqkv_ref, sa_bqkv_ref, sa_wo_ref, sa_bo_ref,
        ca_wqkv_ref, ca_bqkv_ref, ca_wo_ref, ca_bo_ref,
        w1_ref, b1_ref, w2_ref, b2_ref,
        ln0a_ref, ln0b_ref, ln1a_ref, ln1b_ref, ln2a_ref, ln2b_ref,
        o_ref, head_scratch):
    x = x_ref[...]          # (B*Lq, D)
    mem = mem_ref[...]      # (B*Lk, D)

    # sublayer 0: self attention, then LayerNorm(x + attn(x))
    sa = _attention(x, x, sbias_ref[...],
                    sa_wqkv_ref[...], sa_bqkv_ref[...],
                    sa_wo_ref[...], sa_bo_ref[...],
                    head_scratch, fused_qkv=True)
    x = _add_layernorm(x, sa, ln0a_ref[...], ln0b_ref[...])

    # sublayer 1: source attention over encoder memory
    ca = _attention(x, mem, cbias_ref[...],
                    ca_wqkv_ref[...], ca_bqkv_ref[...],
                    ca_wo_ref[...], ca_bo_ref[...],
                    head_scratch, fused_qkv=False)
    x = _add_layernorm(x, ca, ln1a_ref[...], ln1b_ref[...])

    # sublayer 2: position-wise feed-forward
    h = jnp.maximum(
        jnp.dot(x, w1_ref[...], preferred_element_type=jnp.float32) + b1_ref[...],
        0.0)
    ff = jnp.dot(h, w2_ref[...], preferred_element_type=jnp.float32) + b2_ref[...]
    o_ref[...] = _add_layernorm(x, ff, ln2a_ref[...], ln2b_ref[...])


# --------------------------------------------------------------------------
# Host-side wrapper
# --------------------------------------------------------------------------
def _block_diag_bias(keep, batch):
    """keep: [B, Lq, Lk] (1 = attend). Returns [B*Lq, B*Lk] additive bias with
    cross-batch positions masked (NEG_INF) so the batch can be row-flattened."""
    lq, lk = keep.shape[1], keep.shape[2]
    eye = jnp.eye(batch, dtype=keep.dtype)
    big = jnp.einsum('bij,bc->bicj', keep, eye).reshape(batch * lq, batch * lk)
    return jnp.where(big > 0.5, 0.0, NEG_INF).astype(jnp.float32)


def decoder_layer_forward(x, memory, src_mask, tgt_mask, params):
    B, Lq, D = x.shape
    Lk = memory.shape[1]
    BLq, BLk = B * Lq, B * Lk

    xf = x.reshape(BLq, D).astype(jnp.float32)
    mf = memory.reshape(BLk, D).astype(jnp.float32)

    # additive attention biases (robust != 0 test, not exact float equality)
    tgt_keep = (tgt_mask != 0).astype(jnp.float32)                        # [B,Lq,Lq]
    src_keep = jnp.broadcast_to(src_mask != 0, (B, Lq, Lk)).astype(jnp.float32)
    self_bias = _block_diag_bias(tgt_keep, B)                             # [BLq,BLq]
    src_bias = _block_diag_bias(src_keep, B)                              # [BLq,BLk]

    def fuse_qkv(p):
        wq, bq, wk, bk, wv, bv, wo, bo = p
        return (jnp.concatenate([wq, wk, wv], axis=1),     # (D, 3D)
                jnp.concatenate([bq, bk, bv], axis=1),     # (1, 3D)
                wo, bo)

    sa_wqkv, sa_bqkv, sa_wo, sa_bo = fuse_qkv(params["self_attn"])
    ca_wqkv, ca_bqkv, ca_wo, ca_bo = fuse_qkv(params["src_attn"])
    w1, b1, w2, b2 = params["ffn"]

    operands = (xf, mf, self_bias, src_bias,
                sa_wqkv, sa_bqkv, sa_wo, sa_bo,
                ca_wqkv, ca_bqkv, ca_wo, ca_bo,
                w1, b1, w2, b2,
                params["ln0_a"], params["ln0_b"],
                params["ln1_a"], params["ln1_b"],
                params["ln2_a"], params["ln2_b"])

    zero2 = lambda i: (0, 0)                      # all operands are 2-D
    in_specs = [pl.BlockSpec(op.shape, zero2) for op in operands]

    out = pl.pallas_call(
        _decoder_layer_kernel,
        out_shape=jax.ShapeDtypeStruct((BLq, D), jnp.float32),
        grid=(1,),                                # single fused step
        in_specs=in_specs,
        out_specs=pl.BlockSpec((BLq, D), zero2),
        scratch_shapes=[pltpu.VMEM((BLq, D), jnp.float32)],
        compiler_params=pltpu.CompilerParams(
            dimension_semantics=("arbitrary",)),
    )(*operands)
    return out.reshape(B, Lq, D)


# --------------------------------------------------------------------------
# Pure-JAX reference (mirrors the PyTorch semantics) for a correctness check
# --------------------------------------------------------------------------
def _mha_ref(xq, xkv, mask, p):
    wq, bq, wk, bk, wv, bv, wo, bo = p
    q = xq @ wq + bq[0]
    k = xkv @ wk + bk[0]
    v = xkv @ wv + bv[0]
    B, Lq, D = q.shape
    Lk = k.shape[1]
    qh = q.reshape(B, Lq, N_HEADS, D_K).transpose(0, 2, 1, 3)
    kh = k.reshape(B, Lk, N_HEADS, D_K).transpose(0, 2, 1, 3)
    vh = v.reshape(B, Lk, N_HEADS, D_K).transpose(0, 2, 1, 3)
    scores = jnp.einsum('bhqd,bhkd->bhqk', qh, kh) / jnp.sqrt(jnp.float32(D_K))
    scores = jnp.where(mask[:, None] == 0.0, NEG_INF, scores)
    p_ = jax.nn.softmax(scores, axis=-1)
    o = jnp.einsum('bhqk,bhkd->bhqd', p_, vh).transpose(0, 2, 1, 3).reshape(B, Lq, D)
    return o @ wo + bo[0]


def _add_ln_ref(x, y, a, b):
    s = x + y
    mean = jnp.mean(s, axis=-1, keepdims=True)
    c = s - mean
    std = jnp.sqrt(jnp.sum(c * c, axis=-1, keepdims=True) / (D_MODEL - 1))
    return a[0] * c / (std + EPS) + b[0]


def _ffn_ref(x, p):
    w1, b1, w2, b2 = p
    return jnp.maximum(x @ w1 + b1[0], 0.0) @ w2 + b2[0]


def _decoder_ref(x, memory, src_mask, tgt_mask, params):
    B, Lq, _ = x.shape
    src_l = memory.shape[1]
    sa = _mha_ref(x, x, tgt_mask, params["self_attn"])
    x = _add_ln_ref(x, sa, params["ln0_a"], params["ln0_b"])
    src_mask_b = jnp.broadcast_to(src_mask, (B, Lq, src_l)).astype(jnp.float32)
    ca = _mha_ref(x, memory, src_mask_b, params["src_attn"])
    x = _add_ln_ref(x, ca, params["ln1_a"], params["ln1_b"])
    ff = _ffn_ref(x, params["ffn"])
    return _add_ln_ref(x, ff, params["ln2_a"], params["ln2_b"])


# --------------------------------------------------------------------------
# Deterministic parameter init
# --------------------------------------------------------------------------
def init_params(key):
    ks = jax.random.split(key, 16)

    def attn_params(k4):
        kq, kk, kv, ko = jax.random.split(k4, 4)
        mk = lambda k: 0.05 * jax.random.normal(k, (D_MODEL, D_MODEL), jnp.float32)
        bz = lambda: jnp.zeros((1, D_MODEL), jnp.float32)
        return (mk(kq), bz(), mk(kk), bz(), mk(kv), bz(), mk(ko), bz())

    params = {
        "self_attn": attn_params(ks[0]),
        "src_attn": attn_params(ks[1]),
        "ffn": (
            0.05 * jax.random.normal(ks[2], (D_MODEL, D_FF), jnp.float32),
            jnp.zeros((1, D_FF), jnp.float32),
            0.05 * jax.random.normal(ks[3], (D_FF, D_MODEL), jnp.float32),
            jnp.zeros((1, D_MODEL), jnp.float32),
        ),
    }
    for i in range(3):
        params[f"ln{i}_a"] = jnp.ones((1, D_MODEL), jnp.float32)
        params[f"ln{i}_b"] = jnp.zeros((1, D_MODEL), jnp.float32)
    return params


if __name__ == "__main__":
    key = jax.random.PRNGKey(0)
    k_x, k_m, k_p = jax.random.split(key, 3)

    x = jax.random.normal(k_x, (BATCH, TGT_L, D_MODEL), jnp.float32)
    memory = jax.random.normal(k_m, (BATCH, SRC_L, D_MODEL), jnp.float32)

    # tgt_mask: causal [B, tgt_L, tgt_L]; src_mask: [B, 1, src_L] with tail masked
    tgt_mask = jnp.broadcast_to(
        jnp.tril(jnp.ones((TGT_L, TGT_L), jnp.float32)), (BATCH, TGT_L, TGT_L))
    src_mask = jnp.concatenate(
        [jnp.ones((BATCH, 1, SRC_L - 2), jnp.float32),
         jnp.zeros((BATCH, 1, 2), jnp.float32)], axis=-1)

    params = init_params(k_p)

    out = decoder_layer_forward(x, memory, src_mask, tgt_mask, params)
    out = jax.block_until_ready(out)

    ref = _decoder_ref(x, memory, src_mask, tgt_mask, params)
    assert out.shape == (BATCH, TGT_L, D_MODEL)
    assert jnp.allclose(out, ref, atol=2e-4, rtol=2e-4), "mismatch vs reference"

    print("KERNEL_OK")
</pallas_src>

<mosaic_0001>
module attributes {stable_mosaic.version = 11 : i64} {
  func.func @_decoder_layer_kernel(%arg0: i32, %arg1: memref<16x32xf32, #tpu.memory_space<vmem>>, %arg2: memref<16x32xf32, #tpu.memory_space<vmem>>, %arg3: memref<16x16xf32, #tpu.memory_space<vmem>>, %arg4: memref<16x16xf32, #tpu.memory_space<vmem>>, %arg5: memref<32x96xf32, #tpu.memory_space<vmem>>, %arg6: memref<1x96xf32, #tpu.memory_space<vmem>>, %arg7: memref<32x32xf32, #tpu.memory_space<vmem>>, %arg8: memref<1x32xf32, #tpu.memory_space<vmem>>, %arg9: memref<32x96xf32, #tpu.memory_space<vmem>>, %arg10: memref<1x96xf32, #tpu.memory_space<vmem>>, %arg11: memref<32x32xf32, #tpu.memory_space<vmem>>, %arg12: memref<1x32xf32, #tpu.memory_space<vmem>>, %arg13: memref<32x64xf32, #tpu.memory_space<vmem>>, %arg14: memref<1x64xf32, #tpu.memory_space<vmem>>, %arg15: memref<64x32xf32, #tpu.memory_space<vmem>>, %arg16: memref<1x32xf32, #tpu.memory_space<vmem>>, %arg17: memref<1x32xf32, #tpu.memory_space<vmem>>, %arg18: memref<1x32xf32, #tpu.memory_space<vmem>>, %arg19: memref<1x32xf32, #tpu.memory_space<vmem>>, %arg20: memref<1x32xf32, #tpu.memory_space<vmem>>, %arg21: memref<1x32xf32, #tpu.memory_space<vmem>>, %arg22: memref<1x32xf32, #tpu.memory_space<vmem>>, %arg23: memref<16x32xf32, #tpu.memory_space<vmem>>, %arg24: memref<16x32xf32, #tpu.memory_space<vmem>>) attributes {dimension_semantics = [#tpu.dimension_semantics<arbitrary>], iteration_bounds = array<i64: 1>, scalar_prefetch = 0 : i64, scratch_operands = 1 : i64, tpu.core_type = #tpu.core_type<tc>, window_params = [{pipeline_mode = #tpu.pipeline_mode<synchronous>, transform_indices = @transform_0, window_bounds = array<i64: 16, 32>}, {pipeline_mode = #tpu.pipeline_mode<synchronous>, transform_indices = @transform_1, window_bounds = array<i64: 16, 32>}, {pipeline_mode = #tpu.pipeline_mode<synchronous>, transform_indices = @transform_2, window_bounds = array<i64: 16, 16>}, {pipeline_mode = #tpu.pipeline_mode<synchronous>, transform_indices = @transform_3, window_bounds = array<i64: 16, 16>}, {pipeline_mode = #tpu.pipeline_mode<synchronous>, transform_indices = @transform_4, window_bounds = array<i64: 32, 96>}, {pipeline_mode = #tpu.pipeline_mode<synchronous>, transform_indices = @transform_5, window_bounds = array<i64: 1, 96>}, {pipeline_mode = #tpu.pipeline_mode<synchronous>, transform_indices = @transform_6, window_bounds = array<i64: 32, 32>}, {pipeline_mode = #tpu.pipeline_mode<synchronous>, transform_indices = @transform_7, window_bounds = array<i64: 1, 32>}, {pipeline_mode = #tpu.pipeline_mode<synchronous>, transform_indices = @transform_8, window_bounds = array<i64: 32, 96>}, {pipeline_mode = #tpu.pipeline_mode<synchronous>, transform_indices = @transform_9, window_bounds = array<i64: 1, 96>}, {pipeline_mode = #tpu.pipeline_mode<synchronous>, transform_indices = @transform_10, window_bounds = array<i64: 32, 32>}, {pipeline_mode = #tpu.pipeline_mode<synchronous>, transform_indices = @transform_11, window_bounds = array<i64: 1, 32>}, {pipeline_mode = #tpu.pipeline_mode<synchronous>, transform_indices = @transform_12, window_bounds = array<i64: 32, 64>}, {pipeline_mode = #tpu.pipeline_mode<synchronous>, transform_indices = @transform_13, window_bounds = array<i64: 1, 64>}, {pipeline_mode = #tpu.pipeline_mode<synchronous>, transform_indices = @transform_14, window_bounds = array<i64: 64, 32>}, {pipeline_mode = #tpu.pipeline_mode<synchronous>, transform_indices = @transform_15, window_bounds = array<i64: 1, 32>}, {pipeline_mode = #tpu.pipeline_mode<synchronous>, transform_indices = @transform_16, window_bounds = array<i64: 1, 32>}, {pipeline_mode = #tpu.pipeline_mode<synchronous>, transform_indices = @transform_17, window_bounds = array<i64: 1, 32>}, {pipeline_mode = #tpu.pipeline_mode<synchronous>, transform_indices = @transform_18, window_bounds = array<i64: 1, 32>}, {pipeline_mode = #tpu.pipeline_mode<synchronous>, transform_indices = @transform_19, window_bounds = array<i64: 1, 32>}, {pipeline_mode = #tpu.pipeline_mode<synchronous>, transform_indices = @transform_20, window_bounds = array<i64: 1, 32>}, {pipeline_mode = #tpu.pipeline_mode<synchronous>, transform_indices = @transform_21, window_bounds = array<i64: 1, 32>}, {pipeline_mode = #tpu.pipeline_mode<synchronous>, transform_indices = @transform_22, window_bounds = array<i64: 16, 32>}]} {
    %c0 = arith.constant 0 : index
    %c0_0 = arith.constant 0 : index
    %0 = vector.load %arg1[%c0, %c0_0] : memref<16x32xf32, #tpu.memory_space<vmem>>, vector<16x32xf32>
    %c0_1 = arith.constant 0 : index
    %c0_2 = arith.constant 0 : index
    %1 = vector.load %arg2[%c0_1, %c0_2] : memref<16x32xf32, #tpu.memory_space<vmem>>, vector<16x32xf32>
    %c0_3 = arith.constant 0 : index
    %c0_4 = arith.constant 0 : index
    %2 = vector.load %arg3[%c0_3, %c0_4] : memref<16x16xf32, #tpu.memory_space<vmem>>, vector<16x16xf32>
    %c0_5 = arith.constant 0 : index
    %c0_6 = arith.constant 0 : index
    %3 = vector.load %arg5[%c0_5, %c0_6] : memref<32x96xf32, #tpu.memory_space<vmem>>, vector<32x96xf32>
    %c0_7 = arith.constant 0 : index
    %c0_8 = arith.constant 0 : index
    %4 = vector.load %arg6[%c0_7, %c0_8] : memref<1x96xf32, #tpu.memory_space<vmem>>, vector<1x96xf32>
    %c0_9 = arith.constant 0 : index
    %c0_10 = arith.constant 0 : index
    %5 = vector.load %arg7[%c0_9, %c0_10] : memref<32x32xf32, #tpu.memory_space<vmem>>, vector<32x32xf32>
    %c0_11 = arith.constant 0 : index
    %c0_12 = arith.constant 0 : index
    %6 = vector.load %arg8[%c0_11, %c0_12] : memref<1x32xf32, #tpu.memory_space<vmem>>, vector<1x32xf32>
    %cst = arith.constant dense<0.000000e+00> : vector<16x96xf32>
    %7 = tpu.matmul %0, %3, %cst {dimension_numbers = #tpu.dot_dimension_numbers<[1], [0], [0], [1], [0, 0, 1, 1], [], []>} : vector<16x32xf32>, vector<32x96xf32>, vector<16x96xf32> -> vector<16x96xf32>
    %8 = vector.broadcast %4 : vector<1x96xf32> to vector<16x96xf32>
    %9 = arith.addf %7, %8 : vector<16x96xf32>
    %10 = vector.extract_strided_slice %9 {offsets = [0, 0], sizes = [16, 32], strides = [1, 1]} : vector<16x96xf32> to vector<16x32xf32>
    %11 = vector.extract_strided_slice %9 {offsets = [0, 32], sizes = [16, 32], strides = [1, 1]} : vector<16x96xf32> to vector<16x32xf32>
    %12 = vector.extract_strided_slice %9 {offsets = [0, 64], sizes = [16, 32], strides = [1, 1]} : vector<16x96xf32> to vector<16x32xf32>
    %13 = vector.extract_strided_slice %10 {offsets = [0, 0], sizes = [16, 8], strides = [1, 1]} : vector<16x32xf32> to vector<16x8xf32>
    %14 = vector.extract_strided_slice %11 {offsets = [0, 0], sizes = [16, 8], strides = [1, 1]} : vector<16x32xf32> to vector<16x8xf32>
    "tpu.trace_start"() <{level = 10 : i32, message = "qd,kd->qk"}> : () -> ()
    %cst_13 = arith.constant dense<0.000000e+00> : vector<16x16xf32>
    %15 = tpu.matmul %13, %14, %cst_13 {dimension_numbers = #tpu.dot_dimension_numbers<[1], [1], [0], [0], [0, 0, 1, 0], [], []>} : vector<16x8xf32>, vector<16x8xf32>, vector<16x16xf32> -> vector<16x16xf32>
    "tpu.trace_stop"() : () -> ()
    %cst_14 = arith.constant 0.353553385 : f32
    %16 = vector.broadcast %cst_14 : f32 to vector<16x16xf32>
    %17 = arith.mulf %15, %16 : vector<16x16xf32>
    %18 = arith.addf %17, %2 : vector<16x16xf32>
    %cst_15 = arith.constant dense<0xFF800000> : vector<16xf32>
    %19 = vector.multi_reduction <maximumf>, %18, %cst_15 [1] : vector<16x16xf32> to vector<16xf32>
    %20 = vector.shape_cast %19 : vector<16xf32> to vector<16x1xf32>
    %21 = vector.broadcast %20 : vector<16x1xf32> to vector<16x16xf32>
    %22 = arith.subf %18, %21 : vector<16x16xf32>
    %23 = math.exp %22 : vector<16x16xf32>
    %cst_16 = arith.constant dense<0.000000e+00> : vector<16xf32>
    %24 = vector.multi_reduction <add>, %23, %cst_16 [1] : vector<16x16xf32> to vector<16xf32>
    %25 = vector.shape_cast %24 : vector<16xf32> to vector<16x1xf32>
    %26 = tpu.reciprocal %25 : vector<16x1xf32> -> vector<16x1xf32>
    %27 = vector.broadcast %26 : vector<16x1xf32> to vector<16x16xf32>
    %28 = arith.mulf %23, %27 : vector<16x16xf32>
    %29 = vector.extract_strided_slice %12 {offsets = [0, 0], sizes = [16, 8], strides = [1, 1]} : vector<16x32xf32> to vector<16x8xf32>
    %cst_17 = arith.constant dense<0.000000e+00> : vector<16x8xf32>
    %30 = tpu.matmul %28, %29, %cst_17 {dimension_numbers = #tpu.dot_dimension_numbers<[1], [0], [0], [1], [0, 0, 1, 1], [], []>} : vector<16x16xf32>, vector<16x8xf32>, vector<16x8xf32> -> vector<16x8xf32>
    %c0_18 = arith.constant 0 : index
    %c0_19 = arith.constant 0 : index
    %31 = vector.load %arg24[%c0_18, %c0_19] : memref<16x32xf32, #tpu.memory_space<vmem>>, vector<16x8xf32>
    tpu.vector_store %arg24[%c0_18, %c0_19], %30 {strides = array<i32>} : memref<16x32xf32, #tpu.memory_space<vmem>>, vector<16x8xf32>,
    %32 = vector.extract_strided_slice %10 {offsets = [0, 8], sizes = [16, 8], strides = [1, 1]} : vector<16x32xf32> to vector<16x8xf32>
    %33 = vector.extract_strided_slice %11 {offsets = [0, 8], sizes = [16, 8], strides = [1, 1]} : vector<16x32xf32> to vector<16x8xf32>
    "tpu.trace_start"() <{level = 10 : i32, message = "qd,kd->qk"}> : () -> ()
    %cst_20 = arith.constant dense<0.000000e+00> : vector<16x16xf32>
    %34 = tpu.matmul %32, %33, %cst_20 {dimension_numbers = #tpu.dot_dimension_numbers<[1], [1], [0], [0], [0, 0, 1, 0], [], []>} : vector<16x8xf32>, vector<16x8xf32>, vector<16x16xf32> -> vector<16x16xf32>
    "tpu.trace_stop"() : () -> ()
    %cst_21 = arith.constant 0.353553385 : f32
    %35 = vector.broadcast %cst_21 : f32 to vector<16x16xf32>
    %36 = arith.mulf %34, %35 : vector<16x16xf32>
    %37 = arith.addf %36, %2 : vector<16x16xf32>
    %cst_22 = arith.constant dense<0xFF800000> : vector<16xf32>
    %38 = vector.multi_reduction <maximumf>, %37, %cst_22 [1] : vector<16x16xf32> to vector<16xf32>
    %39 = vector.shape_cast %38 : vector<16xf32> to vector<16x1xf32>
    %40 = vector.broadcast %39 : vector<16x1xf32> to vector<16x16xf32>
    %41 = arith.subf %37, %40 : vector<16x16xf32>
    %42 = math.exp %41 : vector<16x16xf32>
    %cst_23 = arith.constant dense<0.000000e+00> : vector<16xf32>
    %43 = vector.multi_reduction <add>, %42, %cst_23 [1] : vector<16x16xf32> to vector<16xf32>
    %44 = vector.shape_cast %43 : vector<16xf32> to vector<16x1xf32>
    %45 = tpu.reciprocal %44 : vector<16x1xf32> -> vector<16x1xf32>
    %46 = vector.broadcast %45 : vector<16x1xf32> to vector<16x16xf32>
    %47 = arith.mulf %42, %46 : vector<16x16xf32>
    %48 = vector.extract_strided_slice %12 {offsets = [0, 8], sizes = [16, 8], strides = [1, 1]} : vector<16x32xf32> to vector<16x8xf32>
    %cst_24 = arith.constant dense<0.000000e+00> : vector<16x8xf32>
    %49 = tpu.matmul %47, %48, %cst_24 {dimension_numbers = #tpu.dot_dimension_numbers<[1], [0], [0], [1], [0, 0, 1, 1], [], []>} : vector<16x16xf32>, vector<16x8xf32>, vector<16x8xf32> -> vector<16x8xf32>
    %c0_25 = arith.constant 0 : index
    %c8 = arith.constant 8 : index
    %50 = vector.load %arg24[%c0_25, %c8] : memref<16x32xf32, #tpu.memory_space<vmem>>, vector<16x8xf32>
    tpu.vector_store %arg24[%c0_25, %c8], %49 {strides = array<i32>} : memref<16x32xf32, #tpu.memory_space<vmem>>, vector<16x8xf32>,
    %51 = vector.extract_strided_slice %10 {offsets = [0, 16], sizes = [16, 8], strides = [1, 1]} : vector<16x32xf32> to vector<16x8xf32>
    %52 = vector.extract_strided_slice %11 {offsets = [0, 16], sizes = [16, 8], strides = [1, 1]} : vector<16x32xf32> to vector<16x8xf32>
    "tpu.trace_start"() <{level = 10 : i32, message = "qd,kd->qk"}> : () -> ()
    %cst_26 = arith.constant dense<0.000000e+00> : vector<16x16xf32>
    %53 = tpu.matmul %51, %52, %cst_26 {dimension_numbers = #tpu.dot_dimension_numbers<[1], [1], [0], [0], [0, 0, 1, 0], [], []>} : vector<16x8xf32>, vector<16x8xf32>, vector<16x16xf32> -> vector<16x16xf32>
    "tpu.trace_stop"() : () -> ()
    %cst_27 = arith.constant 0.353553385 : f32
    %54 = vector.broadcast %cst_27 : f32 to vector<16x16xf32>
    %55 = arith.mulf %53, %54 : vector<16x16xf32>
    %56 = arith.addf %55, %2 : vector<16x16xf32>
    %cst_28 = arith.constant dense<0xFF800000> : vector<16xf32>
    %57 = vector.multi_reduction <maximumf>, %56, %cst_28 [1] : vector<16x16xf32> to vector<16xf32>
    %58 = vector.shape_cast %57 : vector<16xf32> to vector<16x1xf32>
    %59 = vector.broadcast %58 : vector<16x1xf32> to vector<16x16xf32>
    %60 = arith.subf %56, %59 : vector<16x16xf32>
    %61 = math.exp %60 : vector<16x16xf32>
    %cst_29 = arith.constant dense<0.000000e+00> : vector<16xf32>
    %62 = vector.multi_reduction <add>, %61, %cst_29 [1] : vector<16x16xf32> to vector<16xf32>
    %63 = vector.shape_cast %62 : vector<16xf32> to vector<16x1xf32>
    %64 = tpu.reciprocal %63 : vector<16x1xf32> -> vector<16x1xf32>
    %65 = vector.broadcast %64 : vector<16x1xf32> to vector<16x16xf32>
    %66 = arith.mulf %61, %65 : vector<16x16xf32>
    %67 = vector.extract_strided_slice %12 {offsets = [0, 16], sizes = [16, 8], strides = [1, 1]} : vector<16x32xf32> to vector<16x8xf32>
    %cst_30 = arith.constant dense<0.000000e+00> : vector<16x8xf32>
    %68 = tpu.matmul %66, %67, %cst_30 {dimension_numbers = #tpu.dot_dimension_numbers<[1], [0], [0], [1], [0, 0, 1, 1], [], []>} : vector<16x16xf32>, vector<16x8xf32>, vector<16x8xf32> -> vector<16x8xf32>
    %c0_31 = arith.constant 0 : index
    %c16 = arith.constant 16 : index
    %69 = vector.load %arg24[%c0_31, %c16] : memref<16x32xf32, #tpu.memory_space<vmem>>, vector<16x8xf32>
    tpu.vector_store %arg24[%c0_31, %c16], %68 {strides = array<i32>} : memref<16x32xf32, #tpu.memory_space<vmem>>, vector<16x8xf32>,
    %70 = vector.extract_strided_slice %10 {offsets = [0, 24], sizes = [16, 8], strides = [1, 1]} : vector<16x32xf32> to vector<16x8xf32>
    %71 = vector.extract_strided_slice %11 {offsets = [0, 24], sizes = [16, 8], strides = [1, 1]} : vector<16x32xf32> to vector<16x8xf32>
    "tpu.trace_start"() <{level = 10 : i32, message = "qd,kd->qk"}> : () -> ()
    %cst_32 = arith.constant dense<0.000000e+00> : vector<16x16xf32>
    %72 = tpu.matmul %70, %71, %cst_32 {dimension_numbers = #tpu.dot_dimension_numbers<[1], [1], [0], [0], [0, 0, 1, 0], [], []>} : vector<16x8xf32>, vector<16x8xf32>, vector<16x16xf32> -> vector<16x16xf32>
    "tpu.trace_stop"() : () -> ()
    %cst_33 = arith.constant 0.353553385 : f32
    %73 = vector.broadcast %cst_33 : f32 to vector<16x16xf32>
    %74 = arith.mulf %72, %73 : vector<16x16xf32>
    %75 = arith.addf %74, %2 : vector<16x16xf32>
    %cst_34 = arith.constant dense<0xFF800000> : vector<16xf32>
    %76 = vector.multi_reduction <maximumf>, %75, %cst_34 [1] : vector<16x16xf32> to vector<16xf32>
    %77 = vector.shape_cast %76 : vector<16xf32> to vector<16x1xf32>
    %78 = vector.broadcast %77 : vector<16x1xf32> to vector<16x16xf32>
    %79 = arith.subf %75, %78 : vector<16x16xf32>
    %80 = math.exp %79 : vector<16x16xf32>
    %cst_35 = arith.constant dense<0.000000e+00> : vector<16xf32>
    %81 = vector.multi_reduction <add>, %80, %cst_35 [1] : vector<16x16xf32> to vector<16xf32>
    %82 = vector.shape_cast %81 : vector<16xf32> to vector<16x1xf32>
    %83 = tpu.reciprocal %82 : vector<16x1xf32> -> vector<16x1xf32>
    %84 = vector.broadcast %83 : vector<16x1xf32> to vector<16x16xf32>
    %85 = arith.mulf %80, %84 : vector<16x16xf32>
    %86 = vector.extract_strided_slice %12 {offsets = [0, 24], sizes = [16, 8], strides = [1, 1]} : vector<16x32xf32> to vector<16x8xf32>
    %cst_36 = arith.constant dense<0.000000e+00> : vector<16x8xf32>
    %87 = tpu.matmul %85, %86, %cst_36 {dimension_numbers = #tpu.dot_dimension_numbers<[1], [0], [0], [1], [0, 0, 1, 1], [], []>} : vector<16x16xf32>, vector<16x8xf32>, vector<16x8xf32> -> vector<16x8xf32>
    %c0_37 = arith.constant 0 : index
    %c24 = arith.constant 24 : index
    %88 = vector.load %arg24[%c0_37, %c24] : memref<16x32xf32, #tpu.memory_space<vmem>>, vector<16x8xf32>
    tpu.vector_store %arg24[%c0_37, %c24], %87 {strides = array<i32>} : memref<16x32xf32, #tpu.memory_space<vmem>>, vector<16x8xf32>,
    %c0_38 = arith.constant 0 : index
    %c0_39 = arith.constant 0 : index
    %89 = vector.load %arg24[%c0_38, %c0_39] : memref<16x32xf32, #tpu.memory_space<vmem>>, vector<16x32xf32>
    %cst_40 = arith.constant dense<0.000000e+00> : vector<16x32xf32>
    %90 = tpu.matmul %89, %5, %cst_40 {dimension_numbers = #tpu.dot_dimension_numbers<[1], [0], [0], [1], [0, 0, 1, 1], [], []>} : vector<16x32xf32>, vector<32x32xf32>, vector<16x32xf32> -> vector<16x32xf32>
    %91 = vector.broadcast %6 : vector<1x32xf32> to vector<16x32xf32>
    %92 = arith.addf %90, %91 : vector<16x32xf32>
    %c0_41 = arith.constant 0 : index
    %c0_42 = arith.constant 0 : index
    %93 = vector.load %arg17[%c0_41, %c0_42] : memref<1x32xf32, #tpu.memory_space<vmem>>, vector<1x32xf32>
    %c0_43 = arith.constant 0 : index
    %c0_44 = arith.constant 0 : index
    %94 = vector.load %arg18[%c0_43, %c0_44] : memref<1x32xf32, #tpu.memory_space<vmem>>, vector<1x32xf32>
    %95 = arith.addf %0, %92 : vector<16x32xf32>
    %cst_45 = arith.constant dense<0.000000e+00> : vector<16xf32>
    %96 = vector.multi_reduction <add>, %95, %cst_45 [1] : vector<16x32xf32> to vector<16xf32>
    %97 = vector.shape_cast %96 : vector<16xf32> to vector<16x1xf32>
    %cst_46 = arith.constant 3.200000e+01 : f32
    %98 = vector.broadcast %cst_46 : f32 to vector<16x1xf32>
    %99 = arith.divf %97, %98 : vector<16x1xf32>
    %100 = vector.broadcast %99 : vector<16x1xf32> to vector<16x32xf32>
    %101 = arith.subf %95, %100 : vector<16x32xf32>
    %102 = arith.mulf %101, %101 : vector<16x32xf32>
    %cst_47 = arith.constant dense<0.000000e+00> : vector<16xf32>
    %103 = vector.multi_reduction <add>, %102, %cst_47 [1] : vector<16x32xf32> to vector<16xf32>
    %104 = vector.shape_cast %103 : vector<16xf32> to vector<16x1xf32>
    %cst_48 = arith.constant 0.0322580636 : f32
    %105 = vector.broadcast %cst_48 : f32 to vector<16x1xf32>
    %106 = arith.mulf %104, %105 : vector<16x1xf32>
    %107 = math.sqrt %106 : vector<16x1xf32>
    %108 = vector.broadcast %93 : vector<1x32xf32> to vector<16x32xf32>
    %109 = arith.mulf %108, %101 : vector<16x32xf32>
    %cst_49 = arith.constant 9.99999997E-7 : f32
    %110 = vector.broadcast %cst_49 : f32 to vector<16x1xf32>
    %111 = arith.addf %107, %110 : vector<16x1xf32>
    %112 = vector.broadcast %111 : vector<16x1xf32> to vector<16x32xf32>
    %113 = arith.divf %109, %112 : vector<16x32xf32>
    %114 = vector.broadcast %94 : vector<1x32xf32> to vector<16x32xf32>
    %115 = arith.addf %113, %114 : vector<16x32xf32>
    %c0_50 = arith.constant 0 : index
    %c0_51 = arith.constant 0 : index
    %116 = vector.load %arg4[%c0_50, %c0_51] : memref<16x16xf32, #tpu.memory_space<vmem>>, vector<16x16xf32>
    %c0_52 = arith.constant 0 : index
    %c0_53 = arith.constant 0 : index
    %117 = vector.load %arg9[%c0_52, %c0_53] : memref<32x96xf32, #tpu.memory_space<vmem>>, vector<32x96xf32>
    %c0_54 = arith.constant 0 : index
    %c0_55 = arith.constant 0 : index
    %118 = vector.load %arg10[%c0_54, %c0_55] : memref<1x96xf32, #tpu.memory_space<vmem>>, vector<1x96xf32>
    %c0_56 = arith.constant 0 : index
    %c0_57 = arith.constant 0 : index
    %119 = vector.load %arg11[%c0_56, %c0_57] : memref<32x32xf32, #tpu.memory_space<vmem>>, vector<32x32xf32>
    %c0_58 = arith.constant 0 : index
    %c0_59 = arith.constant 0 : index
    %120 = vector.load %arg12[%c0_58, %c0_59] : memref<1x32xf32, #tpu.memory_space<vmem>>, vector<1x32xf32>
    %121 = vector.extract_strided_slice %117 {offsets = [0, 0], sizes = [32, 32], strides = [1, 1]} : vector<32x96xf32> to vector<32x32xf32>
    %cst_60 = arith.constant dense<0.000000e+00> : vector<16x32xf32>
    %122 = tpu.matmul %115, %121, %cst_60 {dimension_numbers = #tpu.dot_dimension_numbers<[1], [0], [0], [1], [0, 0, 1, 1], [], []>} : vector<16x32xf32>, vector<32x32xf32>, vector<16x32xf32> -> vector<16x32xf32>
    %123 = vector.extract_strided_slice %118 {offsets = [0, 0], sizes = [1, 32], strides = [1, 1]} : vector<1x96xf32> to vector<1x32xf32>
    %124 = vector.broadcast %123 : vector<1x32xf32> to vector<16x32xf32>
    %125 = arith.addf %122, %124 : vector<16x32xf32>
    %126 = vector.extract_strided_slice %117 {offsets = [0, 32], sizes = [32, 64], strides = [1, 1]} : vector<32x96xf32> to vector<32x64xf32>
    %cst_61 = arith.constant dense<0.000000e+00> : vector<16x64xf32>
    %127 = tpu.matmul %1, %126, %cst_61 {dimension_numbers = #tpu.dot_dimension_numbers<[1], [0], [0], [1], [0, 0, 1, 1], [], []>} : vector<16x32xf32>, vector<32x64xf32>, vector<16x64xf32> -> vector<16x64xf32>
    %128 = vector.extract_strided_slice %118 {offsets = [0, 32], sizes = [1, 64], strides = [1, 1]} : vector<1x96xf32> to vector<1x64xf32>
    %129 = vector.broadcast %128 : vector<1x64xf32> to vector<16x64xf32>
    %130 = arith.addf %127, %129 : vector<16x64xf32>
    %131 = vector.extract_strided_slice %130 {offsets = [0, 0], sizes = [16, 32], strides = [1, 1]} : vector<16x64xf32> to vector<16x32xf32>
    %132 = vector.extract_strided_slice %130 {offsets = [0, 32], sizes = [16, 32], strides = [1, 1]} : vector<16x64xf32> to vector<16x32xf32>
    %133 = vector.extract_strided_slice %125 {offsets = [0, 0], sizes = [16, 8], strides = [1, 1]} : vector<16x32xf32> to vector<16x8xf32>
    %134 = vector.extract_strided_slice %131 {offsets = [0, 0], sizes = [16, 8], strides = [1, 1]} : vector<16x32xf32> to vector<16x8xf32>
    "tpu.trace_start"() <{level = 10 : i32, message = "qd,kd->qk"}> : () -> ()
    %cst_62 = arith.constant dense<0.000000e+00> : vector<16x16xf32>
    %135 = tpu.matmul %133, %134, %cst_62 {dimension_numbers = #tpu.dot_dimension_numbers<[1], [1], [0], [0], [0, 0, 1, 0], [], []>} : vector<16x8xf32>, vector<16x8xf32>, vector<16x16xf32> -> vector<16x16xf32>
    "tpu.trace_stop"() : () -> ()
    %cst_63 = arith.constant 0.353553385 : f32
    %136 = vector.broadcast %cst_63 : f32 to vector<16x16xf32>
    %137 = arith.mulf %135, %136 : vector<16x16xf32>
    %138 = arith.addf %137, %116 : vector<16x16xf32>
    %cst_64 = arith.constant dense<0xFF800000> : vector<16xf32>
    %139 = vector.multi_reduction <maximumf>, %138, %cst_64 [1] : vector<16x16xf32> to vector<16xf32>
    %140 = vector.shape_cast %139 : vector<16xf32> to vector<16x1xf32>
    %141 = vector.broadcast %140 : vector<16x1xf32> to vector<16x16xf32>
    %142 = arith.subf %138, %141 : vector<16x16xf32>
    %143 = math.exp %142 : vector<16x16xf32>
    %cst_65 = arith.constant dense<0.000000e+00> : vector<16xf32>
    %144 = vector.multi_reduction <add>, %143, %cst_65 [1] : vector<16x16xf32> to vector<16xf32>
    %145 = vector.shape_cast %144 : vector<16xf32> to vector<16x1xf32>
    %146 = tpu.reciprocal %145 : vector<16x1xf32> -> vector<16x1xf32>
    %147 = vector.broadcast %146 : vector<16x1xf32> to vector<16x16xf32>
    %148 = arith.mulf %143, %147 : vector<16x16xf32>
    %149 = vector.extract_strided_slice %132 {offsets = [0, 0], sizes = [16, 8], strides = [1, 1]} : vector<16x32xf32> to vector<16x8xf32>
    %cst_66 = arith.constant dense<0.000000e+00> : vector<16x8xf32>
    %150 = tpu.matmul %148, %149, %cst_66 {dimension_numbers = #tpu.dot_dimension_numbers<[1], [0], [0], [1], [0, 0, 1, 1], [], []>} : vector<16x16xf32>, vector<16x8xf32>, vector<16x8xf32> -> vector<16x8xf32>
    %c0_67 = arith.constant 0 : index
    %c0_68 = arith.constant 0 : index
    %151 = vector.load %arg24[%c0_67, %c0_68] : memref<16x32xf32, #tpu.memory_space<vmem>>, vector<16x8xf32>
    tpu.vector_store %arg24[%c0_67, %c0_68], %150 {strides = array<i32>} : memref<16x32xf32, #tpu.memory_space<vmem>>, vector<16x8xf32>,
    %152 = vector.extract_strided_slice %125 {offsets = [0, 8], sizes = [16, 8], strides = [1, 1]} : vector<16x32xf32> to vector<16x8xf32>
    %153 = vector.extract_strided_slice %131 {offsets = [0, 8], sizes = [16, 8], strides = [1, 1]} : vector<16x32xf32> to vector<16x8xf32>
    "tpu.trace_start"() <{level = 10 : i32, message = "qd,kd->qk"}> : () -> ()
    %cst_69 = arith.constant dense<0.000000e+00> : vector<16x16xf32>
    %154 = tpu.matmul %152, %153, %cst_69 {dimension_numbers = #tpu.dot_dimension_numbers<[1], [1], [0], [0], [0, 0, 1, 0], [], []>} : vector<16x8xf32>, vector<16x8xf32>, vector<16x16xf32> -> vector<16x16xf32>
    "tpu.trace_stop"() : () -> ()
    %cst_70 = arith.constant 0.353553385 : f32
    %155 = vector.broadcast %cst_70 : f32 to vector<16x16xf32>
    %156 = arith.mulf %154, %155 : vector<16x16xf32>
    %157 = arith.addf %156, %116 : vector<16x16xf32>
    %cst_71 = arith.constant dense<0xFF800000> : vector<16xf32>
    %158 = vector.multi_reduction <maximumf>, %157, %cst_71 [1] : vector<16x16xf32> to vector<16xf32>
    %159 = vector.shape_cast %158 : vector<16xf32> to vector<16x1xf32>
    %160 = vector.broadcast %159 : vector<16x1xf32> to vector<16x16xf32>
    %161 = arith.subf %157, %160 : vector<16x16xf32>
    %162 = math.exp %161 : vector<16x16xf32>
    %cst_72 = arith.constant dense<0.000000e+00> : vector<16xf32>
    %163 = vector.multi_reduction <add>, %162, %cst_72 [1] : vector<16x16xf32> to vector<16xf32>
    %164 = vector.shape_cast %163 : vector<16xf32> to vector<16x1xf32>
    %165 = tpu.reciprocal %164 : vector<16x1xf32> -> vector<16x1xf32>
    %166 = vector.broadcast %165 : vector<16x1xf32> to vector<16x16xf32>
    %167 = arith.mulf %162, %166 : vector<16x16xf32>
    %168 = vector.extract_strided_slice %132 {offsets = [0, 8], sizes = [16, 8], strides = [1, 1]} : vector<16x32xf32> to vector<16x8xf32>
    %cst_73 = arith.constant dense<0.000000e+00> : vector<16x8xf32>
    %169 = tpu.matmul %167, %168, %cst_73 {dimension_numbers = #tpu.dot_dimension_numbers<[1], [0], [0], [1], [0, 0, 1, 1], [], []>} : vector<16x16xf32>, vector<16x8xf32>, vector<16x8xf32> -> vector<16x8xf32>
    %c0_74 = arith.constant 0 : index
    %c8_75 = arith.constant 8 : index
    %170 = vector.load %arg24[%c0_74, %c8_75] : memref<16x32xf32, #tpu.memory_space<vmem>>, vector<16x8xf32>
    tpu.vector_store %arg24[%c0_74, %c8_75], %169 {strides = array<i32>} : memref<16x32xf32, #tpu.memory_space<vmem>>, vector<16x8xf32>,
    %171 = vector.extract_strided_slice %125 {offsets = [0, 16], sizes = [16, 8], strides = [1, 1]} : vector<16x32xf32> to vector<16x8xf32>
    %172 = vector.extract_strided_slice %131 {offsets = [0, 16], sizes = [16, 8], strides = [1, 1]} : vector<16x32xf32> to vector<16x8xf32>
    "tpu.trace_start"() <{level = 10 : i32, message = "qd,kd->qk"}> : () -> ()
    %cst_76 = arith.constant dense<0.000000e+00> : vector<16x16xf32>
    %173 = tpu.matmul %171, %172, %cst_76 {dimension_numbers = #tpu.dot_dimension_numbers<[1], [1], [0], [0], [0, 0, 1, 0], [], []>} : vector<16x8xf32>, vector<16x8xf32>, vector<16x16xf32> -> vector<16x16xf32>
    "tpu.trace_stop"() : () -> ()
    %cst_77 = arith.constant 0.353553385 : f32
    %174 = vector.broadcast %cst_77 : f32 to vector<16x16xf32>
    %175 = arith.mulf %173, %174 : vector<16x16xf32>
    %176 = arith.addf %175, %116 : vector<16x16xf32>
    %cst_78 = arith.constant dense<0xFF800000> : vector<16xf32>
    %177 = vector.multi_reduction <maximumf>, %176, %cst_78 [1] : vector<16x16xf32> to vector<16xf32>
    %178 = vector.shape_cast %177 : vector<16xf32> to vector<16x1xf32>
    %179 = vector.broadcast %178 : vector<16x1xf32> to vector<16x16xf32>
    %180 = arith.subf %176, %179 : vector<16x16xf32>
    %181 = math.exp %180 : vector<16x16xf32>
    %cst_79 = arith.constant dense<0.000000e+00> : vector<16xf32>
    %182 = vector.multi_reduction <add>, %181, %cst_79 [1] : vector<16x16xf32> to vector<16xf32>
    %183 = vector.shape_cast %182 : vector<16xf32> to vector<16x1xf32>
    %184 = tpu.reciprocal %183 : vector<16x1xf32> -> vector<16x1xf32>
    %185 = vector.broadcast %184 : vector<16x1xf32> to vector<16x16xf32>
    %186 = arith.mulf %181, %185 : vector<16x16xf32>
    %187 = vector.extract_strided_slice %132 {offsets = [0, 16], sizes = [16, 8], strides = [1, 1]} : vector<16x32xf32> to vector<16x8xf32>
    %cst_80 = arith.constant dense<0.000000e+00> : vector<16x8xf32>
    %188 = tpu.matmul %186, %187, %cst_80 {dimension_numbers = #tpu.dot_dimension_numbers<[1], [0], [0], [1], [0, 0, 1, 1], [], []>} : vector<16x16xf32>, vector<16x8xf32>, vector<16x8xf32> -> vector<16x8xf32>
    %c0_81 = arith.constant 0 : index
    %c16_82 = arith.constant 16 : index
    %189 = vector.load %arg24[%c0_81, %c16_82] : memref<16x32xf32, #tpu.memory_space<vmem>>, vector<16x8xf32>
    tpu.vector_store %arg24[%c0_81, %c16_82], %188 {strides = array<i32>} : memref<16x32xf32, #tpu.memory_space<vmem>>, vector<16x8xf32>,
    %190 = vector.extract_strided_slice %125 {offsets = [0, 24], sizes = [16, 8], strides = [1, 1]} : vector<16x32xf32> to vector<16x8xf32>
    %191 = vector.extract_strided_slice %131 {offsets = [0, 24], sizes = [16, 8], strides = [1, 1]} : vector<16x32xf32> to vector<16x8xf32>
    "tpu.trace_start"() <{level = 10 : i32, message = "qd,kd->qk"}> : () -> ()
    %cst_83 = arith.constant dense<0.000000e+00> : vector<16x16xf32>
    %192 = tpu.matmul %190, %191, %cst_83 {dimension_numbers = #tpu.dot_dimension_numbers<[1], [1], [0], [0], [0, 0, 1, 0], [], []>} : vector<16x8xf32>, vector<16x8xf32>, vector<16x16xf32> -> vector<16x16xf32>
    "tpu.trace_stop"() : () -> ()
    %cst_84 = arith.constant 0.353553385 : f32
    %193 = vector.broadcast %cst_84 : f32 to vector<16x16xf32>
    %194 = arith.mulf %192, %193 : vector<16x16xf32>
    %195 = arith.addf %194, %116 : vector<16x16xf32>
    %cst_85 = arith.constant dense<0xFF800000> : vector<16xf32>
    %196 = vector.multi_reduction <maximumf>, %195, %cst_85 [1] : vector<16x16xf32> to vector<16xf32>
    %197 = vector.shape_cast %196 : vector<16xf32> to vector<16x1xf32>
    %198 = vector.broadcast %197 : vector<16x1xf32> to vector<16x16xf32>
    %199 = arith.subf %195, %198 : vector<16x16xf32>
    %200 = math.exp %199 : vector<16x16xf32>
    %cst_86 = arith.constant dense<0.000000e+00> : vector<16xf32>
    %201 = vector.multi_reduction <add>, %200, %cst_86 [1] : vector<16x16xf32> to vector<16xf32>
    %202 = vector.shape_cast %201 : vector<16xf32> to vector<16x1xf32>
    %203 = tpu.reciprocal %202 : vector<16x1xf32> -> vector<16x1xf32>
    %204 = vector.broadcast %203 : vector<16x1xf32> to vector<16x16xf32>
    %205 = arith.mulf %200, %204 : vector<16x16xf32>
    %206 = vector.extract_strided_slice %132 {offsets = [0, 24], sizes = [16, 8], strides = [1, 1]} : vector<16x32xf32> to vector<16x8xf32>
    %cst_87 = arith.constant dense<0.000000e+00> : vector<16x8xf32>
    %207 = tpu.matmul %205, %206, %cst_87 {dimension_numbers = #tpu.dot_dimension_numbers<[1], [0], [0], [1], [0, 0, 1, 1], [], []>} : vector<16x16xf32>, vector<16x8xf32>, vector<16x8xf32> -> vector<16x8xf32>
    %c0_88 = arith.constant 0 : index
    %c24_89 = arith.constant 24 : index
    %208 = vector.load %arg24[%c0_88, %c24_89] : memref<16x32xf32, #tpu.memory_space<vmem>>, vector<16x8xf32>
    tpu.vector_store %arg24[%c0_88, %c24_89], %207 {strides = array<i32>} : memref<16x32xf32, #tpu.memory_space<vmem>>, vector<16x8xf32>,
    %c0_90 = arith.constant 0 : index
    %c0_91 = arith.constant 0 : index
    %209 = vector.load %arg24[%c0_90, %c0_91] : memref<16x32xf32, #tpu.memory_space<vmem>>, vector<16x32xf32>
    %cst_92 = arith.constant dense<0.000000e+00> : vector<16x32xf32>
    %210 = tpu.matmul %209, %119, %cst_92 {dimension_numbers = #tpu.dot_dimension_numbers<[1], [0], [0], [1], [0, 0, 1, 1], [], []>} : vector<16x32xf32>, vector<32x32xf32>, vector<16x32xf32> -> vector<16x32xf32>
    %211 = vector.broadcast %120 : vector<1x32xf32> to vector<16x32xf32>
    %212 = arith.addf %210, %211 : vector<16x32xf32>
    %c0_93 = arith.constant 0 : index
    %c0_94 = arith.constant 0 : index
    %213 = vector.load %arg19[%c0_93, %c0_94] : memref<1x32xf32, #tpu.memory_space<vmem>>, vector<1x32xf32>
    %c0_95 = arith.constant 0 : index
    %c0_96 = arith.constant 0 : index
    %214 = vector.load %arg20[%c0_95, %c0_96] : memref<1x32xf32, #tpu.memory_space<vmem>>, vector<1x32xf32>
    %215 = arith.addf %115, %212 : vector<16x32xf32>
    %cst_97 = arith.constant dense<0.000000e+00> : vector<16xf32>
    %216 = vector.multi_reduction <add>, %215, %cst_97 [1] : vector<16x32xf32> to vector<16xf32>
    %217 = vector.shape_cast %216 : vector<16xf32> to vector<16x1xf32>
    %cst_98 = arith.constant 3.200000e+01 : f32
    %218 = vector.broadcast %cst_98 : f32 to vector<16x1xf32>
    %219 = arith.divf %217, %218 : vector<16x1xf32>
    %220 = vector.broadcast %219 : vector<16x1xf32> to vector<16x32xf32>
    %221 = arith.subf %215, %220 : vector<16x32xf32>
    %222 = arith.mulf %221, %221 : vector<16x32xf32>
    %cst_99 = arith.constant dense<0.000000e+00> : vector<16xf32>
    %223 = vector.multi_reduction <add>, %222, %cst_99 [1] : vector<16x32xf32> to vector<16xf32>
    %224 = vector.shape_cast %223 : vector<16xf32> to vector<16x1xf32>
    %cst_100 = arith.constant 0.0322580636 : f32
    %225 = vector.broadcast %cst_100 : f32 to vector<16x1xf32>
    %226 = arith.mulf %224, %225 : vector<16x1xf32>
    %227 = math.sqrt %226 : vector<16x1xf32>
    %228 = vector.broadcast %213 : vector<1x32xf32> to vector<16x32xf32>
    %229 = arith.mulf %228, %221 : vector<16x32xf32>
    %cst_101 = arith.constant 9.99999997E-7 : f32
    %230 = vector.broadcast %cst_101 : f32 to vector<16x1xf32>
    %231 = arith.addf %227, %230 : vector<16x1xf32>
    %232 = vector.broadcast %231 : vector<16x1xf32> to vector<16x32xf32>
    %233 = arith.divf %229, %232 : vector<16x32xf32>
    %234 = vector.broadcast %214 : vector<1x32xf32> to vector<16x32xf32>
    %235 = arith.addf %233, %234 : vector<16x32xf32>
    %c0_102 = arith.constant 0 : index
    %c0_103 = arith.constant 0 : index
    %236 = vector.load %arg13[%c0_102, %c0_103] : memref<32x64xf32, #tpu.memory_space<vmem>>, vector<32x64xf32>
    %cst_104 = arith.constant dense<0.000000e+00> : vector<16x64xf32>
    %237 = tpu.matmul %235, %236, %cst_104 {dimension_numbers = #tpu.dot_dimension_numbers<[1], [0], [0], [1], [0, 0, 1, 1], [], []>} : vector<16x32xf32>, vector<32x64xf32>, vector<16x64xf32> -> vector<16x64xf32>
    %c0_105 = arith.constant 0 : index
    %c0_106 = arith.constant 0 : index
    %238 = vector.load %arg14[%c0_105, %c0_106] : memref<1x64xf32, #tpu.memory_space<vmem>>, vector<1x64xf32>
    %239 = vector.broadcast %238 : vector<1x64xf32> to vector<16x64xf32>
    %240 = arith.addf %237, %239 : vector<16x64xf32>
    %cst_107 = arith.constant 0.000000e+00 : f32
    %241 = vector.broadcast %cst_107 : f32 to vector<16x64xf32>
    %242 = arith.maximumf %240, %241 : vector<16x64xf32>
    %c0_108 = arith.constant 0 : index
    %c0_109 = arith.constant 0 : index
    %243 = vector.load %arg15[%c0_108, %c0_109] : memref<64x32xf32, #tpu.memory_space<vmem>>, vector<64x32xf32>
    %cst_110 = arith.constant dense<0.000000e+00> : vector<16x32xf32>
    %244 = tpu.matmul %242, %243, %cst_110 {dimension_numbers = #tpu.dot_dimension_numbers<[1], [0], [0], [1], [0, 0, 1, 1], [], []>} : vector<16x64xf32>, vector<64x32xf32>, vector<16x32xf32> -> vector<16x32xf32>
    %c0_111 = arith.constant 0 : index
    %c0_112 = arith.constant 0 : index
    %245 = vector.load %arg16[%c0_111, %c0_112] : memref<1x32xf32, #tpu.memory_space<vmem>>, vector<1x32xf32>
    %246 = vector.broadcast %245 : vector<1x32xf32> to vector<16x32xf32>
    %247 = arith.addf %244, %246 : vector<16x32xf32>
    %c0_113 = arith.constant 0 : index
    %c0_114 = arith.constant 0 : index
    %248 = vector.load %arg21[%c0_113, %c0_114] : memref<1x32xf32, #tpu.memory_space<vmem>>, vector<1x32xf32>
    %c0_115 = arith.constant 0 : index
    %c0_116 = arith.constant 0 : index
    %249 = vector.load %arg22[%c0_115, %c0_116] : memref<1x32xf32, #tpu.memory_space<vmem>>, vector<1x32xf32>
    %250 = arith.addf %235, %247 : vector<16x32xf32>
    %cst_117 = arith.constant dense<0.000000e+00> : vector<16xf32>
    %251 = vector.multi_reduction <add>, %250, %cst_117 [1] : vector<16x32xf32> to vector<16xf32>
    %252 = vector.shape_cast %251 : vector<16xf32> to vector<16x1xf32>
    %cst_118 = arith.constant 3.200000e+01 : f32
    %253 = vector.broadcast %cst_118 : f32 to vector<16x1xf32>
    %254 = arith.divf %252, %253 : vector<16x1xf32>
    %255 = vector.broadcast %254 : vector<16x1xf32> to vector<16x32xf32>
    %256 = arith.subf %250, %255 : vector<16x32xf32>
    %257 = arith.mulf %256, %256 : vector<16x32xf32>
    %cst_119 = arith.constant dense<0.000000e+00> : vector<16xf32>
    %258 = vector.multi_reduction <add>, %257, %cst_119 [1] : vector<16x32xf32> to vector<16xf32>
    %259 = vector.shape_cast %258 : vector<16xf32> to vector<16x1xf32>
    %cst_120 = arith.constant 0.0322580636 : f32
    %260 = vector.broadcast %cst_120 : f32 to vector<16x1xf32>
    %261 = arith.mulf %259, %260 : vector<16x1xf32>
    %262 = math.sqrt %261 : vector<16x1xf32>
    %263 = vector.broadcast %248 : vector<1x32xf32> to vector<16x32xf32>
    %264 = arith.mulf %263, %256 : vector<16x32xf32>
    %cst_121 = arith.constant 9.99999997E-7 : f32
    %265 = vector.broadcast %cst_121 : f32 to vector<16x1xf32>
    %266 = arith.addf %262, %265 : vector<16x1xf32>
    %267 = vector.broadcast %266 : vector<16x1xf32> to vector<16x32xf32>
    %268 = arith.divf %264, %267 : vector<16x32xf32>
    %269 = vector.broadcast %249 : vector<1x32xf32> to vector<16x32xf32>
    %270 = arith.addf %268, %269 : vector<16x32xf32>
    %c0_122 = arith.constant 0 : index
    %c0_123 = arith.constant 0 : index
    %271 = vector.load %arg23[%c0_122, %c0_123] : memref<16x32xf32, #tpu.memory_space<vmem>>, vector<16x32xf32>
    tpu.vector_store %arg23[%c0_122, %c0_123], %270 {strides = array<i32>} : memref<16x32xf32, #tpu.memory_space<vmem>>, vector<16x32xf32>,
    return
  }
  func.func @transform_0(%arg0: i32) -> (i32, i32) {
    %c0_i32 = arith.constant 0 : i32
    %c0_i32_0 = arith.constant 0 : i32
    %c0_i32_1 = arith.constant 0 : i32
    return %c0_i32, %c0_i32_0 : i32, i32
  }
  func.func @transform_1(%arg0: i32) -> (i32, i32) {
    %c0_i32 = arith.constant 0 : i32
    %c0_i32_0 = arith.constant 0 : i32
    %c0_i32_1 = arith.constant 0 : i32
    return %c0_i32, %c0_i32_0 : i32, i32
  }
  func.func @transform_2(%arg0: i32) -> (i32, i32) {
    %c0_i32 = arith.constant 0 : i32
    %c0_i32_0 = arith.constant 0 : i32
    %c0_i32_1 = arith.constant 0 : i32
    return %c0_i32, %c0_i32_0 : i32, i32
  }
  func.func @transform_3(%arg0: i32) -> (i32, i32) {
    %c0_i32 = arith.constant 0 : i32
    %c0_i32_0 = arith.constant 0 : i32
    %c0_i32_1 = arith.constant 0 : i32
    return %c0_i32, %c0_i32_0 : i32, i32
  }
  func.func @transform_4(%arg0: i32) -> (i32, i32) {
    %c0_i32 = arith.constant 0 : i32
    %c0_i32_0 = arith.constant 0 : i32
    %c0_i32_1 = arith.constant 0 : i32
    return %c0_i32, %c0_i32_0 : i32, i32
  }
  func.func @transform_5(%arg0: i32) -> (i32, i32) {
    %c0_i32 = arith.constant 0 : i32
    %c0_i32_0 = arith.constant 0 : i32
    %c0_i32_1 = arith.constant 0 : i32
    return %c0_i32, %c0_i32_0 : i32, i32
  }
  func.func @transform_6(%arg0: i32) -> (i32, i32) {
    %c0_i32 = arith.constant 0 : i32
    %c0_i32_0 = arith.constant 0 : i32
    %c0_i32_1 = arith.constant 0 : i32
    return %c0_i32, %c0_i32_0 : i32, i32
  }
  func.func @transform_7(%arg0: i32) -> (i32, i32) {
    %c0_i32 = arith.constant 0 : i32
    %c0_i32_0 = arith.constant 0 : i32
    %c0_i32_1 = arith.constant 0 : i32
    return %c0_i32, %c0_i32_0 : i32, i32
  }
  func.func @transform_8(%arg0: i32) -> (i32, i32) {
    %c0_i32 = arith.constant 0 : i32
    %c0_i32_0 = arith.constant 0 : i32
    %c0_i32_1 = arith.constant 0 : i32
    return %c0_i32, %c0_i32_0 : i32, i32
  }
  func.func @transform_9(%arg0: i32) -> (i32, i32) {
    %c0_i32 = arith.constant 0 : i32
    %c0_i32_0 = arith.constant 0 : i32
    %c0_i32_1 = arith.constant 0 : i32
    return %c0_i32, %c0_i32_0 : i32, i32
  }
  func.func @transform_10(%arg0: i32) -> (i32, i32) {
    %c0_i32 = arith.constant 0 : i32
    %c0_i32_0 = arith.constant 0 : i32
    %c0_i32_1 = arith.constant 0 : i32
    return %c0_i32, %c0_i32_0 : i32, i32
  }
  func.func @transform_11(%arg0: i32) -> (i32, i32) {
    %c0_i32 = arith.constant 0 : i32
    %c0_i32_0 = arith.constant 0 : i32
    %c0_i32_1 = arith.constant 0 : i32
    return %c0_i32, %c0_i32_0 : i32, i32
  }
  func.func @transform_12(%arg0: i32) -> (i32, i32) {
    %c0_i32 = arith.constant 0 : i32
    %c0_i32_0 = arith.constant 0 : i32
    %c0_i32_1 = arith.constant 0 : i32
    return %c0_i32, %c0_i32_0 : i32, i32
  }
  func.func @transform_13(%arg0: i32) -> (i32, i32) {
    %c0_i32 = arith.constant 0 : i32
    %c0_i32_0 = arith.constant 0 : i32
    %c0_i32_1 = arith.constant 0 : i32
    return %c0_i32, %c0_i32_0 : i32, i32
  }
  func.func @transform_14(%arg0: i32) -> (i32, i32) {
    %c0_i32 = arith.constant 0 : i32
    %c0_i32_0 = arith.constant 0 : i32
    %c0_i32_1 = arith.constant 0 : i32
    return %c0_i32, %c0_i32_0 : i32, i32
  }
  func.func @transform_15(%arg0: i32) -> (i32, i32) {
    %c0_i32 = arith.constant 0 : i32
    %c0_i32_0 = arith.constant 0 : i32
    %c0_i32_1 = arith.constant 0 : i32
    return %c0_i32, %c0_i32_0 : i32, i32
  }
  func.func @transform_16(%arg0: i32) -> (i32, i32) {
    %c0_i32 = arith.constant 0 : i32
    %c0_i32_0 = arith.constant 0 : i32
    %c0_i32_1 = arith.constant 0 : i32
    return %c0_i32, %c0_i32_0 : i32, i32
  }
  func.func @transform_17(%arg0: i32) -> (i32, i32) {
    %c0_i32 = arith.constant 0 : i32
    %c0_i32_0 = arith.constant 0 : i32
    %c0_i32_1 = arith.constant 0 : i32
    return %c0_i32, %c0_i32_0 : i32, i32
  }
  func.func @transform_18(%arg0: i32) -> (i32, i32) {
    %c0_i32 = arith.constant 0 : i32
    %c0_i32_0 = arith.constant 0 : i32
    %c0_i32_1 = arith.constant 0 : i32
    return %c0_i32, %c0_i32_0 : i32, i32
  }
  func.func @transform_19(%arg0: i32) -> (i32, i32) {
    %c0_i32 = arith.constant 0 : i32
    %c0_i32_0 = arith.constant 0 : i32
    %c0_i32_1 = arith.constant 0 : i32
    return %c0_i32, %c0_i32_0 : i32, i32
  }
  func.func @transform_20(%arg0: i32) -> (i32, i32) {
    %c0_i32 = arith.constant 0 : i32
    %c0_i32_0 = arith.constant 0 : i32
    %c0_i32_1 = arith.constant 0 : i32
    return %c0_i32, %c0_i32_0 : i32, i32
  }
  func.func @transform_21(%arg0: i32) -> (i32, i32) {
    %c0_i32 = arith.constant 0 : i32
    %c0_i32_0 = arith.constant 0 : i32
    %c0_i32_1 = arith.constant 0 : i32
    return %c0_i32, %c0_i32_0 : i32, i32
  }
  func.func @transform_22(%arg0: i32) -> (i32, i32) {
    %c0_i32 = arith.constant 0 : i32
    %c0_i32_0 = arith.constant 0 : i32
    %c0_i32_1 = arith.constant 0 : i32
    return %c0_i32, %c0_i32_0 : i32, i32
  }
}

</mosaic_0001>

<llo_original>
// kernel: tpu_custom_call.1
$region0: #{tpu_custom_call.1}
  #allocation0 [shape = 'u32[]', space=smem, size = 0x4, offset = 0x4, fixed_abs, tag = 'smem constant byte address 0x4 - core index']
  #allocation1 [shape = 'u32[144,128]{1,0:T(1,128)}', space=vmem, size = 0x12000, scoped, tag = 'internal scratch']
  #allocation2 [shape = 'f32[16,32]{1,0:T(8,128)}', space=vmem, size = 0x2000, scoped, tag = 'scratch operand']
  %s0 = inlined_call_operand.hbm [shape: f32[16,32], index: 0, kind: input, shape index: {}]
  %s1 = inlined_call_operand.hbm [shape: f32[16,32], index: 1, kind: input, shape index: {}]
  %s2 = inlined_call_operand.hbm [shape: f32[16,16], index: 2, kind: input, shape index: {}]
  %s3 = inlined_call_operand.hbm [shape: f32[16,16], index: 3, kind: input, shape index: {}]
  %s4 = inlined_call_operand.vmem [shape: f32[32,96], index: 4, kind: input, shape index: {}]
  %s5 = inlined_call_operand.vmem [shape: f32[1,96], index: 5, kind: input, shape index: {}]
  %s6 = inlined_call_operand.vmem [shape: f32[32,32], index: 6, kind: input, shape index: {}]
  %s7 = inlined_call_operand.vmem [shape: f32[1,32], index: 7, kind: input, shape index: {}]
  %s8 = inlined_call_operand.vmem [shape: f32[32,96], index: 8, kind: input, shape index: {}]
  %s9 = inlined_call_operand.vmem [shape: f32[1,96], index: 9, kind: input, shape index: {}]
  %s10 = inlined_call_operand.hbm [shape: f32[32,32], index: 10, kind: input, shape index: {}]
  %s11 = inlined_call_operand.vmem [shape: f32[1,32], index: 11, kind: input, shape index: {}]
  %s12 = inlined_call_operand.hbm [shape: f32[32,64], index: 12, kind: input, shape index: {}]
  %s13 = inlined_call_operand.vmem [shape: f32[1,64], index: 13, kind: input, shape index: {}]
  %s14 = inlined_call_operand.vmem [shape: f32[64,32], index: 14, kind: input, shape index: {}]
  %s15 = inlined_call_operand.vmem [shape: f32[1,32], index: 15, kind: input, shape index: {}]
  %s16 = inlined_call_operand.vmem [shape: f32[1,32], index: 16, kind: input, shape index: {}]
  %s17 = inlined_call_operand.vmem [shape: f32[1,32], index: 17, kind: input, shape index: {}]
  %s18 = inlined_call_operand.vmem [shape: f32[1,32], index: 18, kind: input, shape index: {}]
  %s19 = inlined_call_operand.vmem [shape: f32[1,32], index: 19, kind: input, shape index: {}]
  %s20 = inlined_call_operand.vmem [shape: f32[1,32], index: 20, kind: input, shape index: {}]
  %s21 = inlined_call_operand.vmem [shape: f32[1,32], index: 21, kind: input, shape index: {}]
  %s22 = inlined_call_operand.hbm [shape: f32[16,32], index: 22, kind: output, shape index: {}]
  %s23 = sld [smem:[#allocation0]]
  $region122: #{tpu_custom_call.1} parent=0
    _
  %s25 = ssub.s32 1, %s23
  %s26 = scalar_select 0, %s25, %s23
  $region1: #{tpu_custom_call.1} parent=0
    #allocation3 [shape = 'u8[8192]{0}', space=vmem, size = 0x2000, scoped, tag = 'input window, operand 0, single buffered']
    #allocation4 [shape = 's32[1]{0}', space=sflag, size = 0x4, scoped, tag = 'scoped memory for tpu_custom_call.1']
    #allocation5 [shape = 's32[1]{0}', space=sflag, size = 0x4, scoped, tag = 'scoped memory for tpu_custom_call.1']
    #allocation6 [shape = 'u8[8192]{0}', space=vmem, size = 0x2000, scoped, tag = 'input window, operand 1, single buffered']
    #allocation7 [shape = 's32[1]{0}', space=sflag, size = 0x4, scoped, tag = 'scoped memory for tpu_custom_call.1']
    #allocation8 [shape = 'u8[8192]{0}', space=vmem, size = 0x2000, scoped, tag = 'input window, operand 2, single buffered']
    #allocation9 [shape = 'u8[8192]{0}', space=vmem, size = 0x2000, scoped, tag = 'input window, operand 3, single buffered']
    #allocation10 [shape = 's32[1]{0}', space=sflag, size = 0x4, scoped, tag = 'scoped memory for tpu_custom_call.1']
    #allocation11 [shape = 'u8[16384]{0}', space=vmem, size = 0x4000, scoped, tag = 'input window, operand 10, single buffered']
    #allocation12 [shape = 'u8[16384]{0}', space=vmem, size = 0x4000, scoped, tag = 'input window, operand 12, single buffered']
    #allocation13 [shape = 's32[1]{0}', space=sflag, size = 0x4, scoped, tag = 'scoped memory for tpu_custom_call.1']
    #allocation14 [shape = 'u8[8192]{0}', space=vmem, size = 0x2000, scoped, tag = 'output window, operand 0, single buffered']
    %27 = vsyncpa [#allocation4], 0
    %28 = vsyncpa [#allocation7], 0
    %29 = vsyncpa [#allocation10], 0
    %30 = vsyncpa [#allocation13], 0
    %31 = vsyncpa [#allocation5], 0
    // Predicated region
    $region2: #{tpu_custom_call.1} parent=1 // pred_check
      _
    $region3: #{tpu_custom_call.1} parent=1 // pred_check_branch
      %33 = sbr.rel (0) target = $region5
    $region4: #{tpu_custom_call.1} parent=1 // pred_region
      %s35 = ssub.s32 256, 256
      %36 = vsyncadd [#allocation4], %s35
      %s37 = sshll.u32 [#allocation3], 4
      %s38 = int_to_ptr.vmem [resolvable:$true] %s37
      %43 = dma.hbm_to_vmem [thread:$0]  %s0, 256, %s38, [#allocation4], 128, 128, 8
    $region5: #{tpu_custom_call.1} parent=1 // pred_fallthru
      _
    // Predicated region
    $region6: #{tpu_custom_call.1} parent=1 // pred_check
      _
    $region7: #{tpu_custom_call.1} parent=1 // pred_check_branch
      %45 = sbr.rel (0) target = $region9
    $region8: #{tpu_custom_call.1} parent=1 // pred_region
      %s47 = ssub.s32 256, 256
      %48 = vsyncadd [#allocation7], %s47
      %s49 = sshll.u32 [#allocation6], 4
      %s50 = int_to_ptr.vmem [resolvable:$true] %s49
      %55 = dma.hbm_to_vmem [thread:$0]  %s1, 256, %s50, [#allocation7], 128, 128, 8
    $region9: #{tpu_custom_call.1} parent=1 // pred_fallthru
      _
    // Predicated region
    $region10: #{tpu_custom_call.1} parent=1 // pred_check
      _
    $region11: #{tpu_custom_call.1} parent=1 // pred_check_branch
      %57 = sbr.rel (0) target = $region13
    $region12: #{tpu_custom_call.1} parent=1 // pred_region
      %s59 = ssub.s32 256, 256
      %60 = vsyncadd [#allocation7], %s59
      %s61 = sshll.u32 [#allocation8], 4
      %s62 = int_to_ptr.vmem [resolvable:$true] %s61
      %67 = dma.hbm_to_vmem [thread:$0]  %s2, 256, %s62, [#allocation7], 128, 128, 8
    $region13: #{tpu_custom_call.1} parent=1 // pred_fallthru
      _
    // Predicated region
    $region14: #{tpu_custom_call.1} parent=1 // pred_check
      _
    $region15: #{tpu_custom_call.1} parent=1 // pred_check_branch
      %69 = sbr.rel (0) target = $region17
    $region16: #{tpu_custom_call.1} parent=1 // pred_region
      %s71 = ssub.s32 256, 256
      %72 = vsyncadd [#allocation10], %s71
      %s73 = sshll.u32 [#allocation9], 4
      %s74 = int_to_ptr.vmem [resolvable:$true] %s73
      %79 = dma.hbm_to_vmem [thread:$0]  %s3, 256, %s74, [#allocation10], 128, 128, 8
    $region17: #{tpu_custom_call.1} parent=1 // pred_fallthru
      _
    // Predicated region
    $region18: #{tpu_custom_call.1} parent=1 // pred_check
      _
    $region19: #{tpu_custom_call.1} parent=1 // pred_check_branch
      %81 = sbr.rel (0) target = $region21
    $region20: #{tpu_custom_call.1} parent=1 // pred_region
      _
    $region21: #{tpu_custom_call.1} parent=1 // pred_fallthru
      _
    // Predicated region
    $region22: #{tpu_custom_call.1} parent=1 // pred_check
      _
    $region23: #{tpu_custom_call.1} parent=1 // pred_check_branch
      %83 = sbr.rel (0) target = $region25
    $region24: #{tpu_custom_call.1} parent=1 // pred_region
      _
    $region25: #{tpu_custom_call.1} parent=1 // pred_fallthru
      _
    // Predicated region
    $region26: #{tpu_custom_call.1} parent=1 // pred_check
      _
    $region27: #{tpu_custom_call.1} parent=1 // pred_check_branch
      %85 = sbr.rel (0) target = $region29
    $region28: #{tpu_custom_call.1} parent=1 // pred_region
      _
    $region29: #{tpu_custom_call.1} parent=1 // pred_fallthru
      _
    // Predicated region
    $region30: #{tpu_custom_call.1} parent=1 // pred_check
      _
    $region31: #{tpu_custom_call.1} parent=1 // pred_check_branch
      %87 = sbr.rel (0) target = $region33
    $region32: #{tpu_custom_call.1} parent=1 // pred_region
      _
    $region33: #{tpu_custom_call.1} parent=1 // pred_fallthru
      _
    // Predicated region
    $region34: #{tpu_custom_call.1} parent=1 // pred_check
      _
    $region35: #{tpu_custom_call.1} parent=1 // pred_check_branch
      %89 = sbr.rel (0) target = $region37
    $region36: #{tpu_custom_call.1} parent=1 // pred_region
      _
    $region37: #{tpu_custom_call.1} parent=1 // pred_fallthru
      _
    // Predicated region
    $region38: #{tpu_custom_call.1} parent=1 // pred_check
      _
    $region39: #{tpu_custom_call.1} parent=1 // pred_check_branch
      %91 = sbr.rel (0) target = $region41
    $region40: #{tpu_custom_call.1} parent=1 // pred_region
      _
    $region41: #{tpu_custom_call.1} parent=1 // pred_fallthru
      _
    // Predicated region
    $region42: #{tpu_custom_call.1} parent=1 // pred_check
      _
    $region43: #{tpu_custom_call.1} parent=1 // pred_check_branch
      %93 = sbr.rel (0) target = $region45
    $region44: #{tpu_custom_call.1} parent=1 // pred_region
      %s95 = ssub.s32 512, 512
      %96 = vsyncadd [#allocation10], %s95
      %s97 = sshll.u32 [#allocation11], 4
      %s98 = int_to_ptr.vmem [resolvable:$true] %s97
      %103 = dma.hbm_to_vmem [thread:$0]  %s10, 512, %s98, [#allocation10], 128, 128, 8
    $region45: #{tpu_custom_call.1} parent=1 // pred_fallthru
      _
    // Predicated region
    $region46: #{tpu_custom_call.1} parent=1 // pred_check
      _
    $region47: #{tpu_custom_call.1} parent=1 // pred_check_branch
      %105 = sbr.rel (0) target = $region49
    $region48: #{tpu_custom_call.1} parent=1 // pred_region
      _
    $region49: #{tpu_custom_call.1} parent=1 // pred_fallthru
      _
    // Predicated region
    $region50: #{tpu_custom_call.1} parent=1 // pred_check
      _
    $region51: #{tpu_custom_call.1} parent=1 // pred_check_branch
      %107 = sbr.rel (0) target = $region53
    $region52: #{tpu_custom_call.1} parent=1 // pred_region
      %s109 = ssub.s32 512, 512
      %110 = vsyncadd [#allocation13], %s109
      %s111 = sshll.u32 [#allocation12], 4
      %s112 = int_to_ptr.vmem [resolvable:$true] %s111
      %117 = dma.hbm_to_vmem [thread:$0]  %s12, 512, %s112, [#allocation13], 128, 128, 8
    $region53: #{tpu_custom_call.1} parent=1 // pred_fallthru
      _
    // Predicated region
    $region54: #{tpu_custom_call.1} parent=1 // pred_check
      _
    $region55: #{tpu_custom_call.1} parent=1 // pred_check_branch
      %119 = sbr.rel (0) target = $region57
    $region56: #{tpu_custom_call.1} parent=1 // pred_region
      _
    $region57: #{tpu_custom_call.1} parent=1 // pred_fallthru
      _
    // Predicated region
    $region58: #{tpu_custom_call.1} parent=1 // pred_check
      _
    $region59: #{tpu_custom_call.1} parent=1 // pred_check_branch
      %121 = sbr.rel (0) target = $region61
    $region60: #{tpu_custom_call.1} parent=1 // pred_region
      _
    $region61: #{tpu_custom_call.1} parent=1 // pred_fallthru
      _
    // Predicated region
    $region62: #{tpu_custom_call.1} parent=1 // pred_check
      _
    $region63: #{tpu_custom_call.1} parent=1 // pred_check_branch
      %123 = sbr.rel (0) target = $region65
    $region64: #{tpu_custom_call.1} parent=1 // pred_region
      _
    $region65: #{tpu_custom_call.1} parent=1 // pred_fallthru
      _
    // Predicated region
    $region66: #{tpu_custom_call.1} parent=1 // pred_check
      _
    $region67: #{tpu_custom_call.1} parent=1 // pred_check_branch
      %125 = sbr.rel (0) target = $region69
    $region68: #{tpu_custom_call.1} parent=1 // pred_region
      _
    $region69: #{tpu_custom_call.1} parent=1 // pred_fallthru
      _
    // Predicated region
    $region70: #{tpu_custom_call.1} parent=1 // pred_check
      _
    $region71: #{tpu_custom_call.1} parent=1 // pred_check_branch
      %127 = sbr.rel (0) target = $region73
    $region72: #{tpu_custom_call.1} parent=1 // pred_region
      _
    $region73: #{tpu_custom_call.1} parent=1 // pred_fallthru
      _
    // Predicated region
    $region74: #{tpu_custom_call.1} parent=1 // pred_check
      _
    $region75: #{tpu_custom_call.1} parent=1 // pred_check_branch
      %129 = sbr.rel (0) target = $region77
    $region76: #{tpu_custom_call.1} parent=1 // pred_region
      _
    $region77: #{tpu_custom_call.1} parent=1 // pred_fallthru
      _
    // Predicated region
    $region78: #{tpu_custom_call.1} parent=1 // pred_check
      _
    $region79: #{tpu_custom_call.1} parent=1 // pred_check_branch
      %131 = sbr.rel (0) target = $region81
    $region80: #{tpu_custom_call.1} parent=1 // pred_region
      _
    $region81: #{tpu_custom_call.1} parent=1 // pred_fallthru
      _
    // Predicated region
    $region82: #{tpu_custom_call.1} parent=1 // pred_check
      _
    $region83: #{tpu_custom_call.1} parent=1 // pred_check_branch
      %133 = sbr.rel (0) target = $region85
    $region84: #{tpu_custom_call.1} parent=1 // pred_region
      _
    $region85: #{tpu_custom_call.1} parent=1 // pred_fallthru
      _
    // Predicated region
    $region86: #{tpu_custom_call.1} parent=1 // pred_check
      _
    $region87: #{tpu_custom_call.1} parent=1 // pred_check_branch
      %135 = sbr.rel (0) target = $region89
    $region88: #{tpu_custom_call.1} parent=1 // pred_region
      _
    $region89: #{tpu_custom_call.1} parent=1 // pred_fallthru
      _
    // Predicated region
    $region90: #{tpu_custom_call.1} parent=1 // pred_check
      _
    $region91: #{tpu_custom_call.1} parent=1 // pred_check_branch
      %137 = sbr.rel (0) target = $region93
    $region92: #{tpu_custom_call.1} parent=1 // pred_region
      %138 = dma.done [#allocation4], 256
    $region93: #{tpu_custom_call.1} parent=1 // pred_fallthru
      _
    // Predicated region
    $region94: #{tpu_custom_call.1} parent=1 // pred_check
      _
    $region95: #{tpu_custom_call.1} parent=1 // pred_check_branch
      %140 = sbr.rel (0) target = $region97
    $region96: #{tpu_custom_call.1} parent=1 // pred_region
      %141 = dma.done [#allocation7], 256
    $region97: #{tpu_custom_call.1} parent=1 // pred_fallthru
      _
    // Predicated region
    $region98: #{tpu_custom_call.1} parent=1 // pred_check
      _
    $region99: #{tpu_custom_call.1} parent=1 // pred_check_branch
      %143 = sbr.rel (0) target = $region101
    $region100: #{tpu_custom_call.1} parent=1 // pred_region
      %144 = dma.done [#allocation7], 256
    $region101: #{tpu_custom_call.1} parent=1 // pred_fallthru
      _
    // Predicated region
    $region102: #{tpu_custom_call.1} parent=1 // pred_check
      _
    $region103: #{tpu_custom_call.1} parent=1 // pred_check_branch
      %146 = sbr.rel (0) target = $region105
    $region104: #{tpu_custom_call.1} parent=1 // pred_region
      %147 = dma.done [#allocation10], 256
    $region105: #{tpu_custom_call.1} parent=1 // pred_fallthru
      _
    // Predicated region
    $region106: #{tpu_custom_call.1} parent=1 // pred_check
      _
    $region107: #{tpu_custom_call.1} parent=1 // pred_check_branch
      %149 = sbr.rel (0) target = $region109
    $region108: #{tpu_custom_call.1} parent=1 // pred_region
      %150 = dma.done [#allocation10], 512
    $region109: #{tpu_custom_call.1} parent=1 // pred_fallthru
      _
    // Predicated region
    $region110: #{tpu_custom_call.1} parent=1 // pred_check
      _
    $region111: #{tpu_custom_call.1} parent=1 // pred_check_branch
      %152 = sbr.rel (0) target = $region113
    $region112: #{tpu_custom_call.1} parent=1 // pred_region
      %153 = dma.done [#allocation13], 512
    $region113: #{tpu_custom_call.1} parent=1 // pred_fallthru
      _
    %v154 = vld [vmem:[#allocation3] sm:$0xff]
    %v155 = vld [vmem:[#allocation3 + $0x8] sm:$0xff]
    %v156 = vld [vmem:[#allocation6] sm:$0xff]
    %v157 = vld [vmem:[#allocation6 + $0x8] sm:$0xff]
    %v158 = vld [vmem:[#allocation8] sm:$0xff]
    %v159 = vld [vmem:[#allocation8 + $0x8] sm:$0xff]
    %v160 = vld [vmem:[%s4] sm:$0xff]
    %v161 = vld [vmem:[%s4 + $0x8] sm:$0xff]
    %v162 = vld [vmem:[%s4 + $0x10] sm:$0xff]
    %v163 = vld [vmem:[%s4 + $0x18] sm:$0xff]
    %v164 = vld [vmem:[%s5] sm:$0x1]
    %v165 = vld [vmem:[%s6] sm:$0xff]
    %v166 = vld [vmem:[%s6 + $0x8] sm:$0xff]
    %v167 = vld [vmem:[%s6 + $0x10] sm:$0xff]
    %v168 = vld [vmem:[%s6 + $0x18] sm:$0xff]
    %v169 = vld [vmem:[%s7] sm:$0x1]
    %v171 = vlaneseq
    %v172 = vshrl.u32 %v171, 7
    %v173 = vsub.s32 0, %v172
    %v174 = vrot.slane %v164, %v173
    %vm176 = vcmask 261120
    %v178 = vsel %vm176, %v154, 0
    %v181 = vsel %vm176, %v155, 0
    %183 = vmatprep.subr.mxu0 0.0
    %184 = vmatpush1.msra.mxu0 %v160
    %185 = vmatprep.subr.mxu0 0.0
    %186 = vmatpush1.msra.mxu0 %v161
    %187 = vmatprep.subr.mxu0 0.0
    %188 = vmatpush1.msra.mxu0 %v162
    %189 = vmatprep.subr.mxu0 0.0
    %190 = vmatpush1.msra.mxu0 %v163
    %191 = vmatprep.subr.mxu0 0.0
    %192 = vmatpush1.msra.mxu0 0.0
    %193 = vmatprep.subr.mxu0 0.0
    %194 = vmatpush1.msra.mxu0 0.0
    %195 = vmatprep.subr.mxu0 0.0
    %196 = vmatpush1.msra.mxu0 0.0
    %197 = vmatprep.subr.mxu0 0.0
    %198 = vmatpush1.msra.mxu0 0.0
    %199 = vmatprep.subr.mxu0 0.0
    %200 = vmatpush1.msra.mxu0 0.0
    %201 = vmatprep.subr.mxu0 0.0
    %202 = vmatpush1.msra.mxu0 0.0
    %203 = vmatprep.subr.mxu0 0.0
    %204 = vmatpush1.msra.mxu0 0.0
    %205 = vmatprep.subr.mxu0 0.0
    %206 = vmatpush1.msra.mxu0 0.0
    %207 = vmatprep.subr.mxu0 0.0
    %208 = vmatpush1.msra.mxu0 0.0
    %209 = vmatprep.subr.mxu0 0.0
    %210 = vmatpush1.msra.mxu0 0.0
    %211 = vmatprep.subr.mxu0 0.0
    %212 = vmatpush1.msra.mxu0 0.0
    %213 = vmatprep.subr.mxu0 0.0
    %214 = vmatpush1.msra.mxu0 0.0
    %215 = vmatprep.subr.mxu0 0.0
    %216 = vmatpush1.msra.mxu0 0.0
    %217 = vmatprep.subr.mxu0 0.0
    %218 = vmatpush1.msra.mxu0 0.0
    %219 = vmatprep.subr.mxu0 0.0
    %220 = vmatpush1.msra.mxu0 0.0
    %221 = vmatprep.subr.mxu0 0.0
    %222 = vmatpush1.msra.mxu0 0.0
    %223 = vmatprep.subr.mxu0 0.0
    %224 = vmatpush1.msra.mxu0 0.0
    %225 = vmatprep.subr.mxu0 0.0
    %226 = vmatpush1.msra.mxu0 0.0
    %227 = vmatprep.subr.mxu0 0.0
    %228 = vmatpush1.msra.mxu0 0.0
    %229 = vmatprep.subr.mxu0 0.0
    %230 = vmatpush1.msra.mxu0 0.0
    %231 = vmatprep.subr.mxu0 0.0
    %232 = vmatpush1.msra.mxu0 0.0
    %233 = vmatprep.subr.mxu0 0.0
    %234 = vmatpush1.msra.mxu0 0.0
    %235 = vmatprep.subr.mxu0 0.0
    %236 = vmatpush1.msra.mxu0 0.0
    %237 = vmatprep.subr.mxu0 0.0
    %238 = vmatpush1.msra.mxu0 0.0
    %239 = vmatprep.subr.mxu0 0.0
    %240 = vmatpush1.msra.mxu0 0.0
    %241 = vmatprep.subr.mxu0 0.0
    %242 = vmatpush1.msra.mxu0 0.0
    %243 = vmatprep.subr.mxu0 0.0
    %244 = vmatpush1.msra.mxu0 0.0
    %245 = vmatprep.subr.mxu0 0.0
    %246 = vmatpush1.msra.mxu0 0.0
    %247 = vmatprep.mubr.f32.mxu0 0.0
    %248 = vmatmul.mubr.f32.gmra.mrb[0].mxu0 %v178
    %v249 = vpop.f32.mrb[0].mxu0
    %v250 = vadd.f32 %v174, %v249
    %v251 = vpop.f32.mrb[0].mxu0
    %252 = vmatprep.mubr.f32.mxu0 0.0
    %253 = vmatmul.mubr.f32.gmra.mrb[0].mxu0 %v181
    %v254 = vpop.f32.mrb[0].mxu0
    %v255 = vadd.f32 %v174, %v254
    %v256 = vpop.f32.mrb[0].mxu0
    %257 = vdwg.mxu0
    %260 = vrot.lane.b32.xlu0 %v250, 96
    %v261 = vpop.permute.xlu0 %260
    %262 = vrot.lane.b32.xlu0 %v255, 96
    %v263 = vpop.permute.xlu0 %262
    %vm264 = vcmask 64512
    %v265 = vsel %vm264, %v250, 0
    %v267 = vsel %vm264, %v255, 0
    %v269 = vsel %vm264, %v261, 0
    %v271 = vsel %vm264, %v263, 0
    %273 = vmatprep.subr.mxu0 0.0
    %274 = vmatpush1.xpose.msra.mxu0 %v269
    %275 = vmatprep.subr.mxu0 0.0
    %276 = vmatpush1.xpose.msra.mxu0 %v271
    %277 = vmatprep.subr.mxu0 0.0
    %278 = vmatpush1.xpose.msra.mxu0 0.0
    %279 = vmatprep.subr.mxu0 0.0
    %280 = vmatpush1.xpose.msra.mxu0 0.0
    %281 = vmatprep.subr.mxu0 0.0
    %282 = vmatpush1.xpose.msra.mxu0 0.0
    %283 = vmatprep.subr.mxu0 0.0
    %284 = vmatpush1.xpose.msra.mxu0 0.0
    %285 = vmatprep.subr.mxu0 0.0
    %286 = vmatpush1.xpose.msra.mxu0 0.0
    %287 = vmatprep.subr.mxu0 0.0
    %288 = vmatpush1.xpose.msra.mxu0 0.0
    %289 = vmatprep.subr.mxu0 0.0
    %290 = vmatpush1.xpose.msra.mxu0 0.0
    %291 = vmatprep.subr.mxu0 0.0
    %292 = vmatpush1.xpose.msra.mxu0 0.0
    %293 = vmatprep.subr.mxu0 0.0
    %294 = vmatpush1.xpose.msra.mxu0 0.0
    %295 = vmatprep.subr.mxu0 0.0
    %296 = vmatpush1.xpose.msra.mxu0 0.0
    %297 = vmatprep.subr.mxu0 0.0
    %298 = vmatpush1.xpose.msra.mxu0 0.0
    %299 = vmatprep.subr.mxu0 0.0
    %300 = vmatpush1.xpose.msra.mxu0 0.0
    %301 = vmatprep.subr.mxu0 0.0
    %302 = vmatpush1.xpose.msra.mxu0 0.0
    %303 = vmatprep.subr.mxu0 0.0
    %304 = vmatpush1.xpose.msra.mxu0 0.0
    %305 = vmatprep.subr.mxu0 0.0
    %306 = vmatpush1.xpose.msra.mxu0 0.0
    %307 = vmatprep.subr.mxu0 0.0
    %308 = vmatpush1.xpose.msra.mxu0 0.0
    %309 = vmatprep.subr.mxu0 0.0
    %310 = vmatpush1.xpose.msra.mxu0 0.0
    %311 = vmatprep.subr.mxu0 0.0
    %312 = vmatpush1.xpose.msra.mxu0 0.0
    %313 = vmatprep.subr.mxu0 0.0
    %314 = vmatpush1.xpose.msra.mxu0 0.0
    %315 = vmatprep.subr.mxu0 0.0
    %316 = vmatpush1.xpose.msra.mxu0 0.0
    %317 = vmatprep.subr.mxu0 0.0
    %318 = vmatpush1.xpose.msra.mxu0 0.0
    %319 = vmatprep.subr.mxu0 0.0
    %320 = vmatpush1.xpose.msra.mxu0 0.0
    %321 = vmatprep.subr.mxu0 0.0
    %322 = vmatpush1.xpose.msra.mxu0 0.0
    %323 = vmatprep.subr.mxu0 0.0
    %324 = vmatpush1.xpose.msra.mxu0 0.0
    %325 = vmatprep.subr.mxu0 0.0
    %326 = vmatpush1.xpose.msra.mxu0 0.0
    %327 = vmatprep.subr.mxu0 0.0
    %328 = vmatpush1.xpose.msra.mxu0 0.0
    %329 = vmatprep.subr.mxu0 0.0
    %330 = vmatpush1.xpose.msra.mxu0 0.0
    %331 = vmatprep.subr.mxu0 0.0
    %332 = vmatpush1.xpose.msra.mxu0 0.0
    %333 = vmatprep.subr.mxu0 0.0
    %334 = vmatpush1.xpose.msra.mxu0 0.0
    %335 = vmatprep.subr.mxu0 0.0
    %336 = vmatpush1.xpose.msra.mxu0 0.0
    %337 = vmatprep.mubr.f32.mxu0 0.0
    %338 = vmatmul.mubr.f32.gmra.mrb[0].mxu0 %v265
    %v339 = vpop.f32.mrb[0].mxu0
    %v340 = vadd.f32 0.0, %v339
    %v341 = vpop.f32.mrb[0].mxu0
    %342 = vmatprep.mubr.f32.mxu0 0.0
    %343 = vmatmul.mubr.f32.gmra.mrb[0].mxu0 %v267
    %v344 = vpop.f32.mrb[0].mxu0
    %v345 = vadd.f32 0.0, %v344
    %v346 = vpop.f32.mrb[0].mxu0
    %347 = vdwg.mxu0
    %v348 = vmul.f32 %v340, 0.35355338
    %v349 = vmul.f32 %v345, 0.35355338
    %v350 = vadd.f32 %v348, %v158
    %v351 = vadd.f32 %v349, %v159
    %vm352 = vcmask 130048
    %v353 = vsel %vm352, %v350, -inf
    %354 = vmax.xlane.f32.xlu0 %v353
    %v355 = vpop.xlane.xlu0 %354
    %v356 = vsel %vm352, %v351, -inf
    %357 = vmax.xlane.f32.xlu0 %v356
    %v358 = vpop.xlane.xlu0 %357
    %v359 = vsub.f32 %v350, %v355
    %v360 = vsub.f32 %v351, %v358
    %v361 = vmul.f32 %v359, 1.442695
    %v362 = vpow.pop %v361
    %v363 = vmul.f32 %v360, 1.442695
    %v364 = vpow.pop %v363
    %v365 = vsel %vm352, %v362, 0.0
    %366 = vadd.xlane.f32.xlu0 %v365
    %v367 = vpop.xlane.xlu0 %366
    %v368 = vsel %vm352, %v364, 0.0
    %369 = vadd.xlane.f32.xlu0 %v368
    %v370 = vpop.xlane.xlu0 %369
    %v371 = vrcp.pop %v367
    %v372 = vrcp.pop %v370
    %v373 = vmul.f32 %v362, %v371
    %v374 = vmul.f32 %v364, %v372
    %375 = vrot.lane.b32.xlu0 %v250, 64
    %v376 = vpop.permute.xlu0 %375
    %377 = vrot.lane.b32.xlu0 %v255, 64
    %v378 = vpop.permute.xlu0 %377
    %v382 = vsel %vm352, %v373, 0
    %v385 = vsel %vm352, %v374, 0
    %387 = vmatprep.subr.mxu0 0.0
    %388 = vmatpush1.msra.mxu0 %v376
    %389 = vmatprep.subr.mxu0 0.0
    %390 = vmatpush1.msra.mxu0 %v378
    %391 = vmatprep.subr.mxu0 0.0
    %392 = vmatpush1.msra.mxu0 0.0
    %393 = vmatprep.subr.mxu0 0.0
    %394 = vmatpush1.msra.mxu0 0.0
    %395 = vmatprep.subr.mxu0 0.0
    %396 = vmatpush1.msra.mxu0 0.0
    %397 = vmatprep.subr.mxu0 0.0
    %398 = vmatpush1.msra.mxu0 0.0
    %399 = vmatprep.subr.mxu0 0.0
    %400 = vmatpush1.msra.mxu0 0.0
    %401 = vmatprep.subr.mxu0 0.0
    %402 = vmatpush1.msra.mxu0 0.0
    %403 = vmatprep.subr.mxu0 0.0
    %404 = vmatpush1.msra.mxu0 0.0
    %405 = vmatprep.subr.mxu0 0.0
    %406 = vmatpush1.msra.mxu0 0.0
    %407 = vmatprep.subr.mxu0 0.0
    %408 = vmatpush1.msra.mxu0 0.0
    %409 = vmatprep.subr.mxu0 0.0
    %410 = vmatpush1.msra.mxu0 0.0
    %411 = vmatprep.subr.mxu0 0.0
    %412 = vmatpush1.msra.mxu0 0.0
    %413 = vmatprep.subr.mxu0 0.0
    %414 = vmatpush1.msra.mxu0 0.0
    %415 = vmatprep.subr.mxu0 0.0
    %416 = vmatpush1.msra.mxu0 0.0
    %417 = vmatprep.subr.mxu0 0.0
    %418 = vmatpush1.msra.mxu0 0.0
    %419 = vmatprep.subr.mxu0 0.0
    %420 = vmatpush1.msra.mxu0 0.0
    %421 = vmatprep.subr.mxu0 0.0
    %422 = vmatpush1.msra.mxu0 0.0
    %423 = vmatprep.subr.mxu0 0.0
    %424 = vmatpush1.msra.mxu0 0.0
    %425 = vmatprep.subr.mxu0 0.0
    %426 = vmatpush1.msra.mxu0 0.0
    %427 = vmatprep.subr.mxu0 0.0
    %428 = vmatpush1.msra.mxu0 0.0
    %429 = vmatprep.subr.mxu0 0.0
    %430 = vmatpush1.msra.mxu0 0.0
    %431 = vmatprep.subr.mxu0 0.0
    %432 = vmatpush1.msra.mxu0 0.0
    %433 = vmatprep.subr.mxu0 0.0
    %434 = vmatpush1.msra.mxu0 0.0
    %435 = vmatprep.subr.mxu0 0.0
    %436 = vmatpush1.msra.mxu0 0.0
    %437 = vmatprep.subr.mxu0 0.0
    %438 = vmatpush1.msra.mxu0 0.0
    %439 = vmatprep.subr.mxu0 0.0
    %440 = vmatpush1.msra.mxu0 0.0
    %441 = vmatprep.subr.mxu0 0.0
    %442 = vmatpush1.msra.mxu0 0.0
    %443 = vmatprep.subr.mxu0 0.0
    %444 = vmatpush1.msra.mxu0 0.0
    %445 = vmatprep.subr.mxu0 0.0
    %446 = vmatpush1.msra.mxu0 0.0
    %447 = vmatprep.subr.mxu0 0.0
    %448 = vmatpush1.msra.mxu0 0.0
    %449 = vmatprep.subr.mxu0 0.0
    %450 = vmatpush1.msra.mxu0 0.0
    %451 = vmatprep.mubr.f32.mxu0 0.0
    %452 = vmatmul.mubr.f32.gmra.mrb[0].mxu0 %v382
    %v453 = vpop.f32.mrb[0].mxu0
    %v454 = vadd.f32 0.0, %v453
    %v455 = vpop.f32.mrb[0].mxu0
    %456 = vmatprep.mubr.f32.mxu0 0.0
    %457 = vmatmul.mubr.f32.gmra.mrb[0].mxu0 %v385
    %v458 = vpop.f32.mrb[0].mxu0
    %v459 = vadd.f32 0.0, %v458
    %v460 = vpop.f32.mrb[0].mxu0
    %461 = vdwg.mxu0
    %462 = vst.msk [vmem:[#allocation2] sm:$0xff] %vm264, %v454
    %463 = vst.msk [vmem:[#allocation2 + $0x8] sm:$0xff] %vm264, %v459
    %464 = vrot.lane.b32.xlu0 %v250, 120
    %v465 = vpop.permute.xlu0 %464
    %466 = vrot.lane.b32.xlu0 %v255, 120
    %v467 = vpop.permute.xlu0 %466
    %468 = vrot.lane.b32.xlu0 %v250, 88
    %v469 = vpop.permute.xlu0 %468
    %470 = vrot.lane.b32.xlu0 %v255, 88
    %v471 = vpop.permute.xlu0 %470
    %v472 = vsel %vm264, %v465, 0
    %v474 = vsel %vm264, %v467, 0
    %v476 = vsel %vm264, %v469, 0
    %v478 = vsel %vm264, %v471, 0
    %480 = vmatprep.subr.mxu0 0.0
    %481 = vmatpush1.xpose.msra.mxu0 %v476
    %482 = vmatprep.subr.mxu0 0.0
    %483 = vmatpush1.xpose.msra.mxu0 %v478
    %484 = vmatprep.subr.mxu0 0.0
    %485 = vmatpush1.xpose.msra.mxu0 0.0
    %486 = vmatprep.subr.mxu0 0.0
    %487 = vmatpush1.xpose.msra.mxu0 0.0
    %488 = vmatprep.subr.mxu0 0.0
    %489 = vmatpush1.xpose.msra.mxu0 0.0
    %490 = vmatprep.subr.mxu0 0.0
    %491 = vmatpush1.xpose.msra.mxu0 0.0
    %492 = vmatprep.subr.mxu0 0.0
    %493 = vmatpush1.xpose.msra.mxu0 0.0
    %494 = vmatprep.subr.mxu0 0.0
    %495 = vmatpush1.xpose.msra.mxu0 0.0
    %496 = vmatprep.subr.mxu0 0.0
    %497 = vmatpush1.xpose.msra.mxu0 0.0
    %498 = vmatprep.subr.mxu0 0.0
    %499 = vmatpush1.xpose.msra.mxu0 0.0
    %500 = vmatprep.subr.mxu0 0.0
    %501 = vmatpush1.xpose.msra.mxu0 0.0
    %502 = vmatprep.subr.mxu0 0.0
    %503 = vmatpush1.xpose.msra.mxu0 0.0
    %504 = vmatprep.subr.mxu0 0.0
    %505 = vmatpush1.xpose.msra.mxu0 0.0
    %506 = vmatprep.subr.mxu0 0.0
    %507 = vmatpush1.xpose.msra.mxu0 0.0
    %508 = vmatprep.subr.mxu0 0.0
    %509 = vmatpush1.xpose.msra.mxu0 0.0
    %510 = vmatprep.subr.mxu0 0.0
    %511 = vmatpush1.xpose.msra.mxu0 0.0
    %512 = vmatprep.subr.mxu0 0.0
    %513 = vmatpush1.xpose.msra.mxu0 0.0
    %514 = vmatprep.subr.mxu0 0.0
    %515 = vmatpush1.xpose.msra.mxu0 0.0
    %516 = vmatprep.subr.mxu0 0.0
    %517 = vmatpush1.xpose.msra.mxu0 0.0
    %518 = vmatprep.subr.mxu0 0.0
    %519 = vmatpush1.xpose.msra.mxu0 0.0
    %520 = vmatprep.subr.mxu0 0.0
    %521 = vmatpush1.xpose.msra.mxu0 0.0
    %522 = vmatprep.subr.mxu0 0.0
    %523 = vmatpush1.xpose.msra.mxu0 0.0
    %524 = vmatprep.subr.mxu0 0.0
    %525 = vmatpush1.xpose.msra.mxu0 0.0
    %526 = vmatprep.subr.mxu0 0.0
    %527 = vmatpush1.xpose.msra.mxu0 0.0
    %528 = vmatprep.subr.mxu0 0.0
    %529 = vmatpush1.xpose.msra.mxu0 0.0
    %530 = vmatprep.subr.mxu0 0.0
    %531 = vmatpush1.xpose.msra.mxu0 0.0
    %532 = vmatprep.subr.mxu0 0.0
    %533 = vmatpush1.xpose.msra.mxu0 0.0
    %534 = vmatprep.subr.mxu0 0.0
    %535 = vmatpush1.xpose.msra.mxu0 0.0
    %536 = vmatprep.subr.mxu0 0.0
    %537 = vmatpush1.xpose.msra.mxu0 0.0
    %538 = vmatprep.subr.mxu0 0.0
    %539 = vmatpush1.xpose.msra.mxu0 0.0
    %540 = vmatprep.subr.mxu0 0.0
    %541 = vmatpush1.xpose.msra.mxu0 0.0
    %542 = vmatprep.subr.mxu0 0.0
    %543 = vmatpush1.xpose.msra.mxu0 0.0
    %544 = vmatprep.mubr.f32.mxu0 0.0
    %545 = vmatmul.mubr.f32.gmra.mrb[0].mxu0 %v472
    %v546 = vpop.f32.mrb[0].mxu0
    %v547 = vadd.f32 0.0, %v546
    %v548 = vpop.f32.mrb[0].mxu0
    %549 = vmatprep.mubr.f32.mxu0 0.0
    %550 = vmatmul.mubr.f32.gmra.mrb[0].mxu0 %v474
    %v551 = vpop.f32.mrb[0].mxu0
    %v552 = vadd.f32 0.0, %v551
    %v553 = vpop.f32.mrb[0].mxu0
    %554 = vdwg.mxu0
    %v555 = vmul.f32 %v547, 0.35355338
    %v556 = vmul.f32 %v552, 0.35355338
    %v557 = vadd.f32 %v555, %v158
    %v558 = vadd.f32 %v556, %v159
    %v559 = vsel %vm352, %v557, -inf
    %560 = vmax.xlane.f32.xlu0 %v559
    %v561 = vpop.xlane.xlu0 %560
    %v562 = vsel %vm352, %v558, -inf
    %563 = vmax.xlane.f32.xlu0 %v562
    %v564 = vpop.xlane.xlu0 %563
    %v565 = vsub.f32 %v557, %v561
    %v566 = vsub.f32 %v558, %v564
    %v567 = vmul.f32 %v565, 1.442695
    %v568 = vpow.pop %v567
    %v569 = vmul.f32 %v566, 1.442695
    %v570 = vpow.pop %v569
    %v571 = vsel %vm352, %v568, 0.0
    %572 = vadd.xlane.f32.xlu0 %v571
    %v573 = vpop.xlane.xlu0 %572
    %v574 = vsel %vm352, %v570, 0.0
    %575 = vadd.xlane.f32.xlu0 %v574
    %v576 = vpop.xlane.xlu0 %575
    %v577 = vrcp.pop %v573
    %v578 = vrcp.pop %v576
    %v579 = vmul.f32 %v568, %v577
    %v580 = vmul.f32 %v570, %v578
    %581 = vrot.lane.b32.xlu0 %v250, 56
    %v582 = vpop.permute.xlu0 %581
    %583 = vrot.lane.b32.xlu0 %v255, 56
    %v584 = vpop.permute.xlu0 %583
    %v588 = vsel %vm352, %v579, 0
    %v591 = vsel %vm352, %v580, 0
    %593 = vmatprep.subr.mxu0 0.0
    %594 = vmatpush1.msra.mxu0 %v582
    %595 = vmatprep.subr.mxu0 0.0
    %596 = vmatpush1.msra.mxu0 %v584
    %597 = vmatprep.subr.mxu0 0.0
    %598 = vmatpush1.msra.mxu0 0.0
    %599 = vmatprep.subr.mxu0 0.0
    %600 = vmatpush1.msra.mxu0 0.0
    %601 = vmatprep.subr.mxu0 0.0
    %602 = vmatpush1.msra.mxu0 0.0
    %603 = vmatprep.subr.mxu0 0.0
    %604 = vmatpush1.msra.mxu0 0.0
    %605 = vmatprep.subr.mxu0 0.0
    %606 = vmatpush1.msra.mxu0 0.0
    %607 = vmatprep.subr.mxu0 0.0
    %608 = vmatpush1.msra.mxu0 0.0
    %609 = vmatprep.subr.mxu0 0.0
    %610 = vmatpush1.msra.mxu0 0.0
    %611 = vmatprep.subr.mxu0 0.0
    %612 = vmatpush1.msra.mxu0 0.0
    %613 = vmatprep.subr.mxu0 0.0
    %614 = vmatpush1.msra.mxu0 0.0
    %615 = vmatprep.subr.mxu0 0.0
    %616 = vmatpush1.msra.mxu0 0.0
    %617 = vmatprep.subr.mxu0 0.0
    %618 = vmatpush1.msra.mxu0 0.0
    %619 = vmatprep.subr.mxu0 0.0
    %620 = vmatpush1.msra.mxu0 0.0
    %621 = vmatprep.subr.mxu0 0.0
    %622 = vmatpush1.msra.mxu0 0.0
    %623 = vmatprep.subr.mxu0 0.0
    %624 = vmatpush1.msra.mxu0 0.0
    %625 = vmatprep.subr.mxu0 0.0
    %626 = vmatpush1.msra.mxu0 0.0
    %627 = vmatprep.subr.mxu0 0.0
    %628 = vmatpush1.msra.mxu0 0.0
    %629 = vmatprep.subr.mxu0 0.0
    %630 = vmatpush1.msra.mxu0 0.0
    %631 = vmatprep.subr.mxu0 0.0
    %632 = vmatpush1.msra.mxu0 0.0
    %633 = vmatprep.subr.mxu0 0.0
    %634 = vmatpush1.msra.mxu0 0.0
    %635 = vmatprep.subr.mxu0 0.0
    %636 = vmatpush1.msra.mxu0 0.0
    %637 = vmatprep.subr.mxu0 0.0
    %638 = vmatpush1.msra.mxu0 0.0
    %639 = vmatprep.subr.mxu0 0.0
    %640 = vmatpush1.msra.mxu0 0.0
    %641 = vmatprep.subr.mxu0 0.0
    %642 = vmatpush1.msra.mxu0 0.0
    %643 = vmatprep.subr.mxu0 0.0
    %644 = vmatpush1.msra.mxu0 0.0
    %645 = vmatprep.subr.mxu0 0.0
    %646 = vmatpush1.msra.mxu0 0.0
    %647 = vmatprep.subr.mxu0 0.0
    %648 = vmatpush1.msra.mxu0 0.0
    %649 = vmatprep.subr.mxu0 0.0
    %650 = vmatpush1.msra.mxu0 0.0
    %651 = vmatprep.subr.mxu0 0.0
    %652 = vmatpush1.msra.mxu0 0.0
    %653 = vmatprep.subr.mxu0 0.0
    %654 = vmatpush1.msra.mxu0 0.0
    %655 = vmatprep.subr.mxu0 0.0
    %656 = vmatpush1.msra.mxu0 0.0
    %657 = vmatprep.mubr.f32.mxu0 0.0
    %658 = vmatmul.mubr.f32.gmra.mrb[0].mxu0 %v588
    %v659 = vpop.f32.mrb[0].mxu0
    %v660 = vadd.f32 0.0, %v659
    %v661 = vpop.f32.mrb[0].mxu0
    %662 = vmatprep.mubr.f32.mxu0 0.0
    %663 = vmatmul.mubr.f32.gmra.mrb[0].mxu0 %v591
    %v664 = vpop.f32.mrb[0].mxu0
    %v665 = vadd.f32 0.0, %v664
    %v666 = vpop.f32.mrb[0].mxu0
    %667 = vdwg.mxu0
    %670 = vrot.lane.b32.xlu0 %v660, 8
    %v671 = vpop.permute.xlu0 %670
    %672 = vrot.lane.b32.xlu0 %v665, 8
    %v673 = vpop.permute.xlu0 %672
    %vm676 = vcmask 130112
    %677 = vst.msk [vmem:[#allocation2] sm:$0xff] %vm676, %v671
    %678 = vst.msk [vmem:[#allocation2 + $0x8] sm:$0xff] %vm676, %v673
    %679 = vrot.lane.b32.xlu0 %v250, 112
    %v680 = vpop.permute.xlu0 %679
    %681 = vrot.lane.b32.xlu0 %v255, 112
    %v682 = vpop.permute.xlu0 %681
    %683 = vrot.lane.b32.xlu0 %v250, 80
    %v684 = vpop.permute.xlu0 %683
    %685 = vrot.lane.b32.xlu0 %v255, 80
    %v686 = vpop.permute.xlu0 %685
    %v687 = vsel %vm264, %v680, 0
    %v689 = vsel %vm264, %v682, 0
    %v691 = vsel %vm264, %v684, 0
    %v693 = vsel %vm264, %v686, 0
    %695 = vmatprep.subr.mxu0 0.0
    %696 = vmatpush1.xpose.msra.mxu0 %v691
    %697 = vmatprep.subr.mxu0 0.0
    %698 = vmatpush1.xpose.msra.mxu0 %v693
    %699 = vmatprep.subr.mxu0 0.0
    %700 = vmatpush1.xpose.msra.mxu0 0.0
    %701 = vmatprep.subr.mxu0 0.0
    %702 = vmatpush1.xpose.msra.mxu0 0.0
    %703 = vmatprep.subr.mxu0 0.0
    %704 = vmatpush1.xpose.msra.mxu0 0.0
    %705 = vmatprep.subr.mxu0 0.0
    %706 = vmatpush1.xpose.msra.mxu0 0.0
    %707 = vmatprep.subr.mxu0 0.0
    %708 = vmatpush1.xpose.msra.mxu0 0.0
    %709 = vmatprep.subr.mxu0 0.0
    %710 = vmatpush1.xpose.msra.mxu0 0.0
    %711 = vmatprep.subr.mxu0 0.0
    %712 = vmatpush1.xpose.msra.mxu0 0.0
    %713 = vmatprep.subr.mxu0 0.0
    %714 = vmatpush1.xpose.msra.mxu0 0.0
    %715 = vmatprep.subr.mxu0 0.0
    %716 = vmatpush1.xpose.msra.mxu0 0.0
    %717 = vmatprep.subr.mxu0 0.0
    %718 = vmatpush1.xpose.msra.mxu0 0.0
    %719 = vmatprep.subr.mxu0 0.0
    %720 = vmatpush1.xpose.msra.mxu0 0.0
    %721 = vmatprep.subr.mxu0 0.0
    %722 = vmatpush1.xpose.msra.mxu0 0.0
    %723 = vmatprep.subr.mxu0 0.0
    %724 = vmatpush1.xpose.msra.mxu0 0.0
    %725 = vmatprep.subr.mxu0 0.0
    %726 = vmatpush1.xpose.msra.mxu0 0.0
    %727 = vmatprep.subr.mxu0 0.0
    %728 = vmatpush1.xpose.msra.mxu0 0.0
    %729 = vmatprep.subr.mxu0 0.0
    %730 = vmatpush1.xpose.msra.mxu0 0.0
    %731 = vmatprep.subr.mxu0 0.0
    %732 = vmatpush1.xpose.msra.mxu0 0.0
    %733 = vmatprep.subr.mxu0 0.0
    %734 = vmatpush1.xpose.msra.mxu0 0.0
    %735 = vmatprep.subr.mxu0 0.0
    %736 = vmatpush1.xpose.msra.mxu0 0.0
    %737 = vmatprep.subr.mxu0 0.0
    %738 = vmatpush1.xpose.msra.mxu0 0.0
    %739 = vmatprep.subr.mxu0 0.0
    %740 = vmatpush1.xpose.msra.mxu0 0.0
    %741 = vmatprep.subr.mxu0 0.0
    %742 = vmatpush1.xpose.msra.mxu0 0.0
    %743 = vmatprep.subr.mxu0 0.0
    %744 = vmatpush1.xpose.msra.mxu0 0.0
    %745 = vmatprep.subr.mxu0 0.0
    %746 = vmatpush1.xpose.msra.mxu0 0.0
    %747 = vmatprep.subr.mxu0 0.0
    %748 = vmatpush1.xpose.msra.mxu0 0.0
    %749 = vmatprep.subr.mxu0 0.0
    %750 = vmatpush1.xpose.msra.mxu0 0.0
    %751 = vmatprep.subr.mxu0 0.0
    %752 = vmatpush1.xpose.msra.mxu0 0.0
    %753 = vmatprep.subr.mxu0 0.0
    %754 = vmatpush1.xpose.msra.mxu0 0.0
    %755 = vmatprep.subr.mxu0 0.0
    %756 = vmatpush1.xpose.msra.mxu0 0.0
    %757 = vmatprep.subr.mxu0 0.0
    %758 = vmatpush1.xpose.msra.mxu0 0.0
    %759 = vmatprep.mubr.f32.mxu0 0.0
    %760 = vmatmul.mubr.f32.gmra.mrb[0].mxu0 %v687
    %v761 = vpop.f32.mrb[0].mxu0
    %v762 = vadd.f32 0.0, %v761
    %v763 = vpop.f32.mrb[0].mxu0
    %764 = vmatprep.mubr.f32.mxu0 0.0
    %765 = vmatmul.mubr.f32.gmra.mrb[0].mxu0 %v689
    %v766 = vpop.f32.mrb[0].mxu0
    %v767 = vadd.f32 0.0, %v766
    %v768 = vpop.f32.mrb[0].mxu0
    %769 = vdwg.mxu0
    %v770 = vmul.f32 %v762, 0.35355338
    %v771 = vmul.f32 %v767, 0.35355338
    %v772 = vadd.f32 %v770, %v158
    %v773 = vadd.f32 %v771, %v159
    %v774 = vsel %vm352, %v772, -inf
    %775 = vmax.xlane.f32.xlu0 %v774
    %v776 = vpop.xlane.xlu0 %775
    %v777 = vsel %vm352, %v773, -inf
    %778 = vmax.xlane.f32.xlu0 %v777
    %v779 = vpop.xlane.xlu0 %778
    %v780 = vsub.f32 %v772, %v776
    %v781 = vsub.f32 %v773, %v779
    %v782 = vmul.f32 %v780, 1.442695
    %v783 = vpow.pop %v782
    %v784 = vmul.f32 %v781, 1.442695
    %v785 = vpow.pop %v784
    %v786 = vsel %vm352, %v783, 0.0
    %787 = vadd.xlane.f32.xlu0 %v786
    %v788 = vpop.xlane.xlu0 %787
    %v789 = vsel %vm352, %v785, 0.0
    %790 = vadd.xlane.f32.xlu0 %v789
    %v791 = vpop.xlane.xlu0 %790
    %v792 = vrcp.pop %v788
    %v793 = vrcp.pop %v791
    %v794 = vmul.f32 %v783, %v792
    %v795 = vmul.f32 %v785, %v793
    %796 = vrot.lane.b32.xlu0 %v250, 48
    %v797 = vpop.permute.xlu0 %796
    %798 = vrot.lane.b32.xlu0 %v255, 48
    %v799 = vpop.permute.xlu0 %798
    %v803 = vsel %vm352, %v794, 0
    %v806 = vsel %vm352, %v795, 0
    %808 = vmatprep.subr.mxu0 0.0
    %809 = vmatpush1.msra.mxu0 %v797
    %810 = vmatprep.subr.mxu0 0.0
    %811 = vmatpush1.msra.mxu0 %v799
    %812 = vmatprep.subr.mxu0 0.0
    %813 = vmatpush1.msra.mxu0 0.0
    %814 = vmatprep.subr.mxu0 0.0
    %815 = vmatpush1.msra.mxu0 0.0
    %816 = vmatprep.subr.mxu0 0.0
    %817 = vmatpush1.msra.mxu0 0.0
    %818 = vmatprep.subr.mxu0 0.0
    %819 = vmatpush1.msra.mxu0 0.0
    %820 = vmatprep.subr.mxu0 0.0
    %821 = vmatpush1.msra.mxu0 0.0
    %822 = vmatprep.subr.mxu0 0.0
    %823 = vmatpush1.msra.mxu0 0.0
    %824 = vmatprep.subr.mxu0 0.0
    %825 = vmatpush1.msra.mxu0 0.0
    %826 = vmatprep.subr.mxu0 0.0
    %827 = vmatpush1.msra.mxu0 0.0
    %828 = vmatprep.subr.mxu0 0.0
    %829 = vmatpush1.msra.mxu0 0.0
    %830 = vmatprep.subr.mxu0 0.0
    %831 = vmatpush1.msra.mxu0 0.0
    %832 = vmatprep.subr.mxu0 0.0
    %833 = vmatpush1.msra.mxu0 0.0
    %834 = vmatprep.subr.mxu0 0.0
    %835 = vmatpush1.msra.mxu0 0.0
    %836 = vmatprep.subr.mxu0 0.0
    %837 = vmatpush1.msra.mxu0 0.0
    %838 = vmatprep.subr.mxu0 0.0
    %839 = vmatpush1.msra.mxu0 0.0
    %840 = vmatprep.subr.mxu0 0.0
    %841 = vmatpush1.msra.mxu0 0.0
    %842 = vmatprep.subr.mxu0 0.0
    %843 = vmatpush1.msra.mxu0 0.0
    %844 = vmatprep.subr.mxu0 0.0
    %845 = vmatpush1.msra.mxu0 0.0
    %846 = vmatprep.subr.mxu0 0.0
    %847 = vmatpush1.msra.mxu0 0.0
    %848 = vmatprep.subr.mxu0 0.0
    %849 = vmatpush1.msra.mxu0 0.0
    %850 = vmatprep.subr.mxu0 0.0
    %851 = vmatpush1.msra.mxu0 0.0
    %852 = vmatprep.subr.mxu0 0.0
    %853 = vmatpush1.msra.mxu0 0.0
    %854 = vmatprep.subr.mxu0 0.0
    %855 = vmatpush1.msra.mxu0 0.0
    %856 = vmatprep.subr.mxu0 0.0
    %857 = vmatpush1.msra.mxu0 0.0
    %858 = vmatprep.subr.mxu0 0.0
    %859 = vmatpush1.msra.mxu0 0.0
    %860 = vmatprep.subr.mxu0 0.0
    %861 = vmatpush1.msra.mxu0 0.0
    %862 = vmatprep.subr.mxu0 0.0
    %863 = vmatpush1.msra.mxu0 0.0
    %864 = vmatprep.subr.mxu0 0.0
    %865 = vmatpush1.msra.mxu0 0.0
    %866 = vmatprep.subr.mxu0 0.0
    %867 = vmatpush1.msra.mxu0 0.0
    %868 = vmatprep.subr.mxu0 0.0
    %869 = vmatpush1.msra.mxu0 0.0
    %870 = vmatprep.subr.mxu0 0.0
    %871 = vmatpush1.msra.mxu0 0.0
    %872 = vmatprep.mubr.f32.mxu0 0.0
    %873 = vmatmul.mubr.f32.gmra.mrb[0].mxu0 %v803
    %v874 = vpop.f32.mrb[0].mxu0
    %v875 = vadd.f32 0.0, %v874
    %v876 = vpop.f32.mrb[0].mxu0
    %877 = vmatprep.mubr.f32.mxu0 0.0
    %878 = vmatmul.mubr.f32.gmra.mrb[0].mxu0 %v806
    %v879 = vpop.f32.mrb[0].mxu0
    %v880 = vadd.f32 0.0, %v879
    %v881 = vpop.f32.mrb[0].mxu0
    %882 = vdwg.mxu0
    %885 = vrot.lane.b32.xlu0 %v875, 16
    %v886 = vpop.permute.xlu0 %885
    %887 = vrot.lane.b32.xlu0 %v880, 16
    %v888 = vpop.permute.xlu0 %887
    %vm891 = vcmask 195712
    %892 = vst.msk [vmem:[#allocation2] sm:$0xff] %vm891, %v886
    %893 = vst.msk [vmem:[#allocation2 + $0x8] sm:$0xff] %vm891, %v888
    %894 = vrot.lane.b32.xlu0 %v250, 104
    %v895 = vpop.permute.xlu0 %894
    %896 = vrot.lane.b32.xlu0 %v255, 104
    %v897 = vpop.permute.xlu0 %896
    %898 = vrot.lane.b32.xlu0 %v250, 72
    %v899 = vpop.permute.xlu0 %898
    %900 = vrot.lane.b32.xlu0 %v255, 72
    %v901 = vpop.permute.xlu0 %900
    %v902 = vsel %vm264, %v895, 0
    %v904 = vsel %vm264, %v897, 0
    %v906 = vsel %vm264, %v899, 0
    %v908 = vsel %vm264, %v901, 0
    %910 = vmatprep.subr.mxu0 0.0
    %911 = vmatpush1.xpose.msra.mxu0 %v906
    %912 = vmatprep.subr.mxu0 0.0
    %913 = vmatpush1.xpose.msra.mxu0 %v908
    %914 = vmatprep.subr.mxu0 0.0
    %915 = vmatpush1.xpose.msra.mxu0 0.0
    %916 = vmatprep.subr.mxu0 0.0
    %917 = vmatpush1.xpose.msra.mxu0 0.0
    %918 = vmatprep.subr.mxu0 0.0
    %919 = vmatpush1.xpose.msra.mxu0 0.0
    %920 = vmatprep.subr.mxu0 0.0
    %921 = vmatpush1.xpose.msra.mxu0 0.0
    %922 = vmatprep.subr.mxu0 0.0
    %923 = vmatpush1.xpose.msra.mxu0 0.0
    %924 = vmatprep.subr.mxu0 0.0
    %925 = vmatpush1.xpose.msra.mxu0 0.0
    %926 = vmatprep.subr.mxu0 0.0
    %927 = vmatpush1.xpose.msra.mxu0 0.0
    %928 = vmatprep.subr.mxu0 0.0
    %929 = vmatpush1.xpose.msra.mxu0 0.0
    %930 = vmatprep.subr.mxu0 0.0
    %931 = vmatpush1.xpose.msra.mxu0 0.0
    %932 = vmatprep.subr.mxu0 0.0
    %933 = vmatpush1.xpose.msra.mxu0 0.0
    %934 = vmatprep.subr.mxu0 0.0
    %935 = vmatpush1.xpose.msra.mxu0 0.0
    %936 = vmatprep.subr.mxu0 0.0
    %937 = vmatpush1.xpose.msra.mxu0 0.0
    %938 = vmatprep.subr.mxu0 0.0
    %939 = vmatpush1.xpose.msra.mxu0 0.0
    %940 = vmatprep.subr.mxu0 0.0
    %941 = vmatpush1.xpose.msra.mxu0 0.0
    %942 = vmatprep.subr.mxu0 0.0
    %943 = vmatpush1.xpose.msra.mxu0 0.0
    %944 = vmatprep.subr.mxu0 0.0
    %945 = vmatpush1.xpose.msra.mxu0 0.0
    %946 = vmatprep.subr.mxu0 0.0
    %947 = vmatpush1.xpose.msra.mxu0 0.0
    %948 = vmatprep.subr.mxu0 0.0
    %949 = vmatpush1.xpose.msra.mxu0 0.0
    %950 = vmatprep.subr.mxu0 0.0
    %951 = vmatpush1.xpose.msra.mxu0 0.0
    %952 = vmatprep.subr.mxu0 0.0
    %953 = vmatpush1.xpose.msra.mxu0 0.0
    %954 = vmatprep.subr.mxu0 0.0
    %955 = vmatpush1.xpose.msra.mxu0 0.0
    %956 = vmatprep.subr.mxu0 0.0
    %957 = vmatpush1.xpose.msra.mxu0 0.0
    %958 = vmatprep.subr.mxu0 0.0
    %959 = vmatpush1.xpose.msra.mxu0 0.0
    %960 = vmatprep.subr.mxu0 0.0
    %961 = vmatpush1.xpose.msra.mxu0 0.0
    %962 = vmatprep.subr.mxu0 0.0
    %963 = vmatpush1.xpose.msra.mxu0 0.0
    %964 = vmatprep.subr.mxu0 0.0
    %965 = vmatpush1.xpose.msra.mxu0 0.0
    %966 = vmatprep.subr.mxu0 0.0
    %967 = vmatpush1.xpose.msra.mxu0 0.0
    %968 = vmatprep.subr.mxu0 0.0
    %969 = vmatpush1.xpose.msra.mxu0 0.0
    %970 = vmatprep.subr.mxu0 0.0
    %971 = vmatpush1.xpose.msra.mxu0 0.0
    %972 = vmatprep.subr.mxu0 0.0
    %973 = vmatpush1.xpose.msra.mxu0 0.0
    %974 = vmatprep.mubr.f32.mxu0 0.0
    %975 = vmatmul.mubr.f32.gmra.mrb[0].mxu0 %v902
    %v976 = vpop.f32.mrb[0].mxu0
    %v977 = vadd.f32 0.0, %v976
    %v978 = vpop.f32.mrb[0].mxu0
    %979 = vmatprep.mubr.f32.mxu0 0.0
    %980 = vmatmul.mubr.f32.gmra.mrb[0].mxu0 %v904
    %v981 = vpop.f32.mrb[0].mxu0
    %v982 = vadd.f32 0.0, %v981
    %v983 = vpop.f32.mrb[0].mxu0
    %984 = vdwg.mxu0
    %v985 = vmul.f32 %v977, 0.35355338
    %v986 = vmul.f32 %v982, 0.35355338
    %v987 = vadd.f32 %v985, %v158
    %v988 = vadd.f32 %v986, %v159
    %v989 = vsel %vm352, %v987, -inf
    %990 = vmax.xlane.f32.xlu0 %v989
    %v991 = vpop.xlane.xlu0 %990
    %v992 = vsel %vm352, %v988, -inf
    %993 = vmax.xlane.f32.xlu0 %v992
    %v994 = vpop.xlane.xlu0 %993
    %v995 = vsub.f32 %v987, %v991
    %v996 = vsub.f32 %v988, %v994
    %v997 = vmul.f32 %v995, 1.442695
    %v998 = vpow.pop %v997
    %v999 = vmul.f32 %v996, 1.442695
    %v1000 = vpow.pop %v999
    %v1001 = vsel %vm352, %v998, 0.0
    %1002 = vadd.xlane.f32.xlu0 %v1001
    %v1003 = vpop.xlane.xlu0 %1002
    %v1004 = vsel %vm352, %v1000, 0.0
    %1005 = vadd.xlane.f32.xlu0 %v1004
    %v1006 = vpop.xlane.xlu0 %1005
    %v1007 = vrcp.pop %v1003
    %v1008 = vrcp.pop %v1006
    %v1009 = vmul.f32 %v998, %v1007
    %v1010 = vmul.f32 %v1000, %v1008
    %1011 = vrot.lane.b32.xlu0 %v250, 40
    %v1012 = vpop.permute.xlu0 %1011
    %1013 = vrot.lane.b32.xlu0 %v255, 40
    %v1014 = vpop.permute.xlu0 %1013
    %v1018 = vsel %vm352, %v1009, 0
    %v1021 = vsel %vm352, %v1010, 0
    %1023 = vmatprep.subr.mxu0 0.0
    %1024 = vmatpush1.msra.mxu0 %v1012
    %1025 = vmatprep.subr.mxu0 0.0
    %1026 = vmatpush1.msra.mxu0 %v1014
    %1027 = vmatprep.subr.mxu0 0.0
    %1028 = vmatpush1.msra.mxu0 0.0
    %1029 = vmatprep.subr.mxu0 0.0
    %1030 = vmatpush1.msra.mxu0 0.0
    %1031 = vmatprep.subr.mxu0 0.0
    %1032 = vmatpush1.msra.mxu0 0.0
    %1033 = vmatprep.subr.mxu0 0.0
    %1034 = vmatpush1.msra.mxu0 0.0
    %1035 = vmatprep.subr.mxu0 0.0
    %1036 = vmatpush1.msra.mxu0 0.0
    %1037 = vmatprep.subr.mxu0 0.0
    %1038 = vmatpush1.msra.mxu0 0.0
    %1039 = vmatprep.subr.mxu0 0.0
    %1040 = vmatpush1.msra.mxu0 0.0
    %1041 = vmatprep.subr.mxu0 0.0
    %1042 = vmatpush1.msra.mxu0 0.0
    %1043 = vmatprep.subr.mxu0 0.0
    %1044 = vmatpush1.msra.mxu0 0.0
    %1045 = vmatprep.subr.mxu0 0.0
    %1046 = vmatpush1.msra.mxu0 0.0
    %1047 = vmatprep.subr.mxu0 0.0
    %1048 = vmatpush1.msra.mxu0 0.0
    %1049 = vmatprep.subr.mxu0 0.0
    %1050 = vmatpush1.msra.mxu0 0.0
    %1051 = vmatprep.subr.mxu0 0.0
    %1052 = vmatpush1.msra.mxu0 0.0
    %1053 = vmatprep.subr.mxu0 0.0
    %1054 = vmatpush1.msra.mxu0 0.0
    %1055 = vmatprep.subr.mxu0 0.0
    %1056 = vmatpush1.msra.mxu0 0.0
    %1057 = vmatprep.subr.mxu0 0.0
    %1058 = vmatpush1.msra.mxu0 0.0
    %1059 = vmatprep.subr.mxu0 0.0
    %1060 = vmatpush1.msra.mxu0 0.0
    %1061 = vmatprep.subr.mxu0 0.0
    %1062 = vmatpush1.msra.mxu0 0.0
    %1063 = vmatprep.subr.mxu0 0.0
    %1064 = vmatpush1.msra.mxu0 0.0
    %1065 = vmatprep.subr.mxu0 0.0
    %1066 = vmatpush1.msra.mxu0 0.0
    %1067 = vmatprep.subr.mxu0 0.0
    %1068 = vmatpush1.msra.mxu0 0.0
    %1069 = vmatprep.subr.mxu0 0.0
    %1070 = vmatpush1.msra.mxu0 0.0
    %1071 = vmatprep.subr.mxu0 0.0
    %1072 = vmatpush1.msra.mxu0 0.0
    %1073 = vmatprep.subr.mxu0 0.0
    %1074 = vmatpush1.msra.mxu0 0.0
    %1075 = vmatprep.subr.mxu0 0.0
    %1076 = vmatpush1.msra.mxu0 0.0
    %1077 = vmatprep.subr.mxu0 0.0
    %1078 = vmatpush1.msra.mxu0 0.0
    %1079 = vmatprep.subr.mxu0 0.0
    %1080 = vmatpush1.msra.mxu0 0.0
    %1081 = vmatprep.subr.mxu0 0.0
    %1082 = vmatpush1.msra.mxu0 0.0
    %1083 = vmatprep.subr.mxu0 0.0
    %1084 = vmatpush1.msra.mxu0 0.0
    %1085 = vmatprep.subr.mxu0 0.0
    %1086 = vmatpush1.msra.mxu0 0.0
    %1087 = vmatprep.mubr.f32.mxu0 0.0
    %1088 = vmatmul.mubr.f32.gmra.mrb[0].mxu0 %v1018
    %v1089 = vpop.f32.mrb[0].mxu0
    %v1090 = vadd.f32 0.0, %v1089
    %v1091 = vpop.f32.mrb[0].mxu0
    %1092 = vmatprep.mubr.f32.mxu0 0.0
    %1093 = vmatmul.mubr.f32.gmra.mrb[0].mxu0 %v1021
    %v1094 = vpop.f32.mrb[0].mxu0
    %v1095 = vadd.f32 0.0, %v1094
    %v1096 = vpop.f32.mrb[0].mxu0
    %1097 = vdwg.mxu0
    %1100 = vrot.lane.b32.xlu0 %v1090, 24
    %v1101 = vpop.permute.xlu0 %1100
    %1102 = vrot.lane.b32.xlu0 %v1095, 24
    %v1103 = vpop.permute.xlu0 %1102
    %vm1106 = vcmask 261312
    %1107 = vst.msk [vmem:[#allocation2] sm:$0xff] %vm1106, %v1101
    %1108 = vst.msk [vmem:[#allocation2 + $0x8] sm:$0xff] %vm1106, %v1103
    %v1109 = vld [vmem:[#allocation2] sm:$0xff]
    %v1110 = vld [vmem:[#allocation2 + $0x8] sm:$0xff]
    %v1112 = vlaneseq
    %v1113 = vshrl.u32 %v1112, 7
    %v1114 = vsub.s32 0, %v1113
    %v1115 = vrot.slane %v169, %v1114
    %v1118 = vsel %vm176, %v1109, 0
    %v1121 = vsel %vm176, %v1110, 0
    %1123 = vmatprep.subr.mxu0 0.0
    %1124 = vmatpush1.msra.mxu0 %v165
    %1125 = vmatprep.subr.mxu0 0.0
    %1126 = vmatpush1.msra.mxu0 %v166
    %1127 = vmatprep.subr.mxu0 0.0
    %1128 = vmatpush1.msra.mxu0 %v167
    %1129 = vmatprep.subr.mxu0 0.0
    %1130 = vmatpush1.msra.mxu0 %v168
    %1131 = vmatprep.subr.mxu0 0.0
    %1132 = vmatpush1.msra.mxu0 0.0
    %1133 = vmatprep.subr.mxu0 0.0
    %1134 = vmatpush1.msra.mxu0 0.0
    %1135 = vmatprep.subr.mxu0 0.0
    %1136 = vmatpush1.msra.mxu0 0.0
    %1137 = vmatprep.subr.mxu0 0.0
    %1138 = vmatpush1.msra.mxu0 0.0
    %1139 = vmatprep.subr.mxu0 0.0
    %1140 = vmatpush1.msra.mxu0 0.0
    %1141 = vmatprep.subr.mxu0 0.0
    %1142 = vmatpush1.msra.mxu0 0.0
    %1143 = vmatprep.subr.mxu0 0.0
    %1144 = vmatpush1.msra.mxu0 0.0
    %1145 = vmatprep.subr.mxu0 0.0
    %1146 = vmatpush1.msra.mxu0 0.0
    %1147 = vmatprep.subr.mxu0 0.0
    %1148 = vmatpush1.msra.mxu0 0.0
    %1149 = vmatprep.subr.mxu0 0.0
    %1150 = vmatpush1.msra.mxu0 0.0
    %1151 = vmatprep.subr.mxu0 0.0
    %1152 = vmatpush1.msra.mxu0 0.0
    %1153 = vmatprep.subr.mxu0 0.0
    %1154 = vmatpush1.msra.mxu0 0.0
    %1155 = vmatprep.subr.mxu0 0.0
    %1156 = vmatpush1.msra.mxu0 0.0
    %1157 = vmatprep.subr.mxu0 0.0
    %1158 = vmatpush1.msra.mxu0 0.0
    %1159 = vmatprep.subr.mxu0 0.0
    %1160 = vmatpush1.msra.mxu0 0.0
    %1161 = vmatprep.subr.mxu0 0.0
    %1162 = vmatpush1.msra.mxu0 0.0
    %1163 = vmatprep.subr.mxu0 0.0
    %1164 = vmatpush1.msra.mxu0 0.0
    %1165 = vmatprep.subr.mxu0 0.0
    %1166 = vmatpush1.msra.mxu0 0.0
    %1167 = vmatprep.subr.mxu0 0.0
    %1168 = vmatpush1.msra.mxu0 0.0
    %1169 = vmatprep.subr.mxu0 0.0
    %1170 = vmatpush1.msra.mxu0 0.0
    %1171 = vmatprep.subr.mxu0 0.0
    %1172 = vmatpush1.msra.mxu0 0.0
    %1173 = vmatprep.subr.mxu0 0.0
    %1174 = vmatpush1.msra.mxu0 0.0
    %1175 = vmatprep.subr.mxu0 0.0
    %1176 = vmatpush1.msra.mxu0 0.0
    %1177 = vmatprep.subr.mxu0 0.0
    %1178 = vmatpush1.msra.mxu0 0.0
    %1179 = vmatprep.subr.mxu0 0.0
    %1180 = vmatpush1.msra.mxu0 0.0
    %1181 = vmatprep.subr.mxu0 0.0
    %1182 = vmatpush1.msra.mxu0 0.0
    %1183 = vmatprep.subr.mxu0 0.0
    %1184 = vmatpush1.msra.mxu0 0.0
    %1185 = vmatprep.subr.mxu0 0.0
    %1186 = vmatpush1.msra.mxu0 0.0
    %1187 = vmatprep.mubr.f32.mxu0 0.0
    %1188 = vmatmul.mubr.f32.gmra.mrb[0].mxu0 %v1118
    %v1189 = vpop.f32.mrb[0].mxu0
    %v1190 = vadd.f32 %v1115, %v1189
    %v1191 = vpop.f32.mrb[0].mxu0
    %1192 = vmatprep.mubr.f32.mxu0 0.0
    %1193 = vmatmul.mubr.f32.gmra.mrb[0].mxu0 %v1121
    %v1194 = vpop.f32.mrb[0].mxu0
    %v1195 = vadd.f32 %v1115, %v1194
    %v1196 = vpop.f32.mrb[0].mxu0
    %1197 = vdwg.mxu0
    %v1198 = vld [vmem:[%s16] sm:$0x1]
    %v1199 = vld [vmem:[%s17] sm:$0x1]
    %v1200 = vadd.f32 %v154, %v1190
    %v1201 = vadd.f32 %v155, %v1195
    %v1202 = vsel %vm176, %v1200, 0.0
    %1203 = vadd.xlane.f32.xlu0 %v1202
    %v1204 = vpop.xlane.xlu0 %1203
    %v1205 = vsel %vm176, %v1201, 0.0
    %1206 = vadd.xlane.f32.xlu0 %v1205
    %v1207 = vpop.xlane.xlu0 %1206
    %v1208 = vrcp.pop 32.0
    %v1209 = vmul.f32 %v1204, %v1208
    %v1210 = vmul.f32 %v1207, %v1208
    %v1211 = vsub.f32 %v1200, %v1209
    %v1212 = vsub.f32 %v1201, %v1210
    %v1213 = vmul.f32 %v1211, %v1211
    %v1214 = vmul.f32 %v1212, %v1212
    %v1215 = vsel %vm176, %v1213, 0.0
    %1216 = vadd.xlane.f32.xlu0 %v1215
    %v1217 = vpop.xlane.xlu0 %1216
    %v1218 = vsel %vm176, %v1214, 0.0
    %1219 = vadd.xlane.f32.xlu0 %v1218
    %v1220 = vpop.xlane.xlu0 %1219
    %v1221 = vmul.f32 %v1217, 0.032258064
    %v1222 = vmul.f32 %v1220, 0.032258064
    %v1223 = vrsqrt.pop %v1221
    %v1224 = vmul.f32 %v1221, %v1223
    %vm1225 = vcmp.eq.f32.partialorder %v1221, inf
    %v1226 = vsel %vm1225, %v1221, %v1224
    %vm1227 = vcmp.eq.f32.partialorder %v1221, 0.0
    %v1228 = vand.u32 %v1221, 2147483648
    %v1229 = vsel %vm1227, %v1228, %v1226
    %v1230 = vrsqrt.pop %v1222
    %v1231 = vmul.f32 %v1222, %v1230
    %vm1232 = vcmp.eq.f32.partialorder %v1222, inf
    %v1233 = vsel %vm1232, %v1222, %v1231
    %vm1234 = vcmp.eq.f32.partialorder %v1222, 0.0
    %v1235 = vand.u32 %v1222, 2147483648
    %v1236 = vsel %vm1234, %v1235, %v1233
    %v1238 = vlaneseq
    %v1239 = vshrl.u32 %v1238, 7
    %v1240 = vsub.s32 0, %v1239
    %v1241 = vrot.slane %v1198, %v1240
    %v1243 = vmul.f32 %v1241, %v1211
    %v1244 = vmul.f32 %v1241, %v1212
    %v1245 = vadd.f32 %v1229, 1e-06
    %v1246 = vadd.f32 %v1236, 1e-06
    %v1247 = vrcp.pop %v1245
    %v1248 = vmul.f32 %v1243, %v1247
    %v1249 = vrcp.pop %v1246
    %v1250 = vmul.f32 %v1244, %v1249
    %v1252 = vlaneseq
    %v1253 = vshrl.u32 %v1252, 7
    %v1254 = vsub.s32 0, %v1253
    %v1255 = vrot.slane %v1199, %v1254
    %v1257 = vadd.f32 %v1248, %v1255
    %v1258 = vadd.f32 %v1250, %v1255
    %v1259 = vld [vmem:[#allocation9] sm:$0xff]
    %v1260 = vld [vmem:[#allocation9 + $0x8] sm:$0xff]
    %v1261 = vld [vmem:[%s8] sm:$0xff]
    %v1262 = vld [vmem:[%s8 + $0x8] sm:$0xff]
    %v1263 = vld [vmem:[%s8 + $0x10] sm:$0xff]
    %v1264 = vld [vmem:[%s8 + $0x18] sm:$0xff]
    %v1265 = vld [vmem:[%s9] sm:$0x1]
    %v1266 = vld [vmem:[#allocation11] sm:$0xff]
    %v1267 = vld [vmem:[#allocation11 + $0x8] sm:$0xff]
    %v1268 = vld [vmem:[#allocation11 + $0x10] sm:$0xff]
    %v1269 = vld [vmem:[#allocation11 + $0x18] sm:$0xff]
    %v1270 = vld [vmem:[%s11] sm:$0x1]
    %v1272 = vlaneseq
    %v1273 = vshrl.u32 %v1272, 7
    %v1274 = vsub.s32 0, %v1273
    %v1275 = vrot.slane %v1265, %v1274
    %v1278 = vsel %vm176, %v1257, 0
    %v1281 = vsel %vm176, %v1258, 0
    %1283 = vmatprep.subr.mxu0 0.0
    %1284 = vmatpush1.msra.mxu0 %v1261
    %1285 = vmatprep.subr.mxu0 0.0
    %1286 = vmatpush1.msra.mxu0 %v1262
    %1287 = vmatprep.subr.mxu0 0.0
    %1288 = vmatpush1.msra.mxu0 %v1263
    %1289 = vmatprep.subr.mxu0 0.0
    %1290 = vmatpush1.msra.mxu0 %v1264
    %1291 = vmatprep.subr.mxu0 0.0
    %1292 = vmatpush1.msra.mxu0 0.0
    %1293 = vmatprep.subr.mxu0 0.0
    %1294 = vmatpush1.msra.mxu0 0.0
    %1295 = vmatprep.subr.mxu0 0.0
    %1296 = vmatpush1.msra.mxu0 0.0
    %1297 = vmatprep.subr.mxu0 0.0
    %1298 = vmatpush1.msra.mxu0 0.0
    %1299 = vmatprep.subr.mxu0 0.0
    %1300 = vmatpush1.msra.mxu0 0.0
    %1301 = vmatprep.subr.mxu0 0.0
    %1302 = vmatpush1.msra.mxu0 0.0
    %1303 = vmatprep.subr.mxu0 0.0
    %1304 = vmatpush1.msra.mxu0 0.0
    %1305 = vmatprep.subr.mxu0 0.0
    %1306 = vmatpush1.msra.mxu0 0.0
    %1307 = vmatprep.subr.mxu0 0.0
    %1308 = vmatpush1.msra.mxu0 0.0
    %1309 = vmatprep.subr.mxu0 0.0
    %1310 = vmatpush1.msra.mxu0 0.0
    %1311 = vmatprep.subr.mxu0 0.0
    %1312 = vmatpush1.msra.mxu0 0.0
    %1313 = vmatprep.subr.mxu0 0.0
    %1314 = vmatpush1.msra.mxu0 0.0
    %1315 = vmatprep.subr.mxu0 0.0
    %1316 = vmatpush1.msra.mxu0 0.0
    %1317 = vmatprep.subr.mxu0 0.0
    %1318 = vmatpush1.msra.mxu0 0.0
    %1319 = vmatprep.subr.mxu0 0.0
    %1320 = vmatpush1.msra.mxu0 0.0
    %1321 = vmatprep.subr.mxu0 0.0
    %1322 = vmatpush1.msra.mxu0 0.0
    %1323 = vmatprep.subr.mxu0 0.0
    %1324 = vmatpush1.msra.mxu0 0.0
    %1325 = vmatprep.subr.mxu0 0.0
    %1326 = vmatpush1.msra.mxu0 0.0
    %1327 = vmatprep.subr.mxu0 0.0
    %1328 = vmatpush1.msra.mxu0 0.0
    %1329 = vmatprep.subr.mxu0 0.0
    %1330 = vmatpush1.msra.mxu0 0.0
    %1331 = vmatprep.subr.mxu0 0.0
    %1332 = vmatpush1.msra.mxu0 0.0
    %1333 = vmatprep.subr.mxu0 0.0
    %1334 = vmatpush1.msra.mxu0 0.0
    %1335 = vmatprep.subr.mxu0 0.0
    %1336 = vmatpush1.msra.mxu0 0.0
    %1337 = vmatprep.subr.mxu0 0.0
    %1338 = vmatpush1.msra.mxu0 0.0
    %1339 = vmatprep.subr.mxu0 0.0
    %1340 = vmatpush1.msra.mxu0 0.0
    %1341 = vmatprep.subr.mxu0 0.0
    %1342 = vmatpush1.msra.mxu0 0.0
    %1343 = vmatprep.subr.mxu0 0.0
    %1344 = vmatpush1.msra.mxu0 0.0
    %1345 = vmatprep.subr.mxu0 0.0
    %1346 = vmatpush1.msra.mxu0 0.0
    %1347 = vmatprep.mubr.f32.mxu0 0.0
    %1348 = vmatmul.mubr.f32.gmra.mrb[0].mxu0 %v1278
    %v1349 = vpop.f32.mrb[0].mxu0
    %v1350 = vadd.f32 %v1275, %v1349
    %v1351 = vpop.f32.mrb[0].mxu0
    %1352 = vmatprep.mubr.f32.mxu0 0.0
    %1353 = vmatmul.mubr.f32.gmra.mrb[0].mxu0 %v1281
    %v1354 = vpop.f32.mrb[0].mxu0
    %v1355 = vadd.f32 %v1275, %v1354
    %v1356 = vpop.f32.mrb[0].mxu0
    %1357 = vdwg.mxu0
    %1362 = vrot.lane.b32.xlu0 %v1261, 96
    %v1363 = vpop.permute.xlu0 %1362
    %1364 = vrot.lane.b32.xlu0 %v1262, 96
    %v1365 = vpop.permute.xlu0 %1364
    %1366 = vrot.lane.b32.xlu0 %v1263, 96
    %v1367 = vpop.permute.xlu0 %1366
    %1368 = vrot.lane.b32.xlu0 %v1264, 96
    %v1369 = vpop.permute.xlu0 %1368
    %1374 = vrot.lane.b32.xlu0 %v1275, 96
    %v1375 = vpop.permute.xlu0 %1374
    %v1378 = vsel %vm176, %v156, 0
    %v1381 = vsel %vm176, %v157, 0
    %1383 = vmatprep.subr.mxu0 0.0
    %1384 = vmatpush1.msra.mxu0 %v1363
    %1385 = vmatprep.subr.mxu0 0.0
    %1386 = vmatpush1.msra.mxu0 %v1365
    %1387 = vmatprep.subr.mxu0 0.0
    %1388 = vmatpush1.msra.mxu0 %v1367
    %1389 = vmatprep.subr.mxu0 0.0
    %1390 = vmatpush1.msra.mxu0 %v1369
    %1391 = vmatprep.subr.mxu0 0.0
    %1392 = vmatpush1.msra.mxu0 0.0
    %1393 = vmatprep.subr.mxu0 0.0
    %1394 = vmatpush1.msra.mxu0 0.0
    %1395 = vmatprep.subr.mxu0 0.0
    %1396 = vmatpush1.msra.mxu0 0.0
    %1397 = vmatprep.subr.mxu0 0.0
    %1398 = vmatpush1.msra.mxu0 0.0
    %1399 = vmatprep.subr.mxu0 0.0
    %1400 = vmatpush1.msra.mxu0 0.0
    %1401 = vmatprep.subr.mxu0 0.0
    %1402 = vmatpush1.msra.mxu0 0.0
    %1403 = vmatprep.subr.mxu0 0.0
    %1404 = vmatpush1.msra.mxu0 0.0
    %1405 = vmatprep.subr.mxu0 0.0
    %1406 = vmatpush1.msra.mxu0 0.0
    %1407 = vmatprep.subr.mxu0 0.0
    %1408 = vmatpush1.msra.mxu0 0.0
    %1409 = vmatprep.subr.mxu0 0.0
    %1410 = vmatpush1.msra.mxu0 0.0
    %1411 = vmatprep.subr.mxu0 0.0
    %1412 = vmatpush1.msra.mxu0 0.0
    %1413 = vmatprep.subr.mxu0 0.0
    %1414 = vmatpush1.msra.mxu0 0.0
    %1415 = vmatprep.subr.mxu0 0.0
    %1416 = vmatpush1.msra.mxu0 0.0
    %1417 = vmatprep.subr.mxu0 0.0
    %1418 = vmatpush1.msra.mxu0 0.0
    %1419 = vmatprep.subr.mxu0 0.0
    %1420 = vmatpush1.msra.mxu0 0.0
    %1421 = vmatprep.subr.mxu0 0.0
    %1422 = vmatpush1.msra.mxu0 0.0
    %1423 = vmatprep.subr.mxu0 0.0
    %1424 = vmatpush1.msra.mxu0 0.0
    %1425 = vmatprep.subr.mxu0 0.0
    %1426 = vmatpush1.msra.mxu0 0.0
    %1427 = vmatprep.subr.mxu0 0.0
    %1428 = vmatpush1.msra.mxu0 0.0
    %1429 = vmatprep.subr.mxu0 0.0
    %1430 = vmatpush1.msra.mxu0 0.0
    %1431 = vmatprep.subr.mxu0 0.0
    %1432 = vmatpush1.msra.mxu0 0.0
    %1433 = vmatprep.subr.mxu0 0.0
    %1434 = vmatpush1.msra.mxu0 0.0
    %1435 = vmatprep.subr.mxu0 0.0
    %1436 = vmatpush1.msra.mxu0 0.0
    %1437 = vmatprep.subr.mxu0 0.0
    %1438 = vmatpush1.msra.mxu0 0.0
    %1439 = vmatprep.subr.mxu0 0.0
    %1440 = vmatpush1.msra.mxu0 0.0
    %1441 = vmatprep.subr.mxu0 0.0
    %1442 = vmatpush1.msra.mxu0 0.0
    %1443 = vmatprep.subr.mxu0 0.0
    %1444 = vmatpush1.msra.mxu0 0.0
    %1445 = vmatprep.subr.mxu0 0.0
    %1446 = vmatpush1.msra.mxu0 0.0
    %1447 = vmatprep.mubr.f32.mxu0 0.0
    %1448 = vmatmul.mubr.f32.gmra.mrb[0].mxu0 %v1378
    %v1449 = vpop.f32.mrb[0].mxu0
    %v1450 = vadd.f32 %v1375, %v1449
    %v1451 = vpop.f32.mrb[0].mxu0
    %1452 = vmatprep.mubr.f32.mxu0 0.0
    %1453 = vmatmul.mubr.f32.gmra.mrb[0].mxu0 %v1381
    %v1454 = vpop.f32.mrb[0].mxu0
    %v1455 = vadd.f32 %v1375, %v1454
    %v1456 = vpop.f32.mrb[0].mxu0
    %1457 = vdwg.mxu0
    %v1459 = vsel %vm264, %v1350, 0
    %v1462 = vsel %vm264, %v1355, 0
    %v1465 = vsel %vm264, %v1450, 0
    %v1468 = vsel %vm264, %v1455, 0
    %1470 = vmatprep.subr.mxu0 0.0
    %1471 = vmatpush1.xpose.msra.mxu0 %v1465
    %1472 = vmatprep.subr.mxu0 0.0
    %1473 = vmatpush1.xpose.msra.mxu0 %v1468
    %1474 = vmatprep.subr.mxu0 0.0
    %1475 = vmatpush1.xpose.msra.mxu0 0.0
    %1476 = vmatprep.subr.mxu0 0.0
    %1477 = vmatpush1.xpose.msra.mxu0 0.0
    %1478 = vmatprep.subr.mxu0 0.0
    %1479 = vmatpush1.xpose.msra.mxu0 0.0
    %1480 = vmatprep.subr.mxu0 0.0
    %1481 = vmatpush1.xpose.msra.mxu0 0.0
    %1482 = vmatprep.subr.mxu0 0.0
    %1483 = vmatpush1.xpose.msra.mxu0 0.0
    %1484 = vmatprep.subr.mxu0 0.0
    %1485 = vmatpush1.xpose.msra.mxu0 0.0
    %1486 = vmatprep.subr.mxu0 0.0
    %1487 = vmatpush1.xpose.msra.mxu0 0.0
    %1488 = vmatprep.subr.mxu0 0.0
    %1489 = vmatpush1.xpose.msra.mxu0 0.0
    %1490 = vmatprep.subr.mxu0 0.0
    %1491 = vmatpush1.xpose.msra.mxu0 0.0
    %1492 = vmatprep.subr.mxu0 0.0
    %1493 = vmatpush1.xpose.msra.mxu0 0.0
    %1494 = vmatprep.subr.mxu0 0.0
    %1495 = vmatpush1.xpose.msra.mxu0 0.0
    %1496 = vmatprep.subr.mxu0 0.0
    %1497 = vmatpush1.xpose.msra.mxu0 0.0
    %1498 = vmatprep.subr.mxu0 0.0
    %1499 = vmatpush1.xpose.msra.mxu0 0.0
    %1500 = vmatprep.subr.mxu0 0.0
    %1501 = vmatpush1.xpose.msra.mxu0 0.0
    %1502 = vmatprep.subr.mxu0 0.0
    %1503 = vmatpush1.xpose.msra.mxu0 0.0
    %1504 = vmatprep.subr.mxu0 0.0
    %1505 = vmatpush1.xpose.msra.mxu0 0.0
    %1506 = vmatprep.subr.mxu0 0.0
    %1507 = vmatpush1.xpose.msra.mxu0 0.0
    %1508 = vmatprep.subr.mxu0 0.0
    %1509 = vmatpush1.xpose.msra.mxu0 0.0
    %1510 = vmatprep.subr.mxu0 0.0
    %1511 = vmatpush1.xpose.msra.mxu0 0.0
    %1512 = vmatprep.subr.mxu0 0.0
    %1513 = vmatpush1.xpose.msra.mxu0 0.0
    %1514 = vmatprep.subr.mxu0 0.0
    %1515 = vmatpush1.xpose.msra.mxu0 0.0
    %1516 = vmatprep.subr.mxu0 0.0
    %1517 = vmatpush1.xpose.msra.mxu0 0.0
    %1518 = vmatprep.subr.mxu0 0.0
    %1519 = vmatpush1.xpose.msra.mxu0 0.0
    %1520 = vmatprep.subr.mxu0 0.0
    %1521 = vmatpush1.xpose.msra.mxu0 0.0
    %1522 = vmatprep.subr.mxu0 0.0
    %1523 = vmatpush1.xpose.msra.mxu0 0.0
    %1524 = vmatprep.subr.mxu0 0.0
    %1525 = vmatpush1.xpose.msra.mxu0 0.0
    %1526 = vmatprep.subr.mxu0 0.0
    %1527 = vmatpush1.xpose.msra.mxu0 0.0
    %1528 = vmatprep.subr.mxu0 0.0
    %1529 = vmatpush1.xpose.msra.mxu0 0.0
    %1530 = vmatprep.subr.mxu0 0.0
    %1531 = vmatpush1.xpose.msra.mxu0 0.0
    %1532 = vmatprep.subr.mxu0 0.0
    %1533 = vmatpush1.xpose.msra.mxu0 0.0
    %1534 = vmatprep.mubr.f32.mxu0 0.0
    %1535 = vmatmul.mubr.f32.gmra.mrb[0].mxu0 %v1459
    %v1536 = vpop.f32.mrb[0].mxu0
    %v1537 = vadd.f32 0.0, %v1536
    %v1538 = vpop.f32.mrb[0].mxu0
    %1539 = vmatprep.mubr.f32.mxu0 0.0
    %1540 = vmatmul.mubr.f32.gmra.mrb[0].mxu0 %v1462
    %v1541 = vpop.f32.mrb[0].mxu0
    %v1542 = vadd.f32 0.0, %v1541
    %v1543 = vpop.f32.mrb[0].mxu0
    %1544 = vdwg.mxu0
    %v1545 = vmul.f32 %v1537, 0.35355338
    %v1546 = vmul.f32 %v1542, 0.35355338
    %v1547 = vadd.f32 %v1545, %v1259
    %v1548 = vadd.f32 %v1546, %v1260
    %v1549 = vsel %vm352, %v1547, -inf
    %1550 = vmax.xlane.f32.xlu0 %v1549
    %v1551 = vpop.xlane.xlu0 %1550
    %v1552 = vsel %vm352, %v1548, -inf
    %1553 = vmax.xlane.f32.xlu0 %v1552
    %v1554 = vpop.xlane.xlu0 %1553
    %v1555 = vsub.f32 %v1547, %v1551
    %v1556 = vsub.f32 %v1548, %v1554
    %v1557 = vmul.f32 %v1555, 1.442695
    %v1558 = vpow.pop %v1557
    %v1559 = vmul.f32 %v1556, 1.442695
    %v1560 = vpow.pop %v1559
    %v1561 = vsel %vm352, %v1558, 0.0
    %1562 = vadd.xlane.f32.xlu0 %v1561
    %v1563 = vpop.xlane.xlu0 %1562
    %v1564 = vsel %vm352, %v1560, 0.0
    %1565 = vadd.xlane.f32.xlu0 %v1564
    %v1566 = vpop.xlane.xlu0 %1565
    %v1567 = vrcp.pop %v1563
    %v1568 = vrcp.pop %v1566
    %v1569 = vmul.f32 %v1558, %v1567
    %v1570 = vmul.f32 %v1560, %v1568
    %1571 = vrot.lane.b32.xlu0 %v1450, 96
    %v1572 = vpop.permute.xlu0 %1571
    %1573 = vrot.lane.b32.xlu0 %v1455, 96
    %v1574 = vpop.permute.xlu0 %1573
    %v1578 = vsel %vm352, %v1569, 0
    %v1581 = vsel %vm352, %v1570, 0
    %1583 = vmatprep.subr.mxu0 0.0
    %1584 = vmatpush1.msra.mxu0 %v1572
    %1585 = vmatprep.subr.mxu0 0.0
    %1586 = vmatpush1.msra.mxu0 %v1574
    %1587 = vmatprep.subr.mxu0 0.0
    %1588 = vmatpush1.msra.mxu0 0.0
    %1589 = vmatprep.subr.mxu0 0.0
    %1590 = vmatpush1.msra.mxu0 0.0
    %1591 = vmatprep.subr.mxu0 0.0
    %1592 = vmatpush1.msra.mxu0 0.0
    %1593 = vmatprep.subr.mxu0 0.0
    %1594 = vmatpush1.msra.mxu0 0.0
    %1595 = vmatprep.subr.mxu0 0.0
    %1596 = vmatpush1.msra.mxu0 0.0
    %1597 = vmatprep.subr.mxu0 0.0
    %1598 = vmatpush1.msra.mxu0 0.0
    %1599 = vmatprep.subr.mxu0 0.0
    %1600 = vmatpush1.msra.mxu0 0.0
    %1601 = vmatprep.subr.mxu0 0.0
    %1602 = vmatpush1.msra.mxu0 0.0
    %1603 = vmatprep.subr.mxu0 0.0
    %1604 = vmatpush1.msra.mxu0 0.0
    %1605 = vmatprep.subr.mxu0 0.0
    %1606 = vmatpush1.msra.mxu0 0.0
    %1607 = vmatprep.subr.mxu0 0.0
    %1608 = vmatpush1.msra.mxu0 0.0
    %1609 = vmatprep.subr.mxu0 0.0
    %1610 = vmatpush1.msra.mxu0 0.0
    %1611 = vmatprep.subr.mxu0 0.0
    %1612 = vmatpush1.msra.mxu0 0.0
    %1613 = vmatprep.subr.mxu0 0.0
    %1614 = vmatpush1.msra.mxu0 0.0
    %1615 = vmatprep.subr.mxu0 0.0
    %1616 = vmatpush1.msra.mxu0 0.0
    %1617 = vmatprep.subr.mxu0 0.0
    %1618 = vmatpush1.msra.mxu0 0.0
    %1619 = vmatprep.subr.mxu0 0.0
    %1620 = vmatpush1.msra.mxu0 0.0
    %1621 = vmatprep.subr.mxu0 0.0
    %1622 = vmatpush1.msra.mxu0 0.0
    %1623 = vmatprep.subr.mxu0 0.0
    %1624 = vmatpush1.msra.mxu0 0.0
    %1625 = vmatprep.subr.mxu0 0.0
    %1626 = vmatpush1.msra.mxu0 0.0
    %1627 = vmatprep.subr.mxu0 0.0
    %1628 = vmatpush1.msra.mxu0 0.0
    %1629 = vmatprep.subr.mxu0 0.0
    %1630 = vmatpush1.msra.mxu0 0.0
    %1631 = vmatprep.subr.mxu0 0.0
    %1632 = vmatpush1.msra.mxu0 0.0
    %1633 = vmatprep.subr.mxu0 0.0
    %1634 = vmatpush1.msra.mxu0 0.0
    %1635 = vmatprep.subr.mxu0 0.0
    %1636 = vmatpush1.msra.mxu0 0.0
    %1637 = vmatprep.subr.mxu0 0.0
    %1638 = vmatpush1.msra.mxu0 0.0
    %1639 = vmatprep.subr.mxu0 0.0
    %1640 = vmatpush1.msra.mxu0 0.0
    %1641 = vmatprep.subr.mxu0 0.0
    %1642 = vmatpush1.msra.mxu0 0.0
    %1643 = vmatprep.subr.mxu0 0.0
    %1644 = vmatpush1.msra.mxu0 0.0
    %1645 = vmatprep.subr.mxu0 0.0
    %1646 = vmatpush1.msra.mxu0 0.0
    %1647 = vmatprep.mubr.f32.mxu0 0.0
    %1648 = vmatmul.mubr.f32.gmra.mrb[0].mxu0 %v1578
    %v1649 = vpop.f32.mrb[0].mxu0
    %v1650 = vadd.f32 0.0, %v1649
    %v1651 = vpop.f32.mrb[0].mxu0
    %1652 = vmatprep.mubr.f32.mxu0 0.0
    %1653 = vmatmul.mubr.f32.gmra.mrb[0].mxu0 %v1581
    %v1654 = vpop.f32.mrb[0].mxu0
    %v1655 = vadd.f32 0.0, %v1654
    %v1656 = vpop.f32.mrb[0].mxu0
    %1657 = vdwg.mxu0
    %1658 = vst.msk [vmem:[#allocation2] sm:$0xff] %vm264, %v1650
    %1659 = vst.msk [vmem:[#allocation2 + $0x8] sm:$0xff] %vm264, %v1655
    %1660 = vrot.lane.b32.xlu0 %v1350, 120
    %v1661 = vpop.permute.xlu0 %1660
    %1662 = vrot.lane.b32.xlu0 %v1355, 120
    %v1663 = vpop.permute.xlu0 %1662
    %1664 = vrot.lane.b32.xlu0 %v1450, 120
    %v1665 = vpop.permute.xlu0 %1664
    %1666 = vrot.lane.b32.xlu0 %v1455, 120
    %v1667 = vpop.permute.xlu0 %1666
    %v1668 = vsel %vm264, %v1661, 0
    %v1670 = vsel %vm264, %v1663, 0
    %v1672 = vsel %vm264, %v1665, 0
    %v1674 = vsel %vm264, %v1667, 0
    %1676 = vmatprep.subr.mxu0 0.0
    %1677 = vmatpush1.xpose.msra.mxu0 %v1672
    %1678 = vmatprep.subr.mxu0 0.0
    %1679 = vmatpush1.xpose.msra.mxu0 %v1674
    %1680 = vmatprep.subr.mxu0 0.0
    %1681 = vmatpush1.xpose.msra.mxu0 0.0
    %1682 = vmatprep.subr.mxu0 0.0
    %1683 = vmatpush1.xpose.msra.mxu0 0.0
    %1684 = vmatprep.subr.mxu0 0.0
    %1685 = vmatpush1.xpose.msra.mxu0 0.0
    %1686 = vmatprep.subr.mxu0 0.0
    %1687 = vmatpush1.xpose.msra.mxu0 0.0
    %1688 = vmatprep.subr.mxu0 0.0
    %1689 = vmatpush1.xpose.msra.mxu0 0.0
    %1690 = vmatprep.subr.mxu0 0.0
    %1691 = vmatpush1.xpose.msra.mxu0 0.0
    %1692 = vmatprep.subr.mxu0 0.0
    %1693 = vmatpush1.xpose.msra.mxu0 0.0
    %1694 = vmatprep.subr.mxu0 0.0
    %1695 = vmatpush1.xpose.msra.mxu0 0.0
    %1696 = vmatprep.subr.mxu0 0.0
    %1697 = vmatpush1.xpose.msra.mxu0 0.0
    %1698 = vmatprep.subr.mxu0 0.0
    %1699 = vmatpush1.xpose.msra.mxu0 0.0
    %1700 = vmatprep.subr.mxu0 0.0
    %1701 = vmatpush1.xpose.msra.mxu0 0.0
    %1702 = vmatprep.subr.mxu0 0.0
    %1703 = vmatpush1.xpose.msra.mxu0 0.0
    %1704 = vmatprep.subr.mxu0 0.0
    %1705 = vmatpush1.xpose.msra.mxu0 0.0
    %1706 = vmatprep.subr.mxu0 0.0
    %1707 = vmatpush1.xpose.msra.mxu0 0.0
    %1708 = vmatprep.subr.mxu0 0.0
    %1709 = vmatpush1.xpose.msra.mxu0 0.0
    %1710 = vmatprep.subr.mxu0 0.0
    %1711 = vmatpush1.xpose.msra.mxu0 0.0
    %1712 = vmatprep.subr.mxu0 0.0
    %1713 = vmatpush1.xpose.msra.mxu0 0.0
    %1714 = vmatprep.subr.mxu0 0.0
    %1715 = vmatpush1.xpose.msra.mxu0 0.0
    %1716 = vmatprep.subr.mxu0 0.0
    %1717 = vmatpush1.xpose.msra.mxu0 0.0
    %1718 = vmatprep.subr.mxu0 0.0
    %1719 = vmatpush1.xpose.msra.mxu0 0.0
    %1720 = vmatprep.subr.mxu0 0.0
    %1721 = vmatpush1.xpose.msra.mxu0 0.0
    %1722 = vmatprep.subr.mxu0 0.0
    %1723 = vmatpush1.xpose.msra.mxu0 0.0
    %1724 = vmatprep.subr.mxu0 0.0
    %1725 = vmatpush1.xpose.msra.mxu0 0.0
    %1726 = vmatprep.subr.mxu0 0.0
    %1727 = vmatpush1.xpose.msra.mxu0 0.0
    %1728 = vmatprep.subr.mxu0 0.0
    %1729 = vmatpush1.xpose.msra.mxu0 0.0
    %1730 = vmatprep.subr.mxu0 0.0
    %1731 = vmatpush1.xpose.msra.mxu0 0.0
    %1732 = vmatprep.subr.mxu0 0.0
    %1733 = vmatpush1.xpose.msra.mxu0 0.0
    %1734 = vmatprep.subr.mxu0 0.0
    %1735 = vmatpush1.xpose.msra.mxu0 0.0
    %1736 = vmatprep.subr.mxu0 0.0
    %1737 = vmatpush1.xpose.msra.mxu0 0.0
    %1738 = vmatprep.subr.mxu0 0.0
    %1739 = vmatpush1.xpose.msra.mxu0 0.0
    %1740 = vmatprep.mubr.f32.mxu0 0.0
    %1741 = vmatmul.mubr.f32.gmra.mrb[0].mxu0 %v1668
    %v1742 = vpop.f32.mrb[0].mxu0
    %v1743 = vadd.f32 0.0, %v1742
    %v1744 = vpop.f32.mrb[0].mxu0
    %1745 = vmatprep.mubr.f32.mxu0 0.0
    %1746 = vmatmul.mubr.f32.gmra.mrb[0].mxu0 %v1670
    %v1747 = vpop.f32.mrb[0].mxu0
    %v1748 = vadd.f32 0.0, %v1747
    %v1749 = vpop.f32.mrb[0].mxu0
    %1750 = vdwg.mxu0
    %v1751 = vmul.f32 %v1743, 0.35355338
    %v1752 = vmul.f32 %v1748, 0.35355338
    %v1753 = vadd.f32 %v1751, %v1259
    %v1754 = vadd.f32 %v1752, %v1260
    %v1755 = vsel %vm352, %v1753, -inf
    %1756 = vmax.xlane.f32.xlu0 %v1755
    %v1757 = vpop.xlane.xlu0 %1756
    %v1758 = vsel %vm352, %v1754, -inf
    %1759 = vmax.xlane.f32.xlu0 %v1758
    %v1760 = vpop.xlane.xlu0 %1759
    %v1761 = vsub.f32 %v1753, %v1757
    %v1762 = vsub.f32 %v1754, %v1760
    %v1763 = vmul.f32 %v1761, 1.442695
    %v1764 = vpow.pop %v1763
    %v1765 = vmul.f32 %v1762, 1.442695
    %v1766 = vpow.pop %v1765
    %v1767 = vsel %vm352, %v1764, 0.0
    %1768 = vadd.xlane.f32.xlu0 %v1767
    %v1769 = vpop.xlane.xlu0 %1768
    %v1770 = vsel %vm352, %v1766, 0.0
    %1771 = vadd.xlane.f32.xlu0 %v1770
    %v1772 = vpop.xlane.xlu0 %1771
    %v1773 = vrcp.pop %v1769
    %v1774 = vrcp.pop %v1772
    %v1775 = vmul.f32 %v1764, %v1773
    %v1776 = vmul.f32 %v1766, %v1774
    %1777 = vrot.lane.b32.xlu0 %v1450, 88
    %v1778 = vpop.permute.xlu0 %1777
    %1779 = vrot.lane.b32.xlu0 %v1455, 88
    %v1780 = vpop.permute.xlu0 %1779
    %v1784 = vsel %vm352, %v1775, 0
    %v1787 = vsel %vm352, %v1776, 0
    %1789 = vmatprep.subr.mxu0 0.0
    %1790 = vmatpush1.msra.mxu0 %v1778
    %1791 = vmatprep.subr.mxu0 0.0
    %1792 = vmatpush1.msra.mxu0 %v1780
    %1793 = vmatprep.subr.mxu0 0.0
    %1794 = vmatpush1.msra.mxu0 0.0
    %1795 = vmatprep.subr.mxu0 0.0
    %1796 = vmatpush1.msra.mxu0 0.0
    %1797 = vmatprep.subr.mxu0 0.0
    %1798 = vmatpush1.msra.mxu0 0.0
    %1799 = vmatprep.subr.mxu0 0.0
    %1800 = vmatpush1.msra.mxu0 0.0
    %1801 = vmatprep.subr.mxu0 0.0
    %1802 = vmatpush1.msra.mxu0 0.0
    %1803 = vmatprep.subr.mxu0 0.0
    %1804 = vmatpush1.msra.mxu0 0.0
    %1805 = vmatprep.subr.mxu0 0.0
    %1806 = vmatpush1.msra.mxu0 0.0
    %1807 = vmatprep.subr.mxu0 0.0
    %1808 = vmatpush1.msra.mxu0 0.0
    %1809 = vmatprep.subr.mxu0 0.0
    %1810 = vmatpush1.msra.mxu0 0.0
    %1811 = vmatprep.subr.mxu0 0.0
    %1812 = vmatpush1.msra.mxu0 0.0
    %1813 = vmatprep.subr.mxu0 0.0
    %1814 = vmatpush1.msra.mxu0 0.0
    %1815 = vmatprep.subr.mxu0 0.0
    %1816 = vmatpush1.msra.mxu0 0.0
    %1817 = vmatprep.subr.mxu0 0.0
    %1818 = vmatpush1.msra.mxu0 0.0
    %1819 = vmatprep.subr.mxu0 0.0
    %1820 = vmatpush1.msra.mxu0 0.0
    %1821 = vmatprep.subr.mxu0 0.0
    %1822 = vmatpush1.msra.mxu0 0.0
    %1823 = vmatprep.subr.mxu0 0.0
    %1824 = vmatpush1.msra.mxu0 0.0
    %1825 = vmatprep.subr.mxu0 0.0
    %1826 = vmatpush1.msra.mxu0 0.0
    %1827 = vmatprep.subr.mxu0 0.0
    %1828 = vmatpush1.msra.mxu0 0.0
    %1829 = vmatprep.subr.mxu0 0.0
    %1830 = vmatpush1.msra.mxu0 0.0
    %1831 = vmatprep.subr.mxu0 0.0
    %1832 = vmatpush1.msra.mxu0 0.0
    %1833 = vmatprep.subr.mxu0 0.0
    %1834 = vmatpush1.msra.mxu0 0.0
    %1835 = vmatprep.subr.mxu0 0.0
    %1836 = vmatpush1.msra.mxu0 0.0
    %1837 = vmatprep.subr.mxu0 0.0
    %1838 = vmatpush1.msra.mxu0 0.0
    %1839 = vmatprep.subr.mxu0 0.0
    %1840 = vmatpush1.msra.mxu0 0.0
    %1841 = vmatprep.subr.mxu0 0.0
    %1842 = vmatpush1.msra.mxu0 0.0
    %1843 = vmatprep.subr.mxu0 0.0
    %1844 = vmatpush1.msra.mxu0 0.0
    %1845 = vmatprep.subr.mxu0 0.0
    %1846 = vmatpush1.msra.mxu0 0.0
    %1847 = vmatprep.subr.mxu0 0.0
    %1848 = vmatpush1.msra.mxu0 0.0
    %1849 = vmatprep.subr.mxu0 0.0
    %1850 = vmatpush1.msra.mxu0 0.0
    %1851 = vmatprep.subr.mxu0 0.0
    %1852 = vmatpush1.msra.mxu0 0.0
    %1853 = vmatprep.mubr.f32.mxu0 0.0
    %1854 = vmatmul.mubr.f32.gmra.mrb[0].mxu0 %v1784
    %v1855 = vpop.f32.mrb[0].mxu0
    %v1856 = vadd.f32 0.0, %v1855
    %v1857 = vpop.f32.mrb[0].mxu0
    %1858 = vmatprep.mubr.f32.mxu0 0.0
    %1859 = vmatmul.mubr.f32.gmra.mrb[0].mxu0 %v1787
    %v1860 = vpop.f32.mrb[0].mxu0
    %v1861 = vadd.f32 0.0, %v1860
    %v1862 = vpop.f32.mrb[0].mxu0
    %1863 = vdwg.mxu0
    %1866 = vrot.lane.b32.xlu0 %v1856, 8
    %v1867 = vpop.permute.xlu0 %1866
    %1868 = vrot.lane.b32.xlu0 %v1861, 8
    %v1869 = vpop.permute.xlu0 %1868
    %1872 = vst.msk [vmem:[#allocation2] sm:$0xff] %vm676, %v1867
    %1873 = vst.msk [vmem:[#allocation2 + $0x8] sm:$0xff] %vm676, %v1869
    %1874 = vrot.lane.b32.xlu0 %v1350, 112
    %v1875 = vpop.permute.xlu0 %1874
    %1876 = vrot.lane.b32.xlu0 %v1355, 112
    %v1877 = vpop.permute.xlu0 %1876
    %1878 = vrot.lane.b32.xlu0 %v1450, 112
    %v1879 = vpop.permute.xlu0 %1878
    %1880 = vrot.lane.b32.xlu0 %v1455, 112
    %v1881 = vpop.permute.xlu0 %1880
    %v1882 = vsel %vm264, %v1875, 0
    %v1884 = vsel %vm264, %v1877, 0
    %v1886 = vsel %vm264, %v1879, 0
    %v1888 = vsel %vm264, %v1881, 0
    %1890 = vmatprep.subr.mxu0 0.0
    %1891 = vmatpush1.xpose.msra.mxu0 %v1886
    %1892 = vmatprep.subr.mxu0 0.0
    %1893 = vmatpush1.xpose.msra.mxu0 %v1888
    %1894 = vmatprep.subr.mxu0 0.0
    %1895 = vmatpush1.xpose.msra.mxu0 0.0
    %1896 = vmatprep.subr.mxu0 0.0
    %1897 = vmatpush1.xpose.msra.mxu0 0.0
    %1898 = vmatprep.subr.mxu0 0.0
    %1899 = vmatpush1.xpose.msra.mxu0 0.0
    %1900 = vmatprep.subr.mxu0 0.0
    %1901 = vmatpush1.xpose.msra.mxu0 0.0
    %1902 = vmatprep.subr.mxu0 0.0
    %1903 = vmatpush1.xpose.msra.mxu0 0.0
    %1904 = vmatprep.subr.mxu0 0.0
    %1905 = vmatpush1.xpose.msra.mxu0 0.0
    %1906 = vmatprep.subr.mxu0 0.0
    %1907 = vmatpush1.xpose.msra.mxu0 0.0
    %1908 = vmatprep.subr.mxu0 0.0
    %1909 = vmatpush1.xpose.msra.mxu0 0.0
    %1910 = vmatprep.subr.mxu0 0.0
    %1911 = vmatpush1.xpose.msra.mxu0 0.0
    %1912 = vmatprep.subr.mxu0 0.0
    %1913 = vmatpush1.xpose.msra.mxu0 0.0
    %1914 = vmatprep.subr.mxu0 0.0
    %1915 = vmatpush1.xpose.msra.mxu0 0.0
    %1916 = vmatprep.subr.mxu0 0.0
    %1917 = vmatpush1.xpose.msra.mxu0 0.0
    %1918 = vmatprep.subr.mxu0 0.0
    %1919 = vmatpush1.xpose.msra.mxu0 0.0
    %1920 = vmatprep.subr.mxu0 0.0
    %1921 = vmatpush1.xpose.msra.mxu0 0.0
    %1922 = vmatprep.subr.mxu0 0.0
    %1923 = vmatpush1.xpose.msra.mxu0 0.0
    %1924 = vmatprep.subr.mxu0 0.0
    %1925 = vmatpush1.xpose.msra.mxu0 0.0
    %1926 = vmatprep.subr.mxu0 0.0
    %1927 = vmatpush1.xpose.msra.mxu0 0.0
    %1928 = vmatprep.subr.mxu0 0.0
    %1929 = vmatpush1.xpose.msra.mxu0 0.0
    %1930 = vmatprep.subr.mxu0 0.0
    %1931 = vmatpush1.xpose.msra.mxu0 0.0
    %1932 = vmatprep.subr.mxu0 0.0
    %1933 = vmatpush1.xpose.msra.mxu0 0.0
    %1934 = vmatprep.subr.mxu0 0.0
    %1935 = vmatpush1.xpose.msra.mxu0 0.0
    %1936 = vmatprep.subr.mxu0 0.0
    %1937 = vmatpush1.xpose.msra.mxu0 0.0
    %1938 = vmatprep.subr.mxu0 0.0
    %1939 = vmatpush1.xpose.msra.mxu0 0.0
    %1940 = vmatprep.subr.mxu0 0.0
    %1941 = vmatpush1.xpose.msra.mxu0 0.0
    %1942 = vmatprep.subr.mxu0 0.0
    %1943 = vmatpush1.xpose.msra.mxu0 0.0
    %1944 = vmatprep.subr.mxu0 0.0
    %1945 = vmatpush1.xpose.msra.mxu0 0.0
    %1946 = vmatprep.subr.mxu0 0.0
    %1947 = vmatpush1.xpose.msra.mxu0 0.0
    %1948 = vmatprep.subr.mxu0 0.0
    %1949 = vmatpush1.xpose.msra.mxu0 0.0
    %1950 = vmatprep.subr.mxu0 0.0
    %1951 = vmatpush1.xpose.msra.mxu0 0.0
    %1952 = vmatprep.subr.mxu0 0.0
    %1953 = vmatpush1.xpose.msra.mxu0 0.0
    %1954 = vmatprep.mubr.f32.mxu0 0.0
    %1955 = vmatmul.mubr.f32.gmra.mrb[0].mxu0 %v1882
    %v1956 = vpop.f32.mrb[0].mxu0
    %v1957 = vadd.f32 0.0, %v1956
    %v1958 = vpop.f32.mrb[0].mxu0
    %1959 = vmatprep.mubr.f32.mxu0 0.0
    %1960 = vmatmul.mubr.f32.gmra.mrb[0].mxu0 %v1884
    %v1961 = vpop.f32.mrb[0].mxu0
    %v1962 = vadd.f32 0.0, %v1961
    %v1963 = vpop.f32.mrb[0].mxu0
    %1964 = vdwg.mxu0
    %v1965 = vmul.f32 %v1957, 0.35355338
    %v1966 = vmul.f32 %v1962, 0.35355338
    %v1967 = vadd.f32 %v1965, %v1259
    %v1968 = vadd.f32 %v1966, %v1260
    %v1969 = vsel %vm352, %v1967, -inf
    %1970 = vmax.xlane.f32.xlu0 %v1969
    %v1971 = vpop.xlane.xlu0 %1970
    %v1972 = vsel %vm352, %v1968, -inf
    %1973 = vmax.xlane.f32.xlu0 %v1972
    %v1974 = vpop.xlane.xlu0 %1973
    %v1975 = vsub.f32 %v1967, %v1971
    %v1976 = vsub.f32 %v1968, %v1974
    %v1977 = vmul.f32 %v1975, 1.442695
    %v1978 = vpow.pop %v1977
    %v1979 = vmul.f32 %v1976, 1.442695
    %v1980 = vpow.pop %v1979
    %v1981 = vsel %vm352, %v1978, 0.0
    %1982 = vadd.xlane.f32.xlu0 %v1981
    %v1983 = vpop.xlane.xlu0 %1982
    %v1984 = vsel %vm352, %v1980, 0.0
    %1985 = vadd.xlane.f32.xlu0 %v1984
    %v1986 = vpop.xlane.xlu0 %1985
    %v1987 = vrcp.pop %v1983
    %v1988 = vrcp.pop %v1986
    %v1989 = vmul.f32 %v1978, %v1987
    %v1990 = vmul.f32 %v1980, %v1988
    %1991 = vrot.lane.b32.xlu0 %v1450, 80
    %v1992 = vpop.permute.xlu0 %1991
    %1993 = vrot.lane.b32.xlu0 %v1455, 80
    %v1994 = vpop.permute.xlu0 %1993
    %v1998 = vsel %vm352, %v1989, 0
    %v2001 = vsel %vm352, %v1990, 0
    %2003 = vmatprep.subr.mxu0 0.0
    %2004 = vmatpush1.msra.mxu0 %v1992
    %2005 = vmatprep.subr.mxu0 0.0
    %2006 = vmatpush1.msra.mxu0 %v1994
    %2007 = vmatprep.subr.mxu0 0.0
    %2008 = vmatpush1.msra.mxu0 0.0
    %2009 = vmatprep.subr.mxu0 0.0
    %2010 = vmatpush1.msra.mxu0 0.0
    %2011 = vmatprep.subr.mxu0 0.0
    %2012 = vmatpush1.msra.mxu0 0.0
    %2013 = vmatprep.subr.mxu0 0.0
    %2014 = vmatpush1.msra.mxu0 0.0
    %2015 = vmatprep.subr.mxu0 0.0
    %2016 = vmatpush1.msra.mxu0 0.0
    %2017 = vmatprep.subr.mxu0 0.0
    %2018 = vmatpush1.msra.mxu0 0.0
    %2019 = vmatprep.subr.mxu0 0.0
    %2020 = vmatpush1.msra.mxu0 0.0
    %2021 = vmatprep.subr.mxu0 0.0
    %2022 = vmatpush1.msra.mxu0 0.0
    %2023 = vmatprep.subr.mxu0 0.0
    %2024 = vmatpush1.msra.mxu0 0.0
    %2025 = vmatprep.subr.mxu0 0.0
    %2026 = vmatpush1.msra.mxu0 0.0
    %2027 = vmatprep.subr.mxu0 0.0
    %2028 = vmatpush1.msra.mxu0 0.0
    %2029 = vmatprep.subr.mxu0 0.0
    %2030 = vmatpush1.msra.mxu0 0.0
    %2031 = vmatprep.subr.mxu0 0.0
    %2032 = vmatpush1.msra.mxu0 0.0
    %2033 = vmatprep.subr.mxu0 0.0
    %2034 = vmatpush1.msra.mxu0 0.0
    %2035 = vmatprep.subr.mxu0 0.0
    %2036 = vmatpush1.msra.mxu0 0.0
    %2037 = vmatprep.subr.mxu0 0.0
    %2038 = vmatpush1.msra.mxu0 0.0
    %2039 = vmatprep.subr.mxu0 0.0
    %2040 = vmatpush1.msra.mxu0 0.0
    %2041 = vmatprep.subr.mxu0 0.0
    %2042 = vmatpush1.msra.mxu0 0.0
    %2043 = vmatprep.subr.mxu0 0.0
    %2044 = vmatpush1.msra.mxu0 0.0
    %2045 = vmatprep.subr.mxu0 0.0
    %2046 = vmatpush1.msra.mxu0 0.0
    %2047 = vmatprep.subr.mxu0 0.0
    %2048 = vmatpush1.msra.mxu0 0.0
    %2049 = vmatprep.subr.mxu0 0.0
    %2050 = vmatpush1.msra.mxu0 0.0
    %2051 = vmatprep.subr.mxu0 0.0
    %2052 = vmatpush1.msra.mxu0 0.0
    %2053 = vmatprep.subr.mxu0 0.0
    %2054 = vmatpush1.msra.mxu0 0.0
    %2055 = vmatprep.subr.mxu0 0.0
    %2056 = vmatpush1.msra.mxu0 0.0
    %2057 = vmatprep.subr.mxu0 0.0
    %2058 = vmatpush1.msra.mxu0 0.0
    %2059 = vmatprep.subr.mxu0 0.0
    %2060 = vmatpush1.msra.mxu0 0.0
    %2061 = vmatprep.subr.mxu0 0.0
    %2062 = vmatpush1.msra.mxu0 0.0
    %2063 = vmatprep.subr.mxu0 0.0
    %2064 = vmatpush1.msra.mxu0 0.0
    %2065 = vmatprep.subr.mxu0 0.0
    %2066 = vmatpush1.msra.mxu0 0.0
    %2067 = vmatprep.mubr.f32.mxu0 0.0
    %2068 = vmatmul.mubr.f32.gmra.mrb[0].mxu0 %v1998
    %v2069 = vpop.f32.mrb[0].mxu0
    %v2070 = vadd.f32 0.0, %v2069
    %v2071 = vpop.f32.mrb[0].mxu0
    %2072 = vmatprep.mubr.f32.mxu0 0.0
    %2073 = vmatmul.mubr.f32.gmra.mrb[0].mxu0 %v2001
    %v2074 = vpop.f32.mrb[0].mxu0
    %v2075 = vadd.f32 0.0, %v2074
    %v2076 = vpop.f32.mrb[0].mxu0
    %2077 = vdwg.mxu0
    %2080 = vrot.lane.b32.xlu0 %v2070, 16
    %v2081 = vpop.permute.xlu0 %2080
    %2082 = vrot.lane.b32.xlu0 %v2075, 16
    %v2083 = vpop.permute.xlu0 %2082
    %2086 = vst.msk [vmem:[#allocation2] sm:$0xff] %vm891, %v2081
    %2087 = vst.msk [vmem:[#allocation2 + $0x8] sm:$0xff] %vm891, %v2083
    %2088 = vrot.lane.b32.xlu0 %v1350, 104
    %v2089 = vpop.permute.xlu0 %2088
    %2090 = vrot.lane.b32.xlu0 %v1355, 104
    %v2091 = vpop.permute.xlu0 %2090
    %2092 = vrot.lane.b32.xlu0 %v1450, 104
    %v2093 = vpop.permute.xlu0 %2092
    %2094 = vrot.lane.b32.xlu0 %v1455, 104
    %v2095 = vpop.permute.xlu0 %2094
    %v2096 = vsel %vm264, %v2089, 0
    %v2098 = vsel %vm264, %v2091, 0
    %v2100 = vsel %vm264, %v2093, 0
    %v2102 = vsel %vm264, %v2095, 0
    %2104 = vmatprep.subr.mxu0 0.0
    %2105 = vmatpush1.xpose.msra.mxu0 %v2100
    %2106 = vmatprep.subr.mxu0 0.0
    %2107 = vmatpush1.xpose.msra.mxu0 %v2102
    %2108 = vmatprep.subr.mxu0 0.0
    %2109 = vmatpush1.xpose.msra.mxu0 0.0
    %2110 = vmatprep.subr.mxu0 0.0
    %2111 = vmatpush1.xpose.msra.mxu0 0.0
    %2112 = vmatprep.subr.mxu0 0.0
    %2113 = vmatpush1.xpose.msra.mxu0 0.0
    %2114 = vmatprep.subr.mxu0 0.0
    %2115 = vmatpush1.xpose.msra.mxu0 0.0
    %2116 = vmatprep.subr.mxu0 0.0
    %2117 = vmatpush1.xpose.msra.mxu0 0.0
    %2118 = vmatprep.subr.mxu0 0.0
    %2119 = vmatpush1.xpose.msra.mxu0 0.0
    %2120 = vmatprep.subr.mxu0 0.0
    %2121 = vmatpush1.xpose.msra.mxu0 0.0
    %2122 = vmatprep.subr.mxu0 0.0
    %2123 = vmatpush1.xpose.msra.mxu0 0.0
    %2124 = vmatprep.subr.mxu0 0.0
    %2125 = vmatpush1.xpose.msra.mxu0 0.0
    %2126 = vmatprep.subr.mxu0 0.0
    %2127 = vmatpush1.xpose.msra.mxu0 0.0
    %2128 = vmatprep.subr.mxu0 0.0
    %2129 = vmatpush1.xpose.msra.mxu0 0.0
    %2130 = vmatprep.subr.mxu0 0.0
    %2131 = vmatpush1.xpose.msra.mxu0 0.0
    %2132 = vmatprep.subr.mxu0 0.0
    %2133 = vmatpush1.xpose.msra.mxu0 0.0
    %2134 = vmatprep.subr.mxu0 0.0
    %2135 = vmatpush1.xpose.msra.mxu0 0.0
    %2136 = vmatprep.subr.mxu0 0.0
    %2137 = vmatpush1.xpose.msra.mxu0 0.0
    %2138 = vmatprep.subr.mxu0 0.0
    %2139 = vmatpush1.xpose.msra.mxu0 0.0
    %2140 = vmatprep.subr.mxu0 0.0
    %2141 = vmatpush1.xpose.msra.mxu0 0.0
    %2142 = vmatprep.subr.mxu0 0.0
    %2143 = vmatpush1.xpose.msra.mxu0 0.0
    %2144 = vmatprep.subr.mxu0 0.0
    %2145 = vmatpush1.xpose.msra.mxu0 0.0
    %2146 = vmatprep.subr.mxu0 0.0
    %2147 = vmatpush1.xpose.msra.mxu0 0.0
    %2148 = vmatprep.subr.mxu0 0.0
    %2149 = vmatpush1.xpose.msra.mxu0 0.0
    %2150 = vmatprep.subr.mxu0 0.0
    %2151 = vmatpush1.xpose.msra.mxu0 0.0
    %2152 = vmatprep.subr.mxu0 0.0
    %2153 = vmatpush1.xpose.msra.mxu0 0.0
    %2154 = vmatprep.subr.mxu0 0.0
    %2155 = vmatpush1.xpose.msra.mxu0 0.0
    %2156 = vmatprep.subr.mxu0 0.0
    %2157 = vmatpush1.xpose.msra.mxu0 0.0
    %2158 = vmatprep.subr.mxu0 0.0
    %2159 = vmatpush1.xpose.msra.mxu0 0.0
    %2160 = vmatprep.subr.mxu0 0.0
    %2161 = vmatpush1.xpose.msra.mxu0 0.0
    %2162 = vmatprep.subr.mxu0 0.0
    %2163 = vmatpush1.xpose.msra.mxu0 0.0
    %2164 = vmatprep.subr.mxu0 0.0
    %2165 = vmatpush1.xpose.msra.mxu0 0.0
    %2166 = vmatprep.subr.mxu0 0.0
    %2167 = vmatpush1.xpose.msra.mxu0 0.0
    %2168 = vmatprep.mubr.f32.mxu0 0.0
    %2169 = vmatmul.mubr.f32.gmra.mrb[0].mxu0 %v2096
    %v2170 = vpop.f32.mrb[0].mxu0
    %v2171 = vadd.f32 0.0, %v2170
    %v2172 = vpop.f32.mrb[0].mxu0
    %2173 = vmatprep.mubr.f32.mxu0 0.0
    %2174 = vmatmul.mubr.f32.gmra.mrb[0].mxu0 %v2098
    %v2175 = vpop.f32.mrb[0].mxu0
    %v2176 = vadd.f32 0.0, %v2175
    %v2177 = vpop.f32.mrb[0].mxu0
    %2178 = vdwg.mxu0
    %v2179 = vmul.f32 %v2171, 0.35355338
    %v2180 = vmul.f32 %v2176, 0.35355338
    %v2181 = vadd.f32 %v2179, %v1259
    %v2182 = vadd.f32 %v2180, %v1260
    %v2183 = vsel %vm352, %v2181, -inf
    %2184 = vmax.xlane.f32.xlu0 %v2183
    %v2185 = vpop.xlane.xlu0 %2184
    %v2186 = vsel %vm352, %v2182, -inf
    %2187 = vmax.xlane.f32.xlu0 %v2186
    %v2188 = vpop.xlane.xlu0 %2187
    %v2189 = vsub.f32 %v2181, %v2185
    %v2190 = vsub.f32 %v2182, %v2188
    %v2191 = vmul.f32 %v2189, 1.442695
    %v2192 = vpow.pop %v2191
    %v2193 = vmul.f32 %v2190, 1.442695
    %v2194 = vpow.pop %v2193
    %v2195 = vsel %vm352, %v2192, 0.0
    %2196 = vadd.xlane.f32.xlu0 %v2195
    %v2197 = vpop.xlane.xlu0 %2196
    %v2198 = vsel %vm352, %v2194, 0.0
    %2199 = vadd.xlane.f32.xlu0 %v2198
    %v2200 = vpop.xlane.xlu0 %2199
    %v2201 = vrcp.pop %v2197
    %v2202 = vrcp.pop %v2200
    %v2203 = vmul.f32 %v2192, %v2201
    %v2204 = vmul.f32 %v2194, %v2202
    %2205 = vrot.lane.b32.xlu0 %v1450, 72
    %v2206 = vpop.permute.xlu0 %2205
    %2207 = vrot.lane.b32.xlu0 %v1455, 72
    %v2208 = vpop.permute.xlu0 %2207
    %v2212 = vsel %vm352, %v2203, 0
    %v2215 = vsel %vm352, %v2204, 0
    %2217 = vmatprep.subr.mxu0 0.0
    %2218 = vmatpush1.msra.mxu0 %v2206
    %2219 = vmatprep.subr.mxu0 0.0
    %2220 = vmatpush1.msra.mxu0 %v2208
    %2221 = vmatprep.subr.mxu0 0.0
    %2222 = vmatpush1.msra.mxu0 0.0
    %2223 = vmatprep.subr.mxu0 0.0
    %2224 = vmatpush1.msra.mxu0 0.0
    %2225 = vmatprep.subr.mxu0 0.0
    %2226 = vmatpush1.msra.mxu0 0.0
    %2227 = vmatprep.subr.mxu0 0.0
    %2228 = vmatpush1.msra.mxu0 0.0
    %2229 = vmatprep.subr.mxu0 0.0
    %2230 = vmatpush1.msra.mxu0 0.0
    %2231 = vmatprep.subr.mxu0 0.0
    %2232 = vmatpush1.msra.mxu0 0.0
    %2233 = vmatprep.subr.mxu0 0.0
    %2234 = vmatpush1.msra.mxu0 0.0
    %2235 = vmatprep.subr.mxu0 0.0
    %2236 = vmatpush1.msra.mxu0 0.0
    %2237 = vmatprep.subr.mxu0 0.0
    %2238 = vmatpush1.msra.mxu0 0.0
    %2239 = vmatprep.subr.mxu0 0.0
    %2240 = vmatpush1.msra.mxu0 0.0
    %2241 = vmatprep.subr.mxu0 0.0
    %2242 = vmatpush1.msra.mxu0 0.0
    %2243 = vmatprep.subr.mxu0 0.0
    %2244 = vmatpush1.msra.mxu0 0.0
    %2245 = vmatprep.subr.mxu0 0.0
    %2246 = vmatpush1.msra.mxu0 0.0
    %2247 = vmatprep.subr.mxu0 0.0
    %2248 = vmatpush1.msra.mxu0 0.0
    %2249 = vmatprep.subr.mxu0 0.0
    %2250 = vmatpush1.msra.mxu0 0.0
    %2251 = vmatprep.subr.mxu0 0.0
    %2252 = vmatpush1.msra.mxu0 0.0
    %2253 = vmatprep.subr.mxu0 0.0
    %2254 = vmatpush1.msra.mxu0 0.0
    %2255 = vmatprep.subr.mxu0 0.0
    %2256 = vmatpush1.msra.mxu0 0.0
    %2257 = vmatprep.subr.mxu0 0.0
    %2258 = vmatpush1.msra.mxu0 0.0
    %2259 = vmatprep.subr.mxu0 0.0
    %2260 = vmatpush1.msra.mxu0 0.0
    %2261 = vmatprep.subr.mxu0 0.0
    %2262 = vmatpush1.msra.mxu0 0.0
    %2263 = vmatprep.subr.mxu0 0.0
    %2264 = vmatpush1.msra.mxu0 0.0
    %2265 = vmatprep.subr.mxu0 0.0
    %2266 = vmatpush1.msra.mxu0 0.0
    %2267 = vmatprep.subr.mxu0 0.0
    %2268 = vmatpush1.msra.mxu0 0.0
    %2269 = vmatprep.subr.mxu0 0.0
    %2270 = vmatpush1.msra.mxu0 0.0
    %2271 = vmatprep.subr.mxu0 0.0
    %2272 = vmatpush1.msra.mxu0 0.0
    %2273 = vmatprep.subr.mxu0 0.0
    %2274 = vmatpush1.msra.mxu0 0.0
    %2275 = vmatprep.subr.mxu0 0.0
    %2276 = vmatpush1.msra.mxu0 0.0
    %2277 = vmatprep.subr.mxu0 0.0
    %2278 = vmatpush1.msra.mxu0 0.0
    %2279 = vmatprep.subr.mxu0 0.0
    %2280 = vmatpush1.msra.mxu0 0.0
    %2281 = vmatprep.mubr.f32.mxu0 0.0
    %2282 = vmatmul.mubr.f32.gmra.mrb[0].mxu0 %v2212
    %v2283 = vpop.f32.mrb[0].mxu0
    %v2284 = vadd.f32 0.0, %v2283
    %v2285 = vpop.f32.mrb[0].mxu0
    %2286 = vmatprep.mubr.f32.mxu0 0.0
    %2287 = vmatmul.mubr.f32.gmra.mrb[0].mxu0 %v2215
    %v2288 = vpop.f32.mrb[0].mxu0
    %v2289 = vadd.f32 0.0, %v2288
    %v2290 = vpop.f32.mrb[0].mxu0
    %2291 = vdwg.mxu0
    %2294 = vrot.lane.b32.xlu0 %v2284, 24
    %v2295 = vpop.permute.xlu0 %2294
    %2296 = vrot.lane.b32.xlu0 %v2289, 24
    %v2297 = vpop.permute.xlu0 %2296
    %2300 = vst.msk [vmem:[#allocation2] sm:$0xff] %vm1106, %v2295
    %2301 = vst.msk [vmem:[#allocation2 + $0x8] sm:$0xff] %vm1106, %v2297
    %v2302 = vld [vmem:[#allocation2] sm:$0xff]
    %v2303 = vld [vmem:[#allocation2 + $0x8] sm:$0xff]
    %v2305 = vlaneseq
    %v2306 = vshrl.u32 %v2305, 7
    %v2307 = vsub.s32 0, %v2306
    %v2308 = vrot.slane %v1270, %v2307
    %v2311 = vsel %vm176, %v2302, 0
    %v2314 = vsel %vm176, %v2303, 0
    %2316 = vmatprep.subr.mxu0 0.0
    %2317 = vmatpush1.msra.mxu0 %v1266
    %2318 = vmatprep.subr.mxu0 0.0
    %2319 = vmatpush1.msra.mxu0 %v1267
    %2320 = vmatprep.subr.mxu0 0.0
    %2321 = vmatpush1.msra.mxu0 %v1268
    %2322 = vmatprep.subr.mxu0 0.0
    %2323 = vmatpush1.msra.mxu0 %v1269
    %2324 = vmatprep.subr.mxu0 0.0
    %2325 = vmatpush1.msra.mxu0 0.0
    %2326 = vmatprep.subr.mxu0 0.0
    %2327 = vmatpush1.msra.mxu0 0.0
    %2328 = vmatprep.subr.mxu0 0.0
    %2329 = vmatpush1.msra.mxu0 0.0
    %2330 = vmatprep.subr.mxu0 0.0
    %2331 = vmatpush1.msra.mxu0 0.0
    %2332 = vmatprep.subr.mxu0 0.0
    %2333 = vmatpush1.msra.mxu0 0.0
    %2334 = vmatprep.subr.mxu0 0.0
    %2335 = vmatpush1.msra.mxu0 0.0
    %2336 = vmatprep.subr.mxu0 0.0
    %2337 = vmatpush1.msra.mxu0 0.0
    %2338 = vmatprep.subr.mxu0 0.0
    %2339 = vmatpush1.msra.mxu0 0.0
    %2340 = vmatprep.subr.mxu0 0.0
    %2341 = vmatpush1.msra.mxu0 0.0
    %2342 = vmatprep.subr.mxu0 0.0
    %2343 = vmatpush1.msra.mxu0 0.0
    %2344 = vmatprep.subr.mxu0 0.0
    %2345 = vmatpush1.msra.mxu0 0.0
    %2346 = vmatprep.subr.mxu0 0.0
    %2347 = vmatpush1.msra.mxu0 0.0
    %2348 = vmatprep.subr.mxu0 0.0
    %2349 = vmatpush1.msra.mxu0 0.0
    %2350 = vmatprep.subr.mxu0 0.0
    %2351 = vmatpush1.msra.mxu0 0.0
    %2352 = vmatprep.subr.mxu0 0.0
    %2353 = vmatpush1.msra.mxu0 0.0
    %2354 = vmatprep.subr.mxu0 0.0
    %2355 = vmatpush1.msra.mxu0 0.0
    %2356 = vmatprep.subr.mxu0 0.0
    %2357 = vmatpush1.msra.mxu0 0.0
    %2358 = vmatprep.subr.mxu0 0.0
    %2359 = vmatpush1.msra.mxu0 0.0
    %2360 = vmatprep.subr.mxu0 0.0
    %2361 = vmatpush1.msra.mxu0 0.0
    %2362 = vmatprep.subr.mxu0 0.0
    %2363 = vmatpush1.msra.mxu0 0.0
    %2364 = vmatprep.subr.mxu0 0.0
    %2365 = vmatpush1.msra.mxu0 0.0
    %2366 = vmatprep.subr.mxu0 0.0
    %2367 = vmatpush1.msra.mxu0 0.0
    %2368 = vmatprep.subr.mxu0 0.0
    %2369 = vmatpush1.msra.mxu0 0.0
    %2370 = vmatprep.subr.mxu0 0.0
    %2371 = vmatpush1.msra.mxu0 0.0
    %2372 = vmatprep.subr.mxu0 0.0
    %2373 = vmatpush1.msra.mxu0 0.0
    %2374 = vmatprep.subr.mxu0 0.0
    %2375 = vmatpush1.msra.mxu0 0.0
    %2376 = vmatprep.subr.mxu0 0.0
    %2377 = vmatpush1.msra.mxu0 0.0
    %2378 = vmatprep.subr.mxu0 0.0
    %2379 = vmatpush1.msra.mxu0 0.0
    %2380 = vmatprep.mubr.f32.mxu0 0.0
    %2381 = vmatmul.mubr.f32.gmra.mrb[0].mxu0 %v2311
    %v2382 = vpop.f32.mrb[0].mxu0
    %v2383 = vadd.f32 %v2308, %v2382
    %v2384 = vpop.f32.mrb[0].mxu0
    %2385 = vmatprep.mubr.f32.mxu0 0.0
    %2386 = vmatmul.mubr.f32.gmra.mrb[0].mxu0 %v2314
    %v2387 = vpop.f32.mrb[0].mxu0
    %v2388 = vadd.f32 %v2308, %v2387
    %v2389 = vpop.f32.mrb[0].mxu0
    %2390 = vdwg.mxu0
    %v2391 = vld [vmem:[%s18] sm:$0x1]
    %v2392 = vld [vmem:[%s19] sm:$0x1]
    %v2393 = vadd.f32 %v1257, %v2383
    %v2394 = vadd.f32 %v1258, %v2388
    %v2395 = vsel %vm176, %v2393, 0.0
    %2396 = vadd.xlane.f32.xlu0 %v2395
    %v2397 = vpop.xlane.xlu0 %2396
    %v2398 = vsel %vm176, %v2394, 0.0
    %2399 = vadd.xlane.f32.xlu0 %v2398
    %v2400 = vpop.xlane.xlu0 %2399
    %v2401 = vmul.f32 %v2397, %v1208
    %v2402 = vmul.f32 %v2400, %v1208
    %v2403 = vsub.f32 %v2393, %v2401
    %v2404 = vsub.f32 %v2394, %v2402
    %v2405 = vmul.f32 %v2403, %v2403
    %v2406 = vmul.f32 %v2404, %v2404
    %v2407 = vsel %vm176, %v2405, 0.0
    %2408 = vadd.xlane.f32.xlu0 %v2407
    %v2409 = vpop.xlane.xlu0 %2408
    %v2410 = vsel %vm176, %v2406, 0.0
    %2411 = vadd.xlane.f32.xlu0 %v2410
    %v2412 = vpop.xlane.xlu0 %2411
    %v2413 = vmul.f32 %v2409, 0.032258064
    %v2414 = vmul.f32 %v2412, 0.032258064
    %v2415 = vrsqrt.pop %v2413
    %v2416 = vmul.f32 %v2413, %v2415
    %vm2417 = vcmp.eq.f32.partialorder %v2413, inf
    %v2418 = vsel %vm2417, %v2413, %v2416
    %vm2419 = vcmp.eq.f32.partialorder %v2413, 0.0
    %v2420 = vand.u32 %v2413, 2147483648
    %v2421 = vsel %vm2419, %v2420, %v2418
    %v2422 = vrsqrt.pop %v2414
    %v2423 = vmul.f32 %v2414, %v2422
    %vm2424 = vcmp.eq.f32.partialorder %v2414, inf
    %v2425 = vsel %vm2424, %v2414, %v2423
    %vm2426 = vcmp.eq.f32.partialorder %v2414, 0.0
    %v2427 = vand.u32 %v2414, 2147483648
    %v2428 = vsel %vm2426, %v2427, %v2425
    %v2430 = vlaneseq
    %v2431 = vshrl.u32 %v2430, 7
    %v2432 = vsub.s32 0, %v2431
    %v2433 = vrot.slane %v2391, %v2432
    %v2435 = vmul.f32 %v2433, %v2403
    %v2436 = vmul.f32 %v2433, %v2404
    %v2437 = vadd.f32 %v2421, 1e-06
    %v2438 = vadd.f32 %v2428, 1e-06
    %v2439 = vrcp.pop %v2437
    %v2440 = vmul.f32 %v2435, %v2439
    %v2441 = vrcp.pop %v2438
    %v2442 = vmul.f32 %v2436, %v2441
    %v2444 = vlaneseq
    %v2445 = vshrl.u32 %v2444, 7
    %v2446 = vsub.s32 0, %v2445
    %v2447 = vrot.slane %v2392, %v2446
    %v2449 = vadd.f32 %v2440, %v2447
    %v2450 = vadd.f32 %v2442, %v2447
    %v2451 = vld [vmem:[#allocation12] sm:$0xff]
    %v2452 = vld [vmem:[#allocation12 + $0x8] sm:$0xff]
    %v2453 = vld [vmem:[#allocation12 + $0x10] sm:$0xff]
    %v2454 = vld [vmem:[#allocation12 + $0x18] sm:$0xff]
    %v2455 = vld [vmem:[%s13] sm:$0x1]
    %v2457 = vlaneseq
    %v2458 = vshrl.u32 %v2457, 7
    %v2459 = vsub.s32 0, %v2458
    %v2460 = vrot.slane %v2455, %v2459
    %v2463 = vsel %vm176, %v2449, 0
    %v2466 = vsel %vm176, %v2450, 0
    %2468 = vmatprep.subr.mxu0 0.0
    %2469 = vmatpush1.msra.mxu0 %v2451
    %2470 = vmatprep.subr.mxu0 0.0
    %2471 = vmatpush1.msra.mxu0 %v2452
    %2472 = vmatprep.subr.mxu0 0.0
    %2473 = vmatpush1.msra.mxu0 %v2453
    %2474 = vmatprep.subr.mxu0 0.0
    %2475 = vmatpush1.msra.mxu0 %v2454
    %2476 = vmatprep.subr.mxu0 0.0
    %2477 = vmatpush1.msra.mxu0 0.0
    %2478 = vmatprep.subr.mxu0 0.0
    %2479 = vmatpush1.msra.mxu0 0.0
    %2480 = vmatprep.subr.mxu0 0.0
    %2481 = vmatpush1.msra.mxu0 0.0
    %2482 = vmatprep.subr.mxu0 0.0
    %2483 = vmatpush1.msra.mxu0 0.0
    %2484 = vmatprep.subr.mxu0 0.0
    %2485 = vmatpush1.msra.mxu0 0.0
    %2486 = vmatprep.subr.mxu0 0.0
    %2487 = vmatpush1.msra.mxu0 0.0
    %2488 = vmatprep.subr.mxu0 0.0
    %2489 = vmatpush1.msra.mxu0 0.0
    %2490 = vmatprep.subr.mxu0 0.0
    %2491 = vmatpush1.msra.mxu0 0.0
    %2492 = vmatprep.subr.mxu0 0.0
    %2493 = vmatpush1.msra.mxu0 0.0
    %2494 = vmatprep.subr.mxu0 0.0
    %2495 = vmatpush1.msra.mxu0 0.0
    %2496 = vmatprep.subr.mxu0 0.0
    %2497 = vmatpush1.msra.mxu0 0.0
    %2498 = vmatprep.subr.mxu0 0.0
    %2499 = vmatpush1.msra.mxu0 0.0
    %2500 = vmatprep.subr.mxu0 0.0
    %2501 = vmatpush1.msra.mxu0 0.0
    %2502 = vmatprep.subr.mxu0 0.0
    %2503 = vmatpush1.msra.mxu0 0.0
    %2504 = vmatprep.subr.mxu0 0.0
    %2505 = vmatpush1.msra.mxu0 0.0
    %2506 = vmatprep.subr.mxu0 0.0
    %2507 = vmatpush1.msra.mxu0 0.0
    %2508 = vmatprep.subr.mxu0 0.0
    %2509 = vmatpush1.msra.mxu0 0.0
    %2510 = vmatprep.subr.mxu0 0.0
    %2511 = vmatpush1.msra.mxu0 0.0
    %2512 = vmatprep.subr.mxu0 0.0
    %2513 = vmatpush1.msra.mxu0 0.0
    %2514 = vmatprep.subr.mxu0 0.0
    %2515 = vmatpush1.msra.mxu0 0.0
    %2516 = vmatprep.subr.mxu0 0.0
    %2517 = vmatpush1.msra.mxu0 0.0
    %2518 = vmatprep.subr.mxu0 0.0
    %2519 = vmatpush1.msra.mxu0 0.0
    %2520 = vmatprep.subr.mxu0 0.0
    %2521 = vmatpush1.msra.mxu0 0.0
    %2522 = vmatprep.subr.mxu0 0.0
    %2523 = vmatpush1.msra.mxu0 0.0
    %2524 = vmatprep.subr.mxu0 0.0
    %2525 = vmatpush1.msra.mxu0 0.0
    %2526 = vmatprep.subr.mxu0 0.0
    %2527 = vmatpush1.msra.mxu0 0.0
    %2528 = vmatprep.subr.mxu0 0.0
    %2529 = vmatpush1.msra.mxu0 0.0
    %2530 = vmatprep.subr.mxu0 0.0
    %2531 = vmatpush1.msra.mxu0 0.0
    %2532 = vmatprep.mubr.f32.mxu0 0.0
    %2533 = vmatmul.mubr.f32.gmra.mrb[0].mxu0 %v2463
    %v2534 = vpop.f32.mrb[0].mxu0
    %v2535 = vadd.f32 %v2460, %v2534
    %v2536 = vpop.f32.mrb[0].mxu0
    %2537 = vmatprep.mubr.f32.mxu0 0.0
    %2538 = vmatmul.mubr.f32.gmra.mrb[0].mxu0 %v2466
    %v2539 = vpop.f32.mrb[0].mxu0
    %v2540 = vadd.f32 %v2460, %v2539
    %v2541 = vpop.f32.mrb[0].mxu0
    %2542 = vdwg.mxu0
    %v2543 = vmax.f32 %v2535, 0.0
    %v2544 = vmax.f32 %v2540, 0.0
    %v2545 = vld [vmem:[%s14] sm:$0xff]
    %v2546 = vld [vmem:[%s14 + $0x8] sm:$0xff]
    %v2547 = vld [vmem:[%s14 + $0x10] sm:$0xff]
    %v2548 = vld [vmem:[%s14 + $0x18] sm:$0xff]
    %v2549 = vld [vmem:[%s14 + $0x20] sm:$0xff]
    %v2550 = vld [vmem:[%s14 + $0x28] sm:$0xff]
    %v2551 = vld [vmem:[%s14 + $0x30] sm:$0xff]
    %v2552 = vld [vmem:[%s14 + $0x38] sm:$0xff]
    %v2553 = vld [vmem:[%s15] sm:$0x1]
    %v2555 = vlaneseq
    %v2556 = vshrl.u32 %v2555, 7
    %v2557 = vsub.s32 0, %v2556
    %v2558 = vrot.slane %v2553, %v2557
    %vm2560 = vcmask 523264
    %v2562 = vsel %vm2560, %v2543, 0
    %v2565 = vsel %vm2560, %v2544, 0
    %2567 = vmatprep.subr.mxu0 0.0
    %2568 = vmatpush1.msra.mxu0 %v2545
    %2569 = vmatprep.subr.mxu0 0.0
    %2570 = vmatpush1.msra.mxu0 %v2546
    %2571 = vmatprep.subr.mxu0 0.0
    %2572 = vmatpush1.msra.mxu0 %v2547
    %2573 = vmatprep.subr.mxu0 0.0
    %2574 = vmatpush1.msra.mxu0 %v2548
    %2575 = vmatprep.subr.mxu0 0.0
    %2576 = vmatpush1.msra.mxu0 %v2549
    %2577 = vmatprep.subr.mxu0 0.0
    %2578 = vmatpush1.msra.mxu0 %v2550
    %2579 = vmatprep.subr.mxu0 0.0
    %2580 = vmatpush1.msra.mxu0 %v2551
    %2581 = vmatprep.subr.mxu0 0.0
    %2582 = vmatpush1.msra.mxu0 %v2552
    %2583 = vmatprep.subr.mxu0 0.0
    %2584 = vmatpush1.msra.mxu0 0.0
    %2585 = vmatprep.subr.mxu0 0.0
    %2586 = vmatpush1.msra.mxu0 0.0
    %2587 = vmatprep.subr.mxu0 0.0
    %2588 = vmatpush1.msra.mxu0 0.0
    %2589 = vmatprep.subr.mxu0 0.0
    %2590 = vmatpush1.msra.mxu0 0.0
    %2591 = vmatprep.subr.mxu0 0.0
    %2592 = vmatpush1.msra.mxu0 0.0
    %2593 = vmatprep.subr.mxu0 0.0
    %2594 = vmatpush1.msra.mxu0 0.0
    %2595 = vmatprep.subr.mxu0 0.0
    %2596 = vmatpush1.msra.mxu0 0.0
    %2597 = vmatprep.subr.mxu0 0.0
    %2598 = vmatpush1.msra.mxu0 0.0
    %2599 = vmatprep.subr.mxu0 0.0
    %2600 = vmatpush1.msra.mxu0 0.0
    %2601 = vmatprep.subr.mxu0 0.0
    %2602 = vmatpush1.msra.mxu0 0.0
    %2603 = vmatprep.subr.mxu0 0.0
    %2604 = vmatpush1.msra.mxu0 0.0
    %2605 = vmatprep.subr.mxu0 0.0
    %2606 = vmatpush1.msra.mxu0 0.0
    %2607 = vmatprep.subr.mxu0 0.0
    %2608 = vmatpush1.msra.mxu0 0.0
    %2609 = vmatprep.subr.mxu0 0.0
    %2610 = vmatpush1.msra.mxu0 0.0
    %2611 = vmatprep.subr.mxu0 0.0
    %2612 = vmatpush1.msra.mxu0 0.0
    %2613 = vmatprep.subr.mxu0 0.0
    %2614 = vmatpush1.msra.mxu0 0.0
    %2615 = vmatprep.subr.mxu0 0.0
    %2616 = vmatpush1.msra.mxu0 0.0
    %2617 = vmatprep.subr.mxu0 0.0
    %2618 = vmatpush1.msra.mxu0 0.0
    %2619 = vmatprep.subr.mxu0 0.0
    %2620 = vmatpush1.msra.mxu0 0.0
    %2621 = vmatprep.subr.mxu0 0.0
    %2622 = vmatpush1.msra.mxu0 0.0
    %2623 = vmatprep.subr.mxu0 0.0
    %2624 = vmatpush1.msra.mxu0 0.0
    %2625 = vmatprep.subr.mxu0 0.0
    %2626 = vmatpush1.msra.mxu0 0.0
    %2627 = vmatprep.subr.mxu0 0.0
    %2628 = vmatpush1.msra.mxu0 0.0
    %2629 = vmatprep.subr.mxu0 0.0
    %2630 = vmatpush1.msra.mxu0 0.0
    %2631 = vmatprep.mubr.f32.mxu0 0.0
    %2632 = vmatmul.mubr.f32.gmra.mrb[0].mxu0 %v2562
    %v2633 = vpop.f32.mrb[0].mxu0
    %v2634 = vadd.f32 %v2558, %v2633
    %v2635 = vpop.f32.mrb[0].mxu0
    %2636 = vmatprep.mubr.f32.mxu0 0.0
    %2637 = vmatmul.mubr.f32.gmra.mrb[0].mxu0 %v2565
    %v2638 = vpop.f32.mrb[0].mxu0
    %v2639 = vadd.f32 %v2558, %v2638
    %v2640 = vpop.f32.mrb[0].mxu0
    %2641 = vdwg.mxu0
    %v2642 = vld [vmem:[%s20] sm:$0x1]
    %v2643 = vld [vmem:[%s21] sm:$0x1]
    %v2644 = vadd.f32 %v2449, %v2634
    %v2645 = vadd.f32 %v2450, %v2639
    %v2646 = vsel %vm176, %v2644, 0.0
    %2647 = vadd.xlane.f32.xlu0 %v2646
    %v2648 = vpop.xlane.xlu0 %2647
    %v2649 = vsel %vm176, %v2645, 0.0
    %2650 = vadd.xlane.f32.xlu0 %v2649
    %v2651 = vpop.xlane.xlu0 %2650
    %v2652 = vmul.f32 %v2648, %v1208
    %v2653 = vmul.f32 %v2651, %v1208
    %v2654 = vsub.f32 %v2644, %v2652
    %v2655 = vsub.f32 %v2645, %v2653
    %v2656 = vmul.f32 %v2654, %v2654
    %v2657 = vmul.f32 %v2655, %v2655
    %v2658 = vsel %vm176, %v2656, 0.0
    %2659 = vadd.xlane.f32.xlu0 %v2658
    %v2660 = vpop.xlane.xlu0 %2659
    %v2661 = vsel %vm176, %v2657, 0.0
    %2662 = vadd.xlane.f32.xlu0 %v2661
    %v2663 = vpop.xlane.xlu0 %2662
    %v2664 = vmul.f32 %v2660, 0.032258064
    %v2665 = vmul.f32 %v2663, 0.032258064
    %v2666 = vrsqrt.pop %v2664
    %v2667 = vmul.f32 %v2664, %v2666
    %vm2668 = vcmp.eq.f32.partialorder %v2664, inf
    %v2669 = vsel %vm2668, %v2664, %v2667
    %vm2670 = vcmp.eq.f32.partialorder %v2664, 0.0
    %v2671 = vand.u32 %v2664, 2147483648
    %v2672 = vsel %vm2670, %v2671, %v2669
    %v2673 = vrsqrt.pop %v2665
    %v2674 = vmul.f32 %v2665, %v2673
    %vm2675 = vcmp.eq.f32.partialorder %v2665, inf
    %v2676 = vsel %vm2675, %v2665, %v2674
    %vm2677 = vcmp.eq.f32.partialorder %v2665, 0.0
    %v2678 = vand.u32 %v2665, 2147483648
    %v2679 = vsel %vm2677, %v2678, %v2676
    %v2681 = vlaneseq
    %v2682 = vshrl.u32 %v2681, 7
    %v2683 = vsub.s32 0, %v2682
    %v2684 = vrot.slane %v2642, %v2683
    %v2686 = vmul.f32 %v2684, %v2654
    %v2687 = vmul.f32 %v2684, %v2655
    %v2688 = vadd.f32 %v2672, 1e-06
    %v2689 = vadd.f32 %v2679, 1e-06
    %v2690 = vrcp.pop %v2688
    %v2691 = vmul.f32 %v2686, %v2690
    %v2692 = vrcp.pop %v2689
    %v2693 = vmul.f32 %v2687, %v2692
    %v2695 = vlaneseq
    %v2696 = vshrl.u32 %v2695, 7
    %v2697 = vsub.s32 0, %v2696
    %v2698 = vrot.slane %v2643, %v2697
    %v2700 = vadd.f32 %v2691, %v2698
    %v2701 = vadd.f32 %v2693, %v2698
    %2702 = vst.msk [vmem:[#allocation14] sm:$0xff] %vm176, %v2700
    %2703 = vst.msk [vmem:[#allocation14 + $0x8] sm:$0xff] %vm176, %v2701
    // Predicated region
    $region114: #{tpu_custom_call.1} parent=1 // pred_check
      _
    $region115: #{tpu_custom_call.1} parent=1 // pred_check_branch
      %2705 = sbr.rel (0) target = $region117
    $region116: #{tpu_custom_call.1} parent=1 // pred_region
      %s2707 = ssub.s32 256, 256
      %2708 = vsyncadd [#allocation5], %s2707
      %s2709 = sshll.u32 [#allocation14], 4
      %s2710 = int_to_ptr.vmem [resolvable:$true] %s2709
      %2715 = dma.vmem_to_hbm [thread:$0]  %s2710, 256, %s22, [#allocation5], 128, 128, 8
    $region117: #{tpu_custom_call.1} parent=1 // pred_fallthru
      _
    // Predicated region
    $region118: #{tpu_custom_call.1} parent=1 // pred_check
      _
    $region119: #{tpu_custom_call.1} parent=1 // pred_check_branch
      %2717 = sbr.rel (0) target = $region121
    $region120: #{tpu_custom_call.1} parent=1 // pred_region
      %2718 = dma.done [#allocation5], 256
    $region121: #{tpu_custom_call.1} parent=1 // pred_fallthru
      _
    %2719 = vsyncpa [#allocation4], 1
    %2720 = vsyncpa [#allocation7], 1
    %2721 = vsyncpa [#allocation10], 1
    %2722 = vsyncpa [#allocation13], 1
    %2723 = vsyncpa [#allocation5], 1

</llo_original>
